<compile_context>
chip_gen: v6e
topology: v6e:2x2x1
jax: 0.10.0
libtpu: 0.0.40
codegen_flags: <defaults>
</compile_context>

<pallas_src>
import jax
import jax.numpy as jnp
from jax.experimental import pallas as pl
from jax.experimental.pallas import tpu as pltpu

DIM = 32                 # ConvMixer hidden dim
DEPTH = 32               # number of mixer blocks
KSIZE = 9                # depthwise kernel size
PAD = (KSIZE - 1) // 2   # "same" padding for stride-1 9x9  (= 4 = exactly one packed group)
PATCH = 2                # patch-embedding conv kernel/stride
IN_CH = 3                # RGB input
N_CLASSES = 100
BN_EPS = 1e-5
PACK = 4                 # spatial positions packed per vreg (4 * 32 ch = 128 lanes)
LANES = PACK * DIM       # 128
HOFF = 8                 # interior h offset inside the padded scratch (sublane aligned)
HIGHEST = jax.lax.Precision.HIGHEST


# ---------------------------------------------------------------------------
# In-kernel math helpers
# ---------------------------------------------------------------------------
def _erf(x):
    # Abramowitz & Stegun 7.1.26 (|err| <= 1.5e-7).  The divide is an EUP approx
    # reciprocal refined by one Newton step (VALU-cheap, full f32 accuracy).
    a = jnp.abs(x)
    den = 1.0 + 0.3275911 * a
    t = pl.reciprocal(den, approx=True)
    t = t * (2.0 - den * t)                     # one Newton iteration
    poly = t * (0.254829592 + t * (-0.284496736 + t * (1.421413741
             + t * (-1.453152027 + t * 1.061405429))))
    y = 1.0 - poly * jnp.exp(-a * a)
    return jnp.where(x < 0.0, -y, y)


def _gelu(x):
    # exact (erf-based) GELU == torch.nn.GELU() default
    return 0.5 * x * (1.0 + _erf(x * 0.7071067811865476))


def _lane_group_sum(v):
    # v: (1, 128).  Sum across the 4 packed-position groups (stride-32 lanes) so every
    # lane ends up holding its channel's total.  Two XLU lane rotations.
    v = v + pltpu.roll(v, shift=2 * DIM, axis=1)
    v = v + pltpu.roll(v, shift=DIM, axis=1)
    return v


def _bn_packed(x, gamma, beta):
    # nn.BatchNorm2d training-mode forward on the lane-packed layout.
    # x: (rows, 128) where rows = N*H*W/4 and lane = pos*32 + channel.
    # Two-pass variance (safer than E[x^2]-mean^2 through the 32-block recurrence).
    cnt = x.shape[0] * PACK
    mean = _lane_group_sum(jnp.sum(x, axis=0, keepdims=True)) * (1.0 / cnt)
    xc = x - mean
    var = _lane_group_sum(jnp.sum(xc * xc, axis=0, keepdims=True)) * (1.0 / cnt)
    return xc * (jax.lax.rsqrt(var + BN_EPS) * gamma) + beta


# ---------------------------------------------------------------------------
# Fused ConvMixer kernel: patch-embed + 32 mixer blocks (fori_loop) + pooled head
# ---------------------------------------------------------------------------
def _convmixer_kernel(patches_ref, pew_ref, pevec_ref, wdw_ref, dvec_ref,
                      wpw_ref, hw_ref, hb_ref, o_ref, xpad_ref):
    n, gwp, hp, lanes = xpad_ref.shape
    gw = gwp - 2                # interior packed w-groups (halo = 1 group each side)
    h = hp - 2 * HOFF           # interior h rows (halo+alignment = HOFF rows each side)
    rows = n * gw * h           # packed rows (= N*H*W / PACK)

    # Loop-invariant constants (hoisted: broadcasts are not CSE'd inside loops).
    lane_idx = jax.lax.broadcasted_iota(jnp.int32, (rows, lanes), 1)
    sel_mask = {r: lane_idx < DIM * (PACK - r) for r in (1, 2, 3)}

    # Zero the padded scratch once: halo rows/groups stay zero for the whole kernel;
    # only the (sublane/group aligned) interior is rewritten each block.
    xpad_ref[...] = jnp.zeros(xpad_ref.shape, jnp.float32)

    # ---- patch embedding: Conv2d(3,32,k=2,s=2) as a packed im2col matmul + GELU + BN
    pe = pevec_ref[...]                                            # (8, 128)
    y0 = jnp.dot(patches_ref[...], pew_ref[...],
                 preferred_element_type=jnp.float32, precision=HIGHEST) + pe[0]
    z0 = _bn_packed(_gelu(y0), pe[1], pe[2])                       # (rows, 128)

    def depth_body(d, z):
        # current activation -> aligned interior of the padded scratch (whole tiles)
        xpad_ref[:, 1:1 + gw, HOFF:HOFF + h, :] = z.reshape(n, gw, h, lanes)

        wdw = wdw_ref[d]       # (81, 128)   per-tap depthwise weights, lane-tiled x4
        vec = dvec_ref[d]      # (8, 128)    rows: bdw, g1, b1, bpw, g2, b2, 0, 0
        wpw = wpw_ref[d]       # (128, 128)  block-diagonal pointwise weights

        # ---- depthwise 9x9 "same" conv.
        # kh taps slice the padded ref on the (aligned-enough) sublane axis; kw taps are
        # lane rotations (XLU) combining two adjacent 4-wide packed position groups.
        parts = [None, None, None]          # 3 partial accumulators, first-tap init
        for kh in range(KSIZE):
            row0 = HOFF - PAD + kh
            slab = xpad_ref[:, :, row0:row0 + h, :]                # (n, gwp, h, 128)
            grp = [slab[:, j:j + gw].reshape(rows, lanes) for j in range(3)]
            for kw in range(KSIZE):
                q, r = divmod(kw, PACK)
                if r == 0:
                    v = grp[q]
                else:
                    s = DIM * (PACK - r)
                    v = jnp.where(sel_mask[r],
                                  pltpu.roll(grp[q], shift=s, axis=1),
                                  pltpu.roll(grp[q + 1], shift=s, axis=1))
                term = v * wdw[kh * KSIZE + kw]
                i = kh % 3
                parts[i] = term if parts[i] is None else parts[i] + term
        acc = (parts[0] + parts[1]) + parts[2]                     # (rows, 128)

        t = _bn_packed(_gelu(acc + vec[0]), vec[1], vec[2])
        res = z + t                                                # residual add

        # ---- pointwise 1x1 conv as a 128-lane block-diagonal matmul + GELU + BN
        z2 = jnp.dot(res, wpw, preferred_element_type=jnp.float32,
                     precision=HIGHEST) + vec[3]
        return _bn_packed(_gelu(z2), vec[4], vec[5])

    zf = jax.lax.fori_loop(0, DEPTH, depth_body, z0)

    # ---- AdaptiveAvgPool2d((1,1)) + Linear(32 -> 100).
    # Per-image mean of the packed rows; the 1/4 position-group averaging and the x4
    # channel replication are folded into the pre-tiled head weight.
    pooled = jnp.sum(zf.reshape(n, gw * h, lanes), axis=1) * (1.0 / (gw * h))
    o_ref[...] = (jnp.dot(pooled, hw_ref[...],
                          preferred_element_type=jnp.float32) + hb_ref[...])


# ---------------------------------------------------------------------------
# Forward pass: layout/packing prep in XLA (once), everything else in ONE pallas_call
# ---------------------------------------------------------------------------
def convmixer_forward(x_nchw, params):
    n, cin, hh, ww = x_nchw.shape
    h, w = hh // PATCH, ww // PATCH
    assert cin == IN_CH and hh == h * PATCH and ww == w * PATCH
    assert h % 8 == 0 and w % PACK == 0, "packed kernel assumes h%8==0 and w%4==0"
    gw = w // PACK
    rows = n * gw * h
    gwp, hp = gw + 2, h + 2 * HOFF

    # im2col for the stride-2 patch conv, rows ordered (image, w-group, h-row),
    # each row holding 4 consecutive w-positions' 2x2x3 patches.
    x = jnp.transpose(x_nchw, (0, 2, 3, 1))                        # NHWC
    p = x.reshape(n, h, PATCH, w, PATCH, cin)
    p = jnp.transpose(p, (0, 1, 3, 2, 4, 5))                       # (n, oh, ow, ph, pw, ci)
    p = p.reshape(n, h, gw, PACK, PATCH * PATCH * cin)
    patches = jnp.transpose(p, (0, 2, 1, 3, 4)).reshape(rows, PACK * PATCH * PATCH * cin)

    # Lane-dense packed parameters (4 spatial positions x 32 channels = 128 lanes).
    eye4 = jnp.eye(PACK, dtype=jnp.float32)
    pew = jnp.einsum('pq,ij->piqj', eye4, params['patch_w']).reshape(
        PACK * PATCH * PATCH * cin, LANES)                         # (48,128) block-diag
    pevec = jnp.stack([jnp.tile(params['patch_b'][0], PACK),
                       jnp.tile(params['patch_g'][0], PACK),
                       jnp.tile(params['patch_beta'][0], PACK)]
                      + [jnp.zeros((LANES,), jnp.float32)] * 5, axis=0)     # (8,128)
    wdw_p = jnp.tile(params['wdw'], (1, 1, PACK))                  # (DEPTH, 81, 128)
    tile4 = lambda v: jnp.tile(v, (1, PACK))
    dvec = jnp.stack([tile4(params['bdw'][:, 0]), tile4(params['g1'][:, 0]),
                      tile4(params['b1'][:, 0]), tile4(params['bpw'][:, 0]),
                      tile4(params['g2'][:, 0]), tile4(params['b2'][:, 0]),
                      jnp.zeros((DEPTH, LANES), jnp.float32),
                      jnp.zeros((DEPTH, LANES), jnp.float32)], axis=1)      # (DEPTH,8,128)
    wpw_bd = jnp.einsum('pq,dij->dpiqj', eye4, params['wpw']).reshape(
        DEPTH, LANES, LANES)                                       # block-diag per depth
    head_w_p = jnp.tile(params['head_w'], (PACK, 1)) * (1.0 / PACK)         # (128, 100)

    m = n * h * w
    flops = (DEPTH * (2 * m * DIM * KSIZE * KSIZE + 2 * (m // PACK) * LANES * LANES
                      + 16 * m * DIM)
             + 2 * (m // PACK) * (PACK * PATCH * PATCH * cin) * LANES
             + 2 * n * LANES * N_CLASSES)
    transcendentals = DEPTH * 2 * m * DIM + m * DIM
    bytes_accessed = 4 * int(patches.size + pew.size + pevec.size + wdw_p.size
                             + dvec.size + wpw_bd.size + head_w_p.size
                             + params['head_b'].size + n * N_CLASSES)

    def const_spec(shape):
        zeros = (0,) * len(shape)
        return pl.BlockSpec(tuple(int(s) for s in shape), lambda i, z=zeros: z)

    operands = (patches, pew, pevec, wdw_p, dvec, wpw_bd, head_w_p, params['head_b'])
    in_specs = [const_spec(op.shape) for op in operands]

    return pl.pallas_call(
        _convmixer_kernel,
        out_shape=jax.ShapeDtypeStruct((n, N_CLASSES), jnp.float32),
        grid_spec=pltpu.PrefetchScalarGridSpec(
            num_scalar_prefetch=0,
            grid=(1,),                              # single step; depth loop is in-kernel
            in_specs=in_specs,
            out_specs=const_spec((n, N_CLASSES)),
            scratch_shapes=[pltpu.VMEM((n, gwp, hp, LANES), jnp.float32)],
        ),
        compiler_params=pltpu.CompilerParams(
            dimension_semantics=("arbitrary",),
            vmem_limit_bytes=32 * 1024 * 1024,
        ),
        cost_estimate=pl.CostEstimate(flops=int(flops),
                                      transcendentals=int(transcendentals),
                                      bytes_accessed=bytes_accessed),
    )(*operands)


# ---------------------------------------------------------------------------
# Deterministic synthetic parameters (shapes dictated by the PyTorch module)
# ---------------------------------------------------------------------------
def init_params(key):
    ks = jax.random.split(key, 8)
    p = {}
    p['patch_w'] = 0.3 * jax.random.normal(ks[0], (PATCH * PATCH * IN_CH, DIM), jnp.float32)
    p['patch_b'] = 0.1 * jax.random.normal(ks[1], (1, DIM), jnp.float32)
    p['patch_g'] = jnp.ones((1, DIM), jnp.float32)
    p['patch_beta'] = jnp.zeros((1, DIM), jnp.float32)
    p['wdw'] = (1.0 / KSIZE) * jax.random.normal(ks[2], (DEPTH, KSIZE * KSIZE, DIM), jnp.float32)
    p['bdw'] = 0.1 * jax.random.normal(ks[3], (DEPTH, 1, DIM), jnp.float32)
    p['g1'] = jnp.ones((DEPTH, 1, DIM), jnp.float32)
    p['b1'] = jnp.zeros((DEPTH, 1, DIM), jnp.float32)
    p['wpw'] = (DIM ** -0.5) * jax.random.normal(ks[4], (DEPTH, DIM, DIM), jnp.float32)
    p['bpw'] = 0.1 * jax.random.normal(ks[5], (DEPTH, 1, DIM), jnp.float32)
    p['g2'] = jnp.ones((DEPTH, 1, DIM), jnp.float32)
    p['b2'] = jnp.zeros((DEPTH, 1, DIM), jnp.float32)
    p['head_w'] = (DIM ** -0.5) * jax.random.normal(ks[6], (DIM, N_CLASSES), jnp.float32)
    p['head_b'] = 0.1 * jax.random.normal(ks[7], (1, N_CLASSES), jnp.float32)
    return p


# ---------------------------------------------------------------------------
# Pure-JAX reference (lax convs, exact GELU, HIGHEST precision) for validation
# ---------------------------------------------------------------------------
def reference_forward(x_nchw, params):
    def gelu(x):
        return jax.nn.gelu(x, approximate=False)

    def bn(x, g, b):
        mean = jnp.mean(x, axis=(0, 2, 3), keepdims=True)
        var = jnp.mean((x - mean) ** 2, axis=(0, 2, 3), keepdims=True)
        return ((x - mean) * jax.lax.rsqrt(var + BN_EPS) * g.reshape(1, -1, 1, 1)
                + b.reshape(1, -1, 1, 1))

    w = params['patch_w'].reshape(PATCH, PATCH, IN_CH, DIM).transpose(3, 2, 0, 1)
    y = jax.lax.conv_general_dilated(x_nchw, w, (PATCH, PATCH), 'VALID',
                                     precision=HIGHEST)
    y = y + params['patch_b'].reshape(1, DIM, 1, 1)
    y = bn(gelu(y), params['patch_g'], params['patch_beta'])
    for i in range(DEPTH):
        wdw = params['wdw'][i].reshape(KSIZE, KSIZE, DIM).transpose(2, 0, 1)[:, None]
        t = jax.lax.conv_general_dilated(y, wdw, (1, 1), [(PAD, PAD), (PAD, PAD)],
                                         feature_group_count=DIM, precision=HIGHEST)
        t = t + params['bdw'][i].reshape(1, DIM, 1, 1)
        t = bn(gelu(t), params['g1'][i], params['b1'][i])
        y = y + t
        z = jnp.einsum('nchw,cd->ndhw', y, params['wpw'][i], precision=HIGHEST)
        z = z + params['bpw'][i].reshape(1, DIM, 1, 1)
        y = bn(gelu(z), params['g2'][i], params['b2'][i])
    pooled = jnp.mean(y, axis=(2, 3))
    return jnp.dot(pooled, params['head_w'], precision=HIGHEST) + params['head_b']


if __name__ == "__main__":
    key = jax.random.PRNGKey(0)
    pkey, xkey = jax.random.split(key)
    params = init_params(pkey)
    x = jax.random.normal(xkey, (2, IN_CH, 16, 16), jnp.float32)   # NCHW like PyTorch

    out = jax.block_until_ready(jax.jit(convmixer_forward)(x, params))
    ref = jax.block_until_ready(jax.jit(reference_forward)(x, params))

    assert out.shape == (2, N_CLASSES), out.shape
    assert bool(jnp.all(jnp.isfinite(out)))
    max_diff = float(jnp.max(jnp.abs(out - ref)))
    assert max_diff < 5e-2, f"mismatch vs reference: max|diff|={max_diff}"
    print("KERNEL_OK")
</pallas_src>

<mosaic_0001>
module attributes {stable_mosaic.version = 11 : i64} {
  func.func @_convmixer_kernel(%arg0: i32, %arg1: memref<32x48xf32, #tpu.memory_space<vmem>>, %arg2: memref<48x128xf32, #tpu.memory_space<vmem>>, %arg3: memref<8x128xf32, #tpu.memory_space<vmem>>, %arg4: memref<32x81x128xf32, #tpu.memory_space<vmem>>, %arg5: memref<32x8x128xf32, #tpu.memory_space<vmem>>, %arg6: memref<32x128x128xf32, #tpu.memory_space<vmem>>, %arg7: memref<128x100xf32, #tpu.memory_space<vmem>>, %arg8: memref<1x100xf32, #tpu.memory_space<vmem>>, %arg9: memref<2x100xf32, #tpu.memory_space<vmem>>, %arg10: memref<2x4x24x128xf32, #tpu.memory_space<vmem>>) attributes {dimension_semantics = [#tpu.dimension_semantics<arbitrary>], iteration_bounds = array<i64: 1>, scalar_prefetch = 0 : i64, scratch_operands = 1 : i64, tpu.core_type = #tpu.core_type<tc>, window_params = [{pipeline_mode = #tpu.pipeline_mode<synchronous>, transform_indices = @transform_0, window_bounds = array<i64: 32, 48>}, {pipeline_mode = #tpu.pipeline_mode<synchronous>, transform_indices = @transform_1, window_bounds = array<i64: 48, 128>}, {pipeline_mode = #tpu.pipeline_mode<synchronous>, transform_indices = @transform_2, window_bounds = array<i64: 8, 128>}, {pipeline_mode = #tpu.pipeline_mode<synchronous>, transform_indices = @transform_3, window_bounds = array<i64: 32, 81, 128>}, {pipeline_mode = #tpu.pipeline_mode<synchronous>, transform_indices = @transform_4, window_bounds = array<i64: 32, 8, 128>}, {pipeline_mode = #tpu.pipeline_mode<synchronous>, transform_indices = @transform_5, window_bounds = array<i64: 32, 128, 128>}, {pipeline_mode = #tpu.pipeline_mode<synchronous>, transform_indices = @transform_6, window_bounds = array<i64: 128, 100>}, {pipeline_mode = #tpu.pipeline_mode<synchronous>, transform_indices = @transform_7, window_bounds = array<i64: 1, 100>}, {pipeline_mode = #tpu.pipeline_mode<synchronous>, transform_indices = @transform_8, window_bounds = array<i64: 2, 100>}]} {
    %0 = tpu.iota {dimensions = array<i32: 1>} : vector<32x128xi32>
    %c96_i32 = arith.constant 96 : i32
    %1 = vector.broadcast %c96_i32 : i32 to vector<32x128xi32>
    %2 = arith.cmpi slt, %0, %1 : vector<32x128xi32>
    %c64_i32 = arith.constant 64 : i32
    %3 = vector.broadcast %c64_i32 : i32 to vector<32x128xi32>
    %4 = arith.cmpi slt, %0, %3 : vector<32x128xi32>
    %c32_i32 = arith.constant 32 : i32
    %5 = vector.broadcast %c32_i32 : i32 to vector<32x128xi32>
    %6 = arith.cmpi slt, %0, %5 : vector<32x128xi32>
    %cst = arith.constant 0.000000e+00 : f32
    %7 = vector.broadcast %cst : f32 to vector<2x4x24x128xf32>
    %c0 = arith.constant 0 : index
    %c0_0 = arith.constant 0 : index
    %c0_1 = arith.constant 0 : index
    %c0_2 = arith.constant 0 : index
    %8 = vector.load %arg10[%c0, %c0_0, %c0_1, %c0_2] : memref<2x4x24x128xf32, #tpu.memory_space<vmem>>, vector<2x4x24x128xf32>
    tpu.vector_store %arg10[%c0, %c0_0, %c0_1, %c0_2], %7 {strides = array<i32>} : memref<2x4x24x128xf32, #tpu.memory_space<vmem>>, vector<2x4x24x128xf32>,
    %c0_3 = arith.constant 0 : index
    %c0_4 = arith.constant 0 : index
    %9 = vector.load %arg3[%c0_3, %c0_4] : memref<8x128xf32, #tpu.memory_space<vmem>>, vector<8x128xf32>
    %c0_5 = arith.constant 0 : index
    %c0_6 = arith.constant 0 : index
    %10 = vector.load %arg1[%c0_5, %c0_6] : memref<32x48xf32, #tpu.memory_space<vmem>>, vector<32x48xf32>
    %c0_7 = arith.constant 0 : index
    %c0_8 = arith.constant 0 : index
    %11 = vector.load %arg2[%c0_7, %c0_8] : memref<48x128xf32, #tpu.memory_space<vmem>>, vector<48x128xf32>
    %cst_9 = arith.constant dense<0.000000e+00> : vector<32x128xf32>
    %12 = tpu.matmul %10, %11, %cst_9 {dimension_numbers = #tpu.dot_dimension_numbers<[1], [0], [0], [1], [0, 0, 1, 1], [], []>, precision = #tpu.contract_precision<fp32>} : vector<32x48xf32>, vector<48x128xf32>, vector<32x128xf32> -> vector<32x128xf32>
    %13 = vector.extract_strided_slice %9 {offsets = [0, 0], sizes = [1, 128], strides = [1, 1]} : vector<8x128xf32> to vector<1x128xf32>
    %14 = vector.shape_cast %13 : vector<1x128xf32> to vector<128xf32>
    %15 = vector.shape_cast %14 : vector<128xf32> to vector<1x128xf32>
    %16 = vector.broadcast %15 : vector<1x128xf32> to vector<32x128xf32>
    %17 = arith.addf %12, %16 : vector<32x128xf32>
    %cst_10 = arith.constant 5.000000e-01 : f32
    %18 = vector.broadcast %cst_10 : f32 to vector<32x128xf32>
    %19 = arith.mulf %18, %17 : vector<32x128xf32>
    %cst_11 = arith.constant 0.707106769 : f32
    %20 = vector.broadcast %cst_11 : f32 to vector<32x128xf32>
    %21 = arith.mulf %17, %20 : vector<32x128xf32>
    %22 = math.absf %21 : vector<32x128xf32>
    %cst_12 = arith.constant 0.327591091 : f32
    %23 = vector.broadcast %cst_12 : f32 to vector<32x128xf32>
    %24 = arith.mulf %23, %22 : vector<32x128xf32>
    %cst_13 = arith.constant 1.000000e+00 : f32
    %25 = vector.broadcast %cst_13 : f32 to vector<32x128xf32>
    %26 = arith.addf %25, %24 : vector<32x128xf32>
    %27 = tpu.reciprocal %26 {approx = true} : vector<32x128xf32> -> vector<32x128xf32>
    %28 = arith.mulf %26, %27 : vector<32x128xf32>
    %cst_14 = arith.constant 2.000000e+00 : f32
    %29 = vector.broadcast %cst_14 : f32 to vector<32x128xf32>
    %30 = arith.subf %29, %28 : vector<32x128xf32>
    %31 = arith.mulf %27, %30 : vector<32x128xf32>
    %cst_15 = arith.constant 1.06140542 : f32
    %32 = vector.broadcast %cst_15 : f32 to vector<32x128xf32>
    %33 = arith.mulf %31, %32 : vector<32x128xf32>
    %cst_16 = arith.constant -1.45315206 : f32
    %34 = vector.broadcast %cst_16 : f32 to vector<32x128xf32>
    %35 = arith.addf %34, %33 : vector<32x128xf32>
    %36 = arith.mulf %31, %35 : vector<32x128xf32>
    %cst_17 = arith.constant 1.42141378 : f32
    %37 = vector.broadcast %cst_17 : f32 to vector<32x128xf32>
    %38 = arith.addf %37, %36 : vector<32x128xf32>
    %39 = arith.mulf %31, %38 : vector<32x128xf32>
    %cst_18 = arith.constant -0.284496725 : f32
    %40 = vector.broadcast %cst_18 : f32 to vector<32x128xf32>
    %41 = arith.addf %40, %39 : vector<32x128xf32>
    %42 = arith.mulf %31, %41 : vector<32x128xf32>
    %cst_19 = arith.constant 0.254829586 : f32
    %43 = vector.broadcast %cst_19 : f32 to vector<32x128xf32>
    %44 = arith.addf %43, %42 : vector<32x128xf32>
    %45 = arith.mulf %31, %44 : vector<32x128xf32>
    %cst_20 = arith.constant 0.000000e+00 : f32
    %46 = vector.broadcast %cst_20 : f32 to vector<32x128xf32>
    %47 = arith.subf %46, %22 : vector<32x128xf32>
    %48 = arith.mulf %47, %22 : vector<32x128xf32>
    %49 = math.exp %48 : vector<32x128xf32>
    %50 = arith.mulf %45, %49 : vector<32x128xf32>
    %cst_21 = arith.constant 1.000000e+00 : f32
    %51 = vector.broadcast %cst_21 : f32 to vector<32x128xf32>
    %52 = arith.subf %51, %50 : vector<32x128xf32>
    %cst_22 = arith.constant 0.000000e+00 : f32
    %53 = vector.broadcast %cst_22 : f32 to vector<32x128xf32>
    %54 = arith.cmpf olt, %21, %53 : vector<32x128xf32>
    %cst_23 = arith.constant 0.000000e+00 : f32
    %55 = vector.broadcast %cst_23 : f32 to vector<32x128xf32>
    %56 = arith.subf %55, %52 : vector<32x128xf32>
    %57 = arith.select %54, %56, %52 : vector<32x128xi1>, vector<32x128xf32>
    %cst_24 = arith.constant 1.000000e+00 : f32
    %58 = vector.broadcast %cst_24 : f32 to vector<32x128xf32>
    %59 = arith.addf %58, %57 : vector<32x128xf32>
    %60 = arith.mulf %19, %59 : vector<32x128xf32>
    %61 = vector.extract_strided_slice %9 {offsets = [1, 0], sizes = [1, 128], strides = [1, 1]} : vector<8x128xf32> to vector<1x128xf32>
    %62 = vector.shape_cast %61 : vector<1x128xf32> to vector<128xf32>
    %63 = vector.extract_strided_slice %9 {offsets = [2, 0], sizes = [1, 128], strides = [1, 1]} : vector<8x128xf32> to vector<1x128xf32>
    %64 = vector.shape_cast %63 : vector<1x128xf32> to vector<128xf32>
    %cst_25 = arith.constant dense<0.000000e+00> : vector<128xf32>
    %65 = vector.multi_reduction <add>, %60, %cst_25 [0] : vector<32x128xf32> to vector<128xf32>
    %66 = vector.shape_cast %65 : vector<128xf32> to vector<1x128xf32>
    %c64_i32_26 = arith.constant 64 : i32
    %67 = tpu.dynamic_rotate %66 by %c64_i32_26 dim 1 : vector<1x128xf32>, i32 -> vector<1x128xf32>
    %68 = arith.addf %66, %67 : vector<1x128xf32>
    %c32_i32_27 = arith.constant 32 : i32
    %69 = tpu.dynamic_rotate %68 by %c32_i32_27 dim 1 : vector<1x128xf32>, i32 -> vector<1x128xf32>
    %70 = arith.addf %68, %69 : vector<1x128xf32>
    %cst_28 = arith.constant 7.812500e-03 : f32
    %71 = vector.broadcast %cst_28 : f32 to vector<1x128xf32>
    %72 = arith.mulf %70, %71 : vector<1x128xf32>
    %73 = vector.broadcast %72 : vector<1x128xf32> to vector<32x128xf32>
    %74 = arith.subf %60, %73 : vector<32x128xf32>
    %75 = arith.mulf %74, %74 : vector<32x128xf32>
    %cst_29 = arith.constant dense<0.000000e+00> : vector<128xf32>
    %76 = vector.multi_reduction <add>, %75, %cst_29 [0] : vector<32x128xf32> to vector<128xf32>
    %77 = vector.shape_cast %76 : vector<128xf32> to vector<1x128xf32>
    %c64_i32_30 = arith.constant 64 : i32
    %78 = tpu.dynamic_rotate %77 by %c64_i32_30 dim 1 : vector<1x128xf32>, i32 -> vector<1x128xf32>
    %79 = arith.addf %77, %78 : vector<1x128xf32>
    %c32_i32_31 = arith.constant 32 : i32
    %80 = tpu.dynamic_rotate %79 by %c32_i32_31 dim 1 : vector<1x128xf32>, i32 -> vector<1x128xf32>
    %81 = arith.addf %79, %80 : vector<1x128xf32>
    %cst_32 = arith.constant 7.812500e-03 : f32
    %82 = vector.broadcast %cst_32 : f32 to vector<1x128xf32>
    %83 = arith.mulf %81, %82 : vector<1x128xf32>
    %cst_33 = arith.constant 9.99999974E-6 : f32
    %84 = vector.broadcast %cst_33 : f32 to vector<1x128xf32>
    %85 = arith.addf %83, %84 : vector<1x128xf32>
    %86 = math.rsqrt %85 : vector<1x128xf32>
    %87 = vector.shape_cast %62 : vector<128xf32> to vector<1x128xf32>
    %88 = arith.mulf %86, %87 : vector<1x128xf32>
    %89 = vector.broadcast %88 : vector<1x128xf32> to vector<32x128xf32>
    %90 = arith.mulf %74, %89 : vector<32x128xf32>
    %91 = vector.shape_cast %64 : vector<128xf32> to vector<1x128xf32>
    %92 = vector.broadcast %91 : vector<1x128xf32> to vector<32x128xf32>
    %93 = arith.addf %90, %92 : vector<32x128xf32>
    %c0_i32 = arith.constant 0 : i32
    %c32_i32_34 = arith.constant 32 : i32
    %94 = arith.addi %c0_i32, %c32_i32_34 : i32
    %c1_i32 = arith.constant 1 : i32
    %95 = scf.for %arg11 = %c0_i32 to %94 step %c1_i32 iter_args(%arg12 = %93) -> (vector<32x128xf32>)  : i32 {
      %106 = vector.shape_cast %arg12 : vector<32x128xf32> to vector<2x2x8x128xf32>
      %c0_45 = arith.constant 0 : index
      %c1 = arith.constant 1 : index
      %c8 = arith.constant 8 : index
      %c0_46 = arith.constant 0 : index
      %107 = vector.load %arg10[%c0_45, %c1, %c8, %c0_46] : memref<2x4x24x128xf32, #tpu.memory_space<vmem>>, vector<2x2x8x128xf32>
      tpu.vector_store %arg10[%c0_45, %c1, %c8, %c0_46], %106 {strides = array<i32>} : memref<2x4x24x128xf32, #tpu.memory_space<vmem>>, vector<2x2x8x128xf32>,
      %108 = arith.index_cast %arg11 : i32 to index
      %c0_47 = arith.constant 0 : index
      %c0_48 = arith.constant 0 : index
      %109 = vector.load %arg4[%108, %c0_47, %c0_48] : memref<32x81x128xf32, #tpu.memory_space<vmem>>, vector<1x81x128xf32>
      %110 = vector.shape_cast %109 : vector<1x81x128xf32> to vector<81x128xf32>
      %111 = arith.index_cast %arg11 : i32 to index
      %c0_49 = arith.constant 0 : index
      %c0_50 = arith.constant 0 : index
      %112 = vector.load %arg5[%111, %c0_49, %c0_50] : memref<32x8x128xf32, #tpu.memory_space<vmem>>, vector<1x8x128xf32>
      %113 = vector.shape_cast %112 : vector<1x8x128xf32> to vector<8x128xf32>
      %114 = arith.index_cast %arg11 : i32 to index
      %c0_51 = arith.constant 0 : index
      %c0_52 = arith.constant 0 : index
      %115 = vector.load %arg6[%114, %c0_51, %c0_52] : memref<32x128x128xf32, #tpu.memory_space<vmem>>, vector<1x128x128xf32>
      %116 = vector.shape_cast %115 : vector<1x128x128xf32> to vector<128x128xf32>
      %c0_53 = arith.constant 0 : index
      %c0_54 = arith.constant 0 : index
      %c4 = arith.constant 4 : index
      %c0_55 = arith.constant 0 : index
      %117 = vector.load %arg10[%c0_53, %c0_54, %c4, %c0_55] : memref<2x4x24x128xf32, #tpu.memory_space<vmem>>, vector<2x4x8x128xf32>
      %118 = vector.extract_strided_slice %117 {offsets = [0, 0, 0, 0], sizes = [2, 2, 8, 128], strides = [1, 1, 1, 1]} : vector<2x4x8x128xf32> to vector<2x2x8x128xf32>
      %119 = vector.shape_cast %118 : vector<2x2x8x128xf32> to vector<32x128xf32>
      %120 = vector.extract_strided_slice %117 {offsets = [0, 1, 0, 0], sizes = [2, 2, 8, 128], strides = [1, 1, 1, 1]} : vector<2x4x8x128xf32> to vector<2x2x8x128xf32>
      %121 = vector.shape_cast %120 : vector<2x2x8x128xf32> to vector<32x128xf32>
      %122 = vector.extract_strided_slice %117 {offsets = [0, 2, 0, 0], sizes = [2, 2, 8, 128], strides = [1, 1, 1, 1]} : vector<2x4x8x128xf32> to vector<2x2x8x128xf32>
      %123 = vector.shape_cast %122 : vector<2x2x8x128xf32> to vector<32x128xf32>
      %124 = vector.extract_strided_slice %110 {offsets = [0, 0], sizes = [1, 128], strides = [1, 1]} : vector<81x128xf32> to vector<1x128xf32>
      %125 = vector.shape_cast %124 : vector<1x128xf32> to vector<128xf32>
      %126 = vector.shape_cast %125 : vector<128xf32> to vector<1x128xf32>
      %127 = vector.broadcast %126 : vector<1x128xf32> to vector<32x128xf32>
      %128 = arith.mulf %119, %127 : vector<32x128xf32>
      %c96_i32_56 = arith.constant 96 : i32
      %129 = tpu.dynamic_rotate %119 by %c96_i32_56 dim 1 : vector<32x128xf32>, i32 -> vector<32x128xf32>
      %c96_i32_57 = arith.constant 96 : i32
      %130 = tpu.dynamic_rotate %121 by %c96_i32_57 dim 1 : vector<32x128xf32>, i32 -> vector<32x128xf32>
      %131 = arith.select %2, %129, %130 : vector<32x128xi1>, vector<32x128xf32>
      %132 = vector.extract_strided_slice %110 {offsets = [1, 0], sizes = [1, 128], strides = [1, 1]} : vector<81x128xf32> to vector<1x128xf32>
      %133 = vector.shape_cast %132 : vector<1x128xf32> to vector<128xf32>
      %134 = vector.shape_cast %133 : vector<128xf32> to vector<1x128xf32>
      %135 = vector.broadcast %134 : vector<1x128xf32> to vector<32x128xf32>
      %136 = arith.mulf %131, %135 : vector<32x128xf32>
      %137 = arith.addf %128, %136 : vector<32x128xf32>
      %c64_i32_58 = arith.constant 64 : i32
      %138 = tpu.dynamic_rotate %119 by %c64_i32_58 dim 1 : vector<32x128xf32>, i32 -> vector<32x128xf32>
      %c64_i32_59 = arith.constant 64 : i32
      %139 = tpu.dynamic_rotate %121 by %c64_i32_59 dim 1 : vector<32x128xf32>, i32 -> vector<32x128xf32>
      %140 = arith.select %4, %138, %139 : vector<32x128xi1>, vector<32x128xf32>
      %141 = vector.extract_strided_slice %110 {offsets = [2, 0], sizes = [1, 128], strides = [1, 1]} : vector<81x128xf32> to vector<1x128xf32>
      %142 = vector.shape_cast %141 : vector<1x128xf32> to vector<128xf32>
      %143 = vector.shape_cast %142 : vector<128xf32> to vector<1x128xf32>
      %144 = vector.broadcast %143 : vector<1x128xf32> to vector<32x128xf32>
      %145 = arith.mulf %140, %144 : vector<32x128xf32>
      %146 = arith.addf %137, %145 : vector<32x128xf32>
      %c32_i32_60 = arith.constant 32 : i32
      %147 = tpu.dynamic_rotate %119 by %c32_i32_60 dim 1 : vector<32x128xf32>, i32 -> vector<32x128xf32>
      %c32_i32_61 = arith.constant 32 : i32
      %148 = tpu.dynamic_rotate %121 by %c32_i32_61 dim 1 : vector<32x128xf32>, i32 -> vector<32x128xf32>
      %149 = arith.select %6, %147, %148 : vector<32x128xi1>, vector<32x128xf32>
      %150 = vector.extract_strided_slice %110 {offsets = [3, 0], sizes = [1, 128], strides = [1, 1]} : vector<81x128xf32> to vector<1x128xf32>
      %151 = vector.shape_cast %150 : vector<1x128xf32> to vector<128xf32>
      %152 = vector.shape_cast %151 : vector<128xf32> to vector<1x128xf32>
      %153 = vector.broadcast %152 : vector<1x128xf32> to vector<32x128xf32>
      %154 = arith.mulf %149, %153 : vector<32x128xf32>
      %155 = arith.addf %146, %154 : vector<32x128xf32>
      %156 = vector.extract_strided_slice %110 {offsets = [4, 0], sizes = [1, 128], strides = [1, 1]} : vector<81x128xf32> to vector<1x128xf32>
      %157 = vector.shape_cast %156 : vector<1x128xf32> to vector<128xf32>
      %158 = vector.shape_cast %157 : vector<128xf32> to vector<1x128xf32>
      %159 = vector.broadcast %158 : vector<1x128xf32> to vector<32x128xf32>
      %160 = arith.mulf %121, %159 : vector<32x128xf32>
      %161 = arith.addf %155, %160 : vector<32x128xf32>
      %c96_i32_62 = arith.constant 96 : i32
      %162 = tpu.dynamic_rotate %121 by %c96_i32_62 dim 1 : vector<32x128xf32>, i32 -> vector<32x128xf32>
      %c96_i32_63 = arith.constant 96 : i32
      %163 = tpu.dynamic_rotate %123 by %c96_i32_63 dim 1 : vector<32x128xf32>, i32 -> vector<32x128xf32>
      %164 = arith.select %2, %162, %163 : vector<32x128xi1>, vector<32x128xf32>
      %165 = vector.extract_strided_slice %110 {offsets = [5, 0], sizes = [1, 128], strides = [1, 1]} : vector<81x128xf32> to vector<1x128xf32>
      %166 = vector.shape_cast %165 : vector<1x128xf32> to vector<128xf32>
      %167 = vector.shape_cast %166 : vector<128xf32> to vector<1x128xf32>
      %168 = vector.broadcast %167 : vector<1x128xf32> to vector<32x128xf32>
      %169 = arith.mulf %164, %168 : vector<32x128xf32>
      %170 = arith.addf %161, %169 : vector<32x128xf32>
      %c64_i32_64 = arith.constant 64 : i32
      %171 = tpu.dynamic_rotate %121 by %c64_i32_64 dim 1 : vector<32x128xf32>, i32 -> vector<32x128xf32>
      %c64_i32_65 = arith.constant 64 : i32
      %172 = tpu.dynamic_rotate %123 by %c64_i32_65 dim 1 : vector<32x128xf32>, i32 -> vector<32x128xf32>
      %173 = arith.select %4, %171, %172 : vector<32x128xi1>, vector<32x128xf32>
      %174 = vector.extract_strided_slice %110 {offsets = [6, 0], sizes = [1, 128], strides = [1, 1]} : vector<81x128xf32> to vector<1x128xf32>
      %175 = vector.shape_cast %174 : vector<1x128xf32> to vector<128xf32>
      %176 = vector.shape_cast %175 : vector<128xf32> to vector<1x128xf32>
      %177 = vector.broadcast %176 : vector<1x128xf32> to vector<32x128xf32>
      %178 = arith.mulf %173, %177 : vector<32x128xf32>
      %179 = arith.addf %170, %178 : vector<32x128xf32>
      %c32_i32_66 = arith.constant 32 : i32
      %180 = tpu.dynamic_rotate %121 by %c32_i32_66 dim 1 : vector<32x128xf32>, i32 -> vector<32x128xf32>
      %c32_i32_67 = arith.constant 32 : i32
      %181 = tpu.dynamic_rotate %123 by %c32_i32_67 dim 1 : vector<32x128xf32>, i32 -> vector<32x128xf32>
      %182 = arith.select %6, %180, %181 : vector<32x128xi1>, vector<32x128xf32>
      %183 = vector.extract_strided_slice %110 {offsets = [7, 0], sizes = [1, 128], strides = [1, 1]} : vector<81x128xf32> to vector<1x128xf32>
      %184 = vector.shape_cast %183 : vector<1x128xf32> to vector<128xf32>
      %185 = vector.shape_cast %184 : vector<128xf32> to vector<1x128xf32>
      %186 = vector.broadcast %185 : vector<1x128xf32> to vector<32x128xf32>
      %187 = arith.mulf %182, %186 : vector<32x128xf32>
      %188 = arith.addf %179, %187 : vector<32x128xf32>
      %189 = vector.extract_strided_slice %110 {offsets = [8, 0], sizes = [1, 128], strides = [1, 1]} : vector<81x128xf32> to vector<1x128xf32>
      %190 = vector.shape_cast %189 : vector<1x128xf32> to vector<128xf32>
      %191 = vector.shape_cast %190 : vector<128xf32> to vector<1x128xf32>
      %192 = vector.broadcast %191 : vector<1x128xf32> to vector<32x128xf32>
      %193 = arith.mulf %123, %192 : vector<32x128xf32>
      %194 = arith.addf %188, %193 : vector<32x128xf32>
      %c0_68 = arith.constant 0 : index
      %c0_69 = arith.constant 0 : index
      %c5 = arith.constant 5 : index
      %c0_70 = arith.constant 0 : index
      %195 = vector.load %arg10[%c0_68, %c0_69, %c5, %c0_70] : memref<2x4x24x128xf32, #tpu.memory_space<vmem>>, vector<2x4x8x128xf32>
      %196 = vector.extract_strided_slice %195 {offsets = [0, 0, 0, 0], sizes = [2, 2, 8, 128], strides = [1, 1, 1, 1]} : vector<2x4x8x128xf32> to vector<2x2x8x128xf32>
      %197 = vector.shape_cast %196 : vector<2x2x8x128xf32> to vector<32x128xf32>
      %198 = vector.extract_strided_slice %195 {offsets = [0, 1, 0, 0], sizes = [2, 2, 8, 128], strides = [1, 1, 1, 1]} : vector<2x4x8x128xf32> to vector<2x2x8x128xf32>
      %199 = vector.shape_cast %198 : vector<2x2x8x128xf32> to vector<32x128xf32>
      %200 = vector.extract_strided_slice %195 {offsets = [0, 2, 0, 0], sizes = [2, 2, 8, 128], strides = [1, 1, 1, 1]} : vector<2x4x8x128xf32> to vector<2x2x8x128xf32>
      %201 = vector.shape_cast %200 : vector<2x2x8x128xf32> to vector<32x128xf32>
      %202 = vector.extract_strided_slice %110 {offsets = [9, 0], sizes = [1, 128], strides = [1, 1]} : vector<81x128xf32> to vector<1x128xf32>
      %203 = vector.shape_cast %202 : vector<1x128xf32> to vector<128xf32>
      %204 = vector.shape_cast %203 : vector<128xf32> to vector<1x128xf32>
      %205 = vector.broadcast %204 : vector<1x128xf32> to vector<32x128xf32>
      %206 = arith.mulf %197, %205 : vector<32x128xf32>
      %c96_i32_71 = arith.constant 96 : i32
      %207 = tpu.dynamic_rotate %197 by %c96_i32_71 dim 1 : vector<32x128xf32>, i32 -> vector<32x128xf32>
      %c96_i32_72 = arith.constant 96 : i32
      %208 = tpu.dynamic_rotate %199 by %c96_i32_72 dim 1 : vector<32x128xf32>, i32 -> vector<32x128xf32>
      %209 = arith.select %2, %207, %208 : vector<32x128xi1>, vector<32x128xf32>
      %210 = vector.extract_strided_slice %110 {offsets = [10, 0], sizes = [1, 128], strides = [1, 1]} : vector<81x128xf32> to vector<1x128xf32>
      %211 = vector.shape_cast %210 : vector<1x128xf32> to vector<128xf32>
      %212 = vector.shape_cast %211 : vector<128xf32> to vector<1x128xf32>
      %213 = vector.broadcast %212 : vector<1x128xf32> to vector<32x128xf32>
      %214 = arith.mulf %209, %213 : vector<32x128xf32>
      %215 = arith.addf %206, %214 : vector<32x128xf32>
      %c64_i32_73 = arith.constant 64 : i32
      %216 = tpu.dynamic_rotate %197 by %c64_i32_73 dim 1 : vector<32x128xf32>, i32 -> vector<32x128xf32>
      %c64_i32_74 = arith.constant 64 : i32
      %217 = tpu.dynamic_rotate %199 by %c64_i32_74 dim 1 : vector<32x128xf32>, i32 -> vector<32x128xf32>
      %218 = arith.select %4, %216, %217 : vector<32x128xi1>, vector<32x128xf32>
      %219 = vector.extract_strided_slice %110 {offsets = [11, 0], sizes = [1, 128], strides = [1, 1]} : vector<81x128xf32> to vector<1x128xf32>
      %220 = vector.shape_cast %219 : vector<1x128xf32> to vector<128xf32>
      %221 = vector.shape_cast %220 : vector<128xf32> to vector<1x128xf32>
      %222 = vector.broadcast %221 : vector<1x128xf32> to vector<32x128xf32>
      %223 = arith.mulf %218, %222 : vector<32x128xf32>
      %224 = arith.addf %215, %223 : vector<32x128xf32>
      %c32_i32_75 = arith.constant 32 : i32
      %225 = tpu.dynamic_rotate %197 by %c32_i32_75 dim 1 : vector<32x128xf32>, i32 -> vector<32x128xf32>
      %c32_i32_76 = arith.constant 32 : i32
      %226 = tpu.dynamic_rotate %199 by %c32_i32_76 dim 1 : vector<32x128xf32>, i32 -> vector<32x128xf32>
      %227 = arith.select %6, %225, %226 : vector<32x128xi1>, vector<32x128xf32>
      %228 = vector.extract_strided_slice %110 {offsets = [12, 0], sizes = [1, 128], strides = [1, 1]} : vector<81x128xf32> to vector<1x128xf32>
      %229 = vector.shape_cast %228 : vector<1x128xf32> to vector<128xf32>
      %230 = vector.shape_cast %229 : vector<128xf32> to vector<1x128xf32>
      %231 = vector.broadcast %230 : vector<1x128xf32> to vector<32x128xf32>
      %232 = arith.mulf %227, %231 : vector<32x128xf32>
      %233 = arith.addf %224, %232 : vector<32x128xf32>
      %234 = vector.extract_strided_slice %110 {offsets = [13, 0], sizes = [1, 128], strides = [1, 1]} : vector<81x128xf32> to vector<1x128xf32>
      %235 = vector.shape_cast %234 : vector<1x128xf32> to vector<128xf32>
      %236 = vector.shape_cast %235 : vector<128xf32> to vector<1x128xf32>
      %237 = vector.broadcast %236 : vector<1x128xf32> to vector<32x128xf32>
      %238 = arith.mulf %199, %237 : vector<32x128xf32>
      %239 = arith.addf %233, %238 : vector<32x128xf32>
      %c96_i32_77 = arith.constant 96 : i32
      %240 = tpu.dynamic_rotate %199 by %c96_i32_77 dim 1 : vector<32x128xf32>, i32 -> vector<32x128xf32>
      %c96_i32_78 = arith.constant 96 : i32
      %241 = tpu.dynamic_rotate %201 by %c96_i32_78 dim 1 : vector<32x128xf32>, i32 -> vector<32x128xf32>
      %242 = arith.select %2, %240, %241 : vector<32x128xi1>, vector<32x128xf32>
      %243 = vector.extract_strided_slice %110 {offsets = [14, 0], sizes = [1, 128], strides = [1, 1]} : vector<81x128xf32> to vector<1x128xf32>
      %244 = vector.shape_cast %243 : vector<1x128xf32> to vector<128xf32>
      %245 = vector.shape_cast %244 : vector<128xf32> to vector<1x128xf32>
      %246 = vector.broadcast %245 : vector<1x128xf32> to vector<32x128xf32>
      %247 = arith.mulf %242, %246 : vector<32x128xf32>
      %248 = arith.addf %239, %247 : vector<32x128xf32>
      %c64_i32_79 = arith.constant 64 : i32
      %249 = tpu.dynamic_rotate %199 by %c64_i32_79 dim 1 : vector<32x128xf32>, i32 -> vector<32x128xf32>
      %c64_i32_80 = arith.constant 64 : i32
      %250 = tpu.dynamic_rotate %201 by %c64_i32_80 dim 1 : vector<32x128xf32>, i32 -> vector<32x128xf32>
      %251 = arith.select %4, %249, %250 : vector<32x128xi1>, vector<32x128xf32>
      %252 = vector.extract_strided_slice %110 {offsets = [15, 0], sizes = [1, 128], strides = [1, 1]} : vector<81x128xf32> to vector<1x128xf32>
      %253 = vector.shape_cast %252 : vector<1x128xf32> to vector<128xf32>
      %254 = vector.shape_cast %253 : vector<128xf32> to vector<1x128xf32>
      %255 = vector.broadcast %254 : vector<1x128xf32> to vector<32x128xf32>
      %256 = arith.mulf %251, %255 : vector<32x128xf32>
      %257 = arith.addf %248, %256 : vector<32x128xf32>
      %c32_i32_81 = arith.constant 32 : i32
      %258 = tpu.dynamic_rotate %199 by %c32_i32_81 dim 1 : vector<32x128xf32>, i32 -> vector<32x128xf32>
      %c32_i32_82 = arith.constant 32 : i32
      %259 = tpu.dynamic_rotate %201 by %c32_i32_82 dim 1 : vector<32x128xf32>, i32 -> vector<32x128xf32>
      %260 = arith.select %6, %258, %259 : vector<32x128xi1>, vector<32x128xf32>
      %261 = vector.extract_strided_slice %110 {offsets = [16, 0], sizes = [1, 128], strides = [1, 1]} : vector<81x128xf32> to vector<1x128xf32>
      %262 = vector.shape_cast %261 : vector<1x128xf32> to vector<128xf32>
      %263 = vector.shape_cast %262 : vector<128xf32> to vector<1x128xf32>
      %264 = vector.broadcast %263 : vector<1x128xf32> to vector<32x128xf32>
      %265 = arith.mulf %260, %264 : vector<32x128xf32>
      %266 = arith.addf %257, %265 : vector<32x128xf32>
      %267 = vector.extract_strided_slice %110 {offsets = [17, 0], sizes = [1, 128], strides = [1, 1]} : vector<81x128xf32> to vector<1x128xf32>
      %268 = vector.shape_cast %267 : vector<1x128xf32> to vector<128xf32>
      %269 = vector.shape_cast %268 : vector<128xf32> to vector<1x128xf32>
      %270 = vector.broadcast %269 : vector<1x128xf32> to vector<32x128xf32>
      %271 = arith.mulf %201, %270 : vector<32x128xf32>
      %272 = arith.addf %266, %271 : vector<32x128xf32>
      %c0_83 = arith.constant 0 : index
      %c0_84 = arith.constant 0 : index
      %c6 = arith.constant 6 : index
      %c0_85 = arith.constant 0 : index
      %273 = vector.load %arg10[%c0_83, %c0_84, %c6, %c0_85] : memref<2x4x24x128xf32, #tpu.memory_space<vmem>>, vector<2x4x8x128xf32>
      %274 = vector.extract_strided_slice %273 {offsets = [0, 0, 0, 0], sizes = [2, 2, 8, 128], strides = [1, 1, 1, 1]} : vector<2x4x8x128xf32> to vector<2x2x8x128xf32>
      %275 = vector.shape_cast %274 : vector<2x2x8x128xf32> to vector<32x128xf32>
      %276 = vector.extract_strided_slice %273 {offsets = [0, 1, 0, 0], sizes = [2, 2, 8, 128], strides = [1, 1, 1, 1]} : vector<2x4x8x128xf32> to vector<2x2x8x128xf32>
      %277 = vector.shape_cast %276 : vector<2x2x8x128xf32> to vector<32x128xf32>
      %278 = vector.extract_strided_slice %273 {offsets = [0, 2, 0, 0], sizes = [2, 2, 8, 128], strides = [1, 1, 1, 1]} : vector<2x4x8x128xf32> to vector<2x2x8x128xf32>
      %279 = vector.shape_cast %278 : vector<2x2x8x128xf32> to vector<32x128xf32>
      %280 = vector.extract_strided_slice %110 {offsets = [18, 0], sizes = [1, 128], strides = [1, 1]} : vector<81x128xf32> to vector<1x128xf32>
      %281 = vector.shape_cast %280 : vector<1x128xf32> to vector<128xf32>
      %282 = vector.shape_cast %281 : vector<128xf32> to vector<1x128xf32>
      %283 = vector.broadcast %282 : vector<1x128xf32> to vector<32x128xf32>
      %284 = arith.mulf %275, %283 : vector<32x128xf32>
      %c96_i32_86 = arith.constant 96 : i32
      %285 = tpu.dynamic_rotate %275 by %c96_i32_86 dim 1 : vector<32x128xf32>, i32 -> vector<32x128xf32>
      %c96_i32_87 = arith.constant 96 : i32
      %286 = tpu.dynamic_rotate %277 by %c96_i32_87 dim 1 : vector<32x128xf32>, i32 -> vector<32x128xf32>
      %287 = arith.select %2, %285, %286 : vector<32x128xi1>, vector<32x128xf32>
      %288 = vector.extract_strided_slice %110 {offsets = [19, 0], sizes = [1, 128], strides = [1, 1]} : vector<81x128xf32> to vector<1x128xf32>
      %289 = vector.shape_cast %288 : vector<1x128xf32> to vector<128xf32>
      %290 = vector.shape_cast %289 : vector<128xf32> to vector<1x128xf32>
      %291 = vector.broadcast %290 : vector<1x128xf32> to vector<32x128xf32>
      %292 = arith.mulf %287, %291 : vector<32x128xf32>
      %293 = arith.addf %284, %292 : vector<32x128xf32>
      %c64_i32_88 = arith.constant 64 : i32
      %294 = tpu.dynamic_rotate %275 by %c64_i32_88 dim 1 : vector<32x128xf32>, i32 -> vector<32x128xf32>
      %c64_i32_89 = arith.constant 64 : i32
      %295 = tpu.dynamic_rotate %277 by %c64_i32_89 dim 1 : vector<32x128xf32>, i32 -> vector<32x128xf32>
      %296 = arith.select %4, %294, %295 : vector<32x128xi1>, vector<32x128xf32>
      %297 = vector.extract_strided_slice %110 {offsets = [20, 0], sizes = [1, 128], strides = [1, 1]} : vector<81x128xf32> to vector<1x128xf32>
      %298 = vector.shape_cast %297 : vector<1x128xf32> to vector<128xf32>
      %299 = vector.shape_cast %298 : vector<128xf32> to vector<1x128xf32>
      %300 = vector.broadcast %299 : vector<1x128xf32> to vector<32x128xf32>
      %301 = arith.mulf %296, %300 : vector<32x128xf32>
      %302 = arith.addf %293, %301 : vector<32x128xf32>
      %c32_i32_90 = arith.constant 32 : i32
      %303 = tpu.dynamic_rotate %275 by %c32_i32_90 dim 1 : vector<32x128xf32>, i32 -> vector<32x128xf32>
      %c32_i32_91 = arith.constant 32 : i32
      %304 = tpu.dynamic_rotate %277 by %c32_i32_91 dim 1 : vector<32x128xf32>, i32 -> vector<32x128xf32>
      %305 = arith.select %6, %303, %304 : vector<32x128xi1>, vector<32x128xf32>
      %306 = vector.extract_strided_slice %110 {offsets = [21, 0], sizes = [1, 128], strides = [1, 1]} : vector<81x128xf32> to vector<1x128xf32>
      %307 = vector.shape_cast %306 : vector<1x128xf32> to vector<128xf32>
      %308 = vector.shape_cast %307 : vector<128xf32> to vector<1x128xf32>
      %309 = vector.broadcast %308 : vector<1x128xf32> to vector<32x128xf32>
      %310 = arith.mulf %305, %309 : vector<32x128xf32>
      %311 = arith.addf %302, %310 : vector<32x128xf32>
      %312 = vector.extract_strided_slice %110 {offsets = [22, 0], sizes = [1, 128], strides = [1, 1]} : vector<81x128xf32> to vector<1x128xf32>
      %313 = vector.shape_cast %312 : vector<1x128xf32> to vector<128xf32>
      %314 = vector.shape_cast %313 : vector<128xf32> to vector<1x128xf32>
      %315 = vector.broadcast %314 : vector<1x128xf32> to vector<32x128xf32>
      %316 = arith.mulf %277, %315 : vector<32x128xf32>
      %317 = arith.addf %311, %316 : vector<32x128xf32>
      %c96_i32_92 = arith.constant 96 : i32
      %318 = tpu.dynamic_rotate %277 by %c96_i32_92 dim 1 : vector<32x128xf32>, i32 -> vector<32x128xf32>
      %c96_i32_93 = arith.constant 96 : i32
      %319 = tpu.dynamic_rotate %279 by %c96_i32_93 dim 1 : vector<32x128xf32>, i32 -> vector<32x128xf32>
      %320 = arith.select %2, %318, %319 : vector<32x128xi1>, vector<32x128xf32>
      %321 = vector.extract_strided_slice %110 {offsets = [23, 0], sizes = [1, 128], strides = [1, 1]} : vector<81x128xf32> to vector<1x128xf32>
      %322 = vector.shape_cast %321 : vector<1x128xf32> to vector<128xf32>
      %323 = vector.shape_cast %322 : vector<128xf32> to vector<1x128xf32>
      %324 = vector.broadcast %323 : vector<1x128xf32> to vector<32x128xf32>
      %325 = arith.mulf %320, %324 : vector<32x128xf32>
      %326 = arith.addf %317, %325 : vector<32x128xf32>
      %c64_i32_94 = arith.constant 64 : i32
      %327 = tpu.dynamic_rotate %277 by %c64_i32_94 dim 1 : vector<32x128xf32>, i32 -> vector<32x128xf32>
      %c64_i32_95 = arith.constant 64 : i32
      %328 = tpu.dynamic_rotate %279 by %c64_i32_95 dim 1 : vector<32x128xf32>, i32 -> vector<32x128xf32>
      %329 = arith.select %4, %327, %328 : vector<32x128xi1>, vector<32x128xf32>
      %330 = vector.extract_strided_slice %110 {offsets = [24, 0], sizes = [1, 128], strides = [1, 1]} : vector<81x128xf32> to vector<1x128xf32>
      %331 = vector.shape_cast %330 : vector<1x128xf32> to vector<128xf32>
      %332 = vector.shape_cast %331 : vector<128xf32> to vector<1x128xf32>
      %333 = vector.broadcast %332 : vector<1x128xf32> to vector<32x128xf32>
      %334 = arith.mulf %329, %333 : vector<32x128xf32>
      %335 = arith.addf %326, %334 : vector<32x128xf32>
      %c32_i32_96 = arith.constant 32 : i32
      %336 = tpu.dynamic_rotate %277 by %c32_i32_96 dim 1 : vector<32x128xf32>, i32 -> vector<32x128xf32>
      %c32_i32_97 = arith.constant 32 : i32
      %337 = tpu.dynamic_rotate %279 by %c32_i32_97 dim 1 : vector<32x128xf32>, i32 -> vector<32x128xf32>
      %338 = arith.select %6, %336, %337 : vector<32x128xi1>, vector<32x128xf32>
      %339 = vector.extract_strided_slice %110 {offsets = [25, 0], sizes = [1, 128], strides = [1, 1]} : vector<81x128xf32> to vector<1x128xf32>
      %340 = vector.shape_cast %339 : vector<1x128xf32> to vector<128xf32>
      %341 = vector.shape_cast %340 : vector<128xf32> to vector<1x128xf32>
      %342 = vector.broadcast %341 : vector<1x128xf32> to vector<32x128xf32>
      %343 = arith.mulf %338, %342 : vector<32x128xf32>
      %344 = arith.addf %335, %343 : vector<32x128xf32>
      %345 = vector.extract_strided_slice %110 {offsets = [26, 0], sizes = [1, 128], strides = [1, 1]} : vector<81x128xf32> to vector<1x128xf32>
      %346 = vector.shape_cast %345 : vector<1x128xf32> to vector<128xf32>
      %347 = vector.shape_cast %346 : vector<128xf32> to vector<1x128xf32>
      %348 = vector.broadcast %347 : vector<1x128xf32> to vector<32x128xf32>
      %349 = arith.mulf %279, %348 : vector<32x128xf32>
      %350 = arith.addf %344, %349 : vector<32x128xf32>
      %c0_98 = arith.constant 0 : index
      %c0_99 = arith.constant 0 : index
      %c7 = arith.constant 7 : index
      %c0_100 = arith.constant 0 : index
      %351 = vector.load %arg10[%c0_98, %c0_99, %c7, %c0_100] : memref<2x4x24x128xf32, #tpu.memory_space<vmem>>, vector<2x4x8x128xf32>
      %352 = vector.extract_strided_slice %351 {offsets = [0, 0, 0, 0], sizes = [2, 2, 8, 128], strides = [1, 1, 1, 1]} : vector<2x4x8x128xf32> to vector<2x2x8x128xf32>
      %353 = vector.shape_cast %352 : vector<2x2x8x128xf32> to vector<32x128xf32>
      %354 = vector.extract_strided_slice %351 {offsets = [0, 1, 0, 0], sizes = [2, 2, 8, 128], strides = [1, 1, 1, 1]} : vector<2x4x8x128xf32> to vector<2x2x8x128xf32>
      %355 = vector.shape_cast %354 : vector<2x2x8x128xf32> to vector<32x128xf32>
      %356 = vector.extract_strided_slice %351 {offsets = [0, 2, 0, 0], sizes = [2, 2, 8, 128], strides = [1, 1, 1, 1]} : vector<2x4x8x128xf32> to vector<2x2x8x128xf32>
      %357 = vector.shape_cast %356 : vector<2x2x8x128xf32> to vector<32x128xf32>
      %358 = vector.extract_strided_slice %110 {offsets = [27, 0], sizes = [1, 128], strides = [1, 1]} : vector<81x128xf32> to vector<1x128xf32>
      %359 = vector.shape_cast %358 : vector<1x128xf32> to vector<128xf32>
      %360 = vector.shape_cast %359 : vector<128xf32> to vector<1x128xf32>
      %361 = vector.broadcast %360 : vector<1x128xf32> to vector<32x128xf32>
      %362 = arith.mulf %353, %361 : vector<32x128xf32>
      %363 = arith.addf %194, %362 : vector<32x128xf32>
      %c96_i32_101 = arith.constant 96 : i32
      %364 = tpu.dynamic_rotate %353 by %c96_i32_101 dim 1 : vector<32x128xf32>, i32 -> vector<32x128xf32>
      %c96_i32_102 = arith.constant 96 : i32
      %365 = tpu.dynamic_rotate %355 by %c96_i32_102 dim 1 : vector<32x128xf32>, i32 -> vector<32x128xf32>
      %366 = arith.select %2, %364, %365 : vector<32x128xi1>, vector<32x128xf32>
      %367 = vector.extract_strided_slice %110 {offsets = [28, 0], sizes = [1, 128], strides = [1, 1]} : vector<81x128xf32> to vector<1x128xf32>
      %368 = vector.shape_cast %367 : vector<1x128xf32> to vector<128xf32>
      %369 = vector.shape_cast %368 : vector<128xf32> to vector<1x128xf32>
      %370 = vector.broadcast %369 : vector<1x128xf32> to vector<32x128xf32>
      %371 = arith.mulf %366, %370 : vector<32x128xf32>
      %372 = arith.addf %363, %371 : vector<32x128xf32>
      %c64_i32_103 = arith.constant 64 : i32
      %373 = tpu.dynamic_rotate %353 by %c64_i32_103 dim 1 : vector<32x128xf32>, i32 -> vector<32x128xf32>
      %c64_i32_104 = arith.constant 64 : i32
      %374 = tpu.dynamic_rotate %355 by %c64_i32_104 dim 1 : vector<32x128xf32>, i32 -> vector<32x128xf32>
      %375 = arith.select %4, %373, %374 : vector<32x128xi1>, vector<32x128xf32>
      %376 = vector.extract_strided_slice %110 {offsets = [29, 0], sizes = [1, 128], strides = [1, 1]} : vector<81x128xf32> to vector<1x128xf32>
      %377 = vector.shape_cast %376 : vector<1x128xf32> to vector<128xf32>
      %378 = vector.shape_cast %377 : vector<128xf32> to vector<1x128xf32>
      %379 = vector.broadcast %378 : vector<1x128xf32> to vector<32x128xf32>
      %380 = arith.mulf %375, %379 : vector<32x128xf32>
      %381 = arith.addf %372, %380 : vector<32x128xf32>
      %c32_i32_105 = arith.constant 32 : i32
      %382 = tpu.dynamic_rotate %353 by %c32_i32_105 dim 1 : vector<32x128xf32>, i32 -> vector<32x128xf32>
      %c32_i32_106 = arith.constant 32 : i32
      %383 = tpu.dynamic_rotate %355 by %c32_i32_106 dim 1 : vector<32x128xf32>, i32 -> vector<32x128xf32>
      %384 = arith.select %6, %382, %383 : vector<32x128xi1>, vector<32x128xf32>
      %385 = vector.extract_strided_slice %110 {offsets = [30, 0], sizes = [1, 128], strides = [1, 1]} : vector<81x128xf32> to vector<1x128xf32>
      %386 = vector.shape_cast %385 : vector<1x128xf32> to vector<128xf32>
      %387 = vector.shape_cast %386 : vector<128xf32> to vector<1x128xf32>
      %388 = vector.broadcast %387 : vector<1x128xf32> to vector<32x128xf32>
      %389 = arith.mulf %384, %388 : vector<32x128xf32>
      %390 = arith.addf %381, %389 : vector<32x128xf32>
      %391 = vector.extract_strided_slice %110 {offsets = [31, 0], sizes = [1, 128], strides = [1, 1]} : vector<81x128xf32> to vector<1x128xf32>
      %392 = vector.shape_cast %391 : vector<1x128xf32> to vector<128xf32>
      %393 = vector.shape_cast %392 : vector<128xf32> to vector<1x128xf32>
      %394 = vector.broadcast %393 : vector<1x128xf32> to vector<32x128xf32>
      %395 = arith.mulf %355, %394 : vector<32x128xf32>
      %396 = arith.addf %390, %395 : vector<32x128xf32>
      %c96_i32_107 = arith.constant 96 : i32
      %397 = tpu.dynamic_rotate %355 by %c96_i32_107 dim 1 : vector<32x128xf32>, i32 -> vector<32x128xf32>
      %c96_i32_108 = arith.constant 96 : i32
      %398 = tpu.dynamic_rotate %357 by %c96_i32_108 dim 1 : vector<32x128xf32>, i32 -> vector<32x128xf32>
      %399 = arith.select %2, %397, %398 : vector<32x128xi1>, vector<32x128xf32>
      %400 = vector.extract_strided_slice %110 {offsets = [32, 0], sizes = [1, 128], strides = [1, 1]} : vector<81x128xf32> to vector<1x128xf32>
      %401 = vector.shape_cast %400 : vector<1x128xf32> to vector<128xf32>
      %402 = vector.shape_cast %401 : vector<128xf32> to vector<1x128xf32>
      %403 = vector.broadcast %402 : vector<1x128xf32> to vector<32x128xf32>
      %404 = arith.mulf %399, %403 : vector<32x128xf32>
      %405 = arith.addf %396, %404 : vector<32x128xf32>
      %c64_i32_109 = arith.constant 64 : i32
      %406 = tpu.dynamic_rotate %355 by %c64_i32_109 dim 1 : vector<32x128xf32>, i32 -> vector<32x128xf32>
      %c64_i32_110 = arith.constant 64 : i32
      %407 = tpu.dynamic_rotate %357 by %c64_i32_110 dim 1 : vector<32x128xf32>, i32 -> vector<32x128xf32>
      %408 = arith.select %4, %406, %407 : vector<32x128xi1>, vector<32x128xf32>
      %409 = vector.extract_strided_slice %110 {offsets = [33, 0], sizes = [1, 128], strides = [1, 1]} : vector<81x128xf32> to vector<1x128xf32>
      %410 = vector.shape_cast %409 : vector<1x128xf32> to vector<128xf32>
      %411 = vector.shape_cast %410 : vector<128xf32> to vector<1x128xf32>
      %412 = vector.broadcast %411 : vector<1x128xf32> to vector<32x128xf32>
      %413 = arith.mulf %408, %412 : vector<32x128xf32>
      %414 = arith.addf %405, %413 : vector<32x128xf32>
      %c32_i32_111 = arith.constant 32 : i32
      %415 = tpu.dynamic_rotate %355 by %c32_i32_111 dim 1 : vector<32x128xf32>, i32 -> vector<32x128xf32>
      %c32_i32_112 = arith.constant 32 : i32
      %416 = tpu.dynamic_rotate %357 by %c32_i32_112 dim 1 : vector<32x128xf32>, i32 -> vector<32x128xf32>
      %417 = arith.select %6, %415, %416 : vector<32x128xi1>, vector<32x128xf32>
      %418 = vector.extract_strided_slice %110 {offsets = [34, 0], sizes = [1, 128], strides = [1, 1]} : vector<81x128xf32> to vector<1x128xf32>
      %419 = vector.shape_cast %418 : vector<1x128xf32> to vector<128xf32>
      %420 = vector.shape_cast %419 : vector<128xf32> to vector<1x128xf32>
      %421 = vector.broadcast %420 : vector<1x128xf32> to vector<32x128xf32>
      %422 = arith.mulf %417, %421 : vector<32x128xf32>
      %423 = arith.addf %414, %422 : vector<32x128xf32>
      %424 = vector.extract_strided_slice %110 {offsets = [35, 0], sizes = [1, 128], strides = [1, 1]} : vector<81x128xf32> to vector<1x128xf32>
      %425 = vector.shape_cast %424 : vector<1x128xf32> to vector<128xf32>
      %426 = vector.shape_cast %425 : vector<128xf32> to vector<1x128xf32>
      %427 = vector.broadcast %426 : vector<1x128xf32> to vector<32x128xf32>
      %428 = arith.mulf %357, %427 : vector<32x128xf32>
      %429 = arith.addf %423, %428 : vector<32x128xf32>
      %c0_113 = arith.constant 0 : index
      %c0_114 = arith.constant 0 : index
      %c8_115 = arith.constant 8 : index
      %c0_116 = arith.constant 0 : index
      %430 = vector.load %arg10[%c0_113, %c0_114, %c8_115, %c0_116] : memref<2x4x24x128xf32, #tpu.memory_space<vmem>>, vector<2x4x8x128xf32>
      %431 = vector.extract_strided_slice %430 {offsets = [0, 0, 0, 0], sizes = [2, 2, 8, 128], strides = [1, 1, 1, 1]} : vector<2x4x8x128xf32> to vector<2x2x8x128xf32>
      %432 = vector.shape_cast %431 : vector<2x2x8x128xf32> to vector<32x128xf32>
      %433 = vector.extract_strided_slice %430 {offsets = [0, 1, 0, 0], sizes = [2, 2, 8, 128], strides = [1, 1, 1, 1]} : vector<2x4x8x128xf32> to vector<2x2x8x128xf32>
      %434 = vector.shape_cast %433 : vector<2x2x8x128xf32> to vector<32x128xf32>
      %435 = vector.extract_strided_slice %430 {offsets = [0, 2, 0, 0], sizes = [2, 2, 8, 128], strides = [1, 1, 1, 1]} : vector<2x4x8x128xf32> to vector<2x2x8x128xf32>
      %436 = vector.shape_cast %435 : vector<2x2x8x128xf32> to vector<32x128xf32>
      %437 = vector.extract_strided_slice %110 {offsets = [36, 0], sizes = [1, 128], strides = [1, 1]} : vector<81x128xf32> to vector<1x128xf32>
      %438 = vector.shape_cast %437 : vector<1x128xf32> to vector<128xf32>
      %439 = vector.shape_cast %438 : vector<128xf32> to vector<1x128xf32>
      %440 = vector.broadcast %439 : vector<1x128xf32> to vector<32x128xf32>
      %441 = arith.mulf %432, %440 : vector<32x128xf32>
      %442 = arith.addf %272, %441 : vector<32x128xf32>
      %c96_i32_117 = arith.constant 96 : i32
      %443 = tpu.dynamic_rotate %432 by %c96_i32_117 dim 1 : vector<32x128xf32>, i32 -> vector<32x128xf32>
      %c96_i32_118 = arith.constant 96 : i32
      %444 = tpu.dynamic_rotate %434 by %c96_i32_118 dim 1 : vector<32x128xf32>, i32 -> vector<32x128xf32>
      %445 = arith.select %2, %443, %444 : vector<32x128xi1>, vector<32x128xf32>
      %446 = vector.extract_strided_slice %110 {offsets = [37, 0], sizes = [1, 128], strides = [1, 1]} : vector<81x128xf32> to vector<1x128xf32>
      %447 = vector.shape_cast %446 : vector<1x128xf32> to vector<128xf32>
      %448 = vector.shape_cast %447 : vector<128xf32> to vector<1x128xf32>
      %449 = vector.broadcast %448 : vector<1x128xf32> to vector<32x128xf32>
      %450 = arith.mulf %445, %449 : vector<32x128xf32>
      %451 = arith.addf %442, %450 : vector<32x128xf32>
      %c64_i32_119 = arith.constant 64 : i32
      %452 = tpu.dynamic_rotate %432 by %c64_i32_119 dim 1 : vector<32x128xf32>, i32 -> vector<32x128xf32>
      %c64_i32_120 = arith.constant 64 : i32
      %453 = tpu.dynamic_rotate %434 by %c64_i32_120 dim 1 : vector<32x128xf32>, i32 -> vector<32x128xf32>
      %454 = arith.select %4, %452, %453 : vector<32x128xi1>, vector<32x128xf32>
      %455 = vector.extract_strided_slice %110 {offsets = [38, 0], sizes = [1, 128], strides = [1, 1]} : vector<81x128xf32> to vector<1x128xf32>
      %456 = vector.shape_cast %455 : vector<1x128xf32> to vector<128xf32>
      %457 = vector.shape_cast %456 : vector<128xf32> to vector<1x128xf32>
      %458 = vector.broadcast %457 : vector<1x128xf32> to vector<32x128xf32>
      %459 = arith.mulf %454, %458 : vector<32x128xf32>
      %460 = arith.addf %451, %459 : vector<32x128xf32>
      %c32_i32_121 = arith.constant 32 : i32
      %461 = tpu.dynamic_rotate %432 by %c32_i32_121 dim 1 : vector<32x128xf32>, i32 -> vector<32x128xf32>
      %c32_i32_122 = arith.constant 32 : i32
      %462 = tpu.dynamic_rotate %434 by %c32_i32_122 dim 1 : vector<32x128xf32>, i32 -> vector<32x128xf32>
      %463 = arith.select %6, %461, %462 : vector<32x128xi1>, vector<32x128xf32>
      %464 = vector.extract_strided_slice %110 {offsets = [39, 0], sizes = [1, 128], strides = [1, 1]} : vector<81x128xf32> to vector<1x128xf32>
      %465 = vector.shape_cast %464 : vector<1x128xf32> to vector<128xf32>
      %466 = vector.shape_cast %465 : vector<128xf32> to vector<1x128xf32>
      %467 = vector.broadcast %466 : vector<1x128xf32> to vector<32x128xf32>
      %468 = arith.mulf %463, %467 : vector<32x128xf32>
      %469 = arith.addf %460, %468 : vector<32x128xf32>
      %470 = vector.extract_strided_slice %110 {offsets = [40, 0], sizes = [1, 128], strides = [1, 1]} : vector<81x128xf32> to vector<1x128xf32>
      %471 = vector.shape_cast %470 : vector<1x128xf32> to vector<128xf32>
      %472 = vector.shape_cast %471 : vector<128xf32> to vector<1x128xf32>
      %473 = vector.broadcast %472 : vector<1x128xf32> to vector<32x128xf32>
      %474 = arith.mulf %434, %473 : vector<32x128xf32>
      %475 = arith.addf %469, %474 : vector<32x128xf32>
      %c96_i32_123 = arith.constant 96 : i32
      %476 = tpu.dynamic_rotate %434 by %c96_i32_123 dim 1 : vector<32x128xf32>, i32 -> vector<32x128xf32>
      %c96_i32_124 = arith.constant 96 : i32
      %477 = tpu.dynamic_rotate %436 by %c96_i32_124 dim 1 : vector<32x128xf32>, i32 -> vector<32x128xf32>
      %478 = arith.select %2, %476, %477 : vector<32x128xi1>, vector<32x128xf32>
      %479 = vector.extract_strided_slice %110 {offsets = [41, 0], sizes = [1, 128], strides = [1, 1]} : vector<81x128xf32> to vector<1x128xf32>
      %480 = vector.shape_cast %479 : vector<1x128xf32> to vector<128xf32>
      %481 = vector.shape_cast %480 : vector<128xf32> to vector<1x128xf32>
      %482 = vector.broadcast %481 : vector<1x128xf32> to vector<32x128xf32>
      %483 = arith.mulf %478, %482 : vector<32x128xf32>
      %484 = arith.addf %475, %483 : vector<32x128xf32>
      %c64_i32_125 = arith.constant 64 : i32
      %485 = tpu.dynamic_rotate %434 by %c64_i32_125 dim 1 : vector<32x128xf32>, i32 -> vector<32x128xf32>
      %c64_i32_126 = arith.constant 64 : i32
      %486 = tpu.dynamic_rotate %436 by %c64_i32_126 dim 1 : vector<32x128xf32>, i32 -> vector<32x128xf32>
      %487 = arith.select %4, %485, %486 : vector<32x128xi1>, vector<32x128xf32>
      %488 = vector.extract_strided_slice %110 {offsets = [42, 0], sizes = [1, 128], strides = [1, 1]} : vector<81x128xf32> to vector<1x128xf32>
      %489 = vector.shape_cast %488 : vector<1x128xf32> to vector<128xf32>
      %490 = vector.shape_cast %489 : vector<128xf32> to vector<1x128xf32>
      %491 = vector.broadcast %490 : vector<1x128xf32> to vector<32x128xf32>
      %492 = arith.mulf %487, %491 : vector<32x128xf32>
      %493 = arith.addf %484, %492 : vector<32x128xf32>
      %c32_i32_127 = arith.constant 32 : i32
      %494 = tpu.dynamic_rotate %434 by %c32_i32_127 dim 1 : vector<32x128xf32>, i32 -> vector<32x128xf32>
      %c32_i32_128 = arith.constant 32 : i32
      %495 = tpu.dynamic_rotate %436 by %c32_i32_128 dim 1 : vector<32x128xf32>, i32 -> vector<32x128xf32>
      %496 = arith.select %6, %494, %495 : vector<32x128xi1>, vector<32x128xf32>
      %497 = vector.extract_strided_slice %110 {offsets = [43, 0], sizes = [1, 128], strides = [1, 1]} : vector<81x128xf32> to vector<1x128xf32>
      %498 = vector.shape_cast %497 : vector<1x128xf32> to vector<128xf32>
      %499 = vector.shape_cast %498 : vector<128xf32> to vector<1x128xf32>
      %500 = vector.broadcast %499 : vector<1x128xf32> to vector<32x128xf32>
      %501 = arith.mulf %496, %500 : vector<32x128xf32>
      %502 = arith.addf %493, %501 : vector<32x128xf32>
      %503 = vector.extract_strided_slice %110 {offsets = [44, 0], sizes = [1, 128], strides = [1, 1]} : vector<81x128xf32> to vector<1x128xf32>
      %504 = vector.shape_cast %503 : vector<1x128xf32> to vector<128xf32>
      %505 = vector.shape_cast %504 : vector<128xf32> to vector<1x128xf32>
      %506 = vector.broadcast %505 : vector<1x128xf32> to vector<32x128xf32>
      %507 = arith.mulf %436, %506 : vector<32x128xf32>
      %508 = arith.addf %502, %507 : vector<32x128xf32>
      %c0_129 = arith.constant 0 : index
      %c0_130 = arith.constant 0 : index
      %c9 = arith.constant 9 : index
      %c0_131 = arith.constant 0 : index
      %509 = vector.load %arg10[%c0_129, %c0_130, %c9, %c0_131] : memref<2x4x24x128xf32, #tpu.memory_space<vmem>>, vector<2x4x8x128xf32>
      %510 = vector.extract_strided_slice %509 {offsets = [0, 0, 0, 0], sizes = [2, 2, 8, 128], strides = [1, 1, 1, 1]} : vector<2x4x8x128xf32> to vector<2x2x8x128xf32>
      %511 = vector.shape_cast %510 : vector<2x2x8x128xf32> to vector<32x128xf32>
      %512 = vector.extract_strided_slice %509 {offsets = [0, 1, 0, 0], sizes = [2, 2, 8, 128], strides = [1, 1, 1, 1]} : vector<2x4x8x128xf32> to vector<2x2x8x128xf32>
      %513 = vector.shape_cast %512 : vector<2x2x8x128xf32> to vector<32x128xf32>
      %514 = vector.extract_strided_slice %509 {offsets = [0, 2, 0, 0], sizes = [2, 2, 8, 128], strides = [1, 1, 1, 1]} : vector<2x4x8x128xf32> to vector<2x2x8x128xf32>
      %515 = vector.shape_cast %514 : vector<2x2x8x128xf32> to vector<32x128xf32>
      %516 = vector.extract_strided_slice %110 {offsets = [45, 0], sizes = [1, 128], strides = [1, 1]} : vector<81x128xf32> to vector<1x128xf32>
      %517 = vector.shape_cast %516 : vector<1x128xf32> to vector<128xf32>
      %518 = vector.shape_cast %517 : vector<128xf32> to vector<1x128xf32>
      %519 = vector.broadcast %518 : vector<1x128xf32> to vector<32x128xf32>
      %520 = arith.mulf %511, %519 : vector<32x128xf32>
      %521 = arith.addf %350, %520 : vector<32x128xf32>
      %c96_i32_132 = arith.constant 96 : i32
      %522 = tpu.dynamic_rotate %511 by %c96_i32_132 dim 1 : vector<32x128xf32>, i32 -> vector<32x128xf32>
      %c96_i32_133 = arith.constant 96 : i32
      %523 = tpu.dynamic_rotate %513 by %c96_i32_133 dim 1 : vector<32x128xf32>, i32 -> vector<32x128xf32>
      %524 = arith.select %2, %522, %523 : vector<32x128xi1>, vector<32x128xf32>
      %525 = vector.extract_strided_slice %110 {offsets = [46, 0], sizes = [1, 128], strides = [1, 1]} : vector<81x128xf32> to vector<1x128xf32>
      %526 = vector.shape_cast %525 : vector<1x128xf32> to vector<128xf32>
      %527 = vector.shape_cast %526 : vector<128xf32> to vector<1x128xf32>
      %528 = vector.broadcast %527 : vector<1x128xf32> to vector<32x128xf32>
      %529 = arith.mulf %524, %528 : vector<32x128xf32>
      %530 = arith.addf %521, %529 : vector<32x128xf32>
      %c64_i32_134 = arith.constant 64 : i32
      %531 = tpu.dynamic_rotate %511 by %c64_i32_134 dim 1 : vector<32x128xf32>, i32 -> vector<32x128xf32>
      %c64_i32_135 = arith.constant 64 : i32
      %532 = tpu.dynamic_rotate %513 by %c64_i32_135 dim 1 : vector<32x128xf32>, i32 -> vector<32x128xf32>
      %533 = arith.select %4, %531, %532 : vector<32x128xi1>, vector<32x128xf32>
      %534 = vector.extract_strided_slice %110 {offsets = [47, 0], sizes = [1, 128], strides = [1, 1]} : vector<81x128xf32> to vector<1x128xf32>
      %535 = vector.shape_cast %534 : vector<1x128xf32> to vector<128xf32>
      %536 = vector.shape_cast %535 : vector<128xf32> to vector<1x128xf32>
      %537 = vector.broadcast %536 : vector<1x128xf32> to vector<32x128xf32>
      %538 = arith.mulf %533, %537 : vector<32x128xf32>
      %539 = arith.addf %530, %538 : vector<32x128xf32>
      %c32_i32_136 = arith.constant 32 : i32
      %540 = tpu.dynamic_rotate %511 by %c32_i32_136 dim 1 : vector<32x128xf32>, i32 -> vector<32x128xf32>
      %c32_i32_137 = arith.constant 32 : i32
      %541 = tpu.dynamic_rotate %513 by %c32_i32_137 dim 1 : vector<32x128xf32>, i32 -> vector<32x128xf32>
      %542 = arith.select %6, %540, %541 : vector<32x128xi1>, vector<32x128xf32>
      %543 = vector.extract_strided_slice %110 {offsets = [48, 0], sizes = [1, 128], strides = [1, 1]} : vector<81x128xf32> to vector<1x128xf32>
      %544 = vector.shape_cast %543 : vector<1x128xf32> to vector<128xf32>
      %545 = vector.shape_cast %544 : vector<128xf32> to vector<1x128xf32>
      %546 = vector.broadcast %545 : vector<1x128xf32> to vector<32x128xf32>
      %547 = arith.mulf %542, %546 : vector<32x128xf32>
      %548 = arith.addf %539, %547 : vector<32x128xf32>
      %549 = vector.extract_strided_slice %110 {offsets = [49, 0], sizes = [1, 128], strides = [1, 1]} : vector<81x128xf32> to vector<1x128xf32>
      %550 = vector.shape_cast %549 : vector<1x128xf32> to vector<128xf32>
      %551 = vector.shape_cast %550 : vector<128xf32> to vector<1x128xf32>
      %552 = vector.broadcast %551 : vector<1x128xf32> to vector<32x128xf32>
      %553 = arith.mulf %513, %552 : vector<32x128xf32>
      %554 = arith.addf %548, %553 : vector<32x128xf32>
      %c96_i32_138 = arith.constant 96 : i32
      %555 = tpu.dynamic_rotate %513 by %c96_i32_138 dim 1 : vector<32x128xf32>, i32 -> vector<32x128xf32>
      %c96_i32_139 = arith.constant 96 : i32
      %556 = tpu.dynamic_rotate %515 by %c96_i32_139 dim 1 : vector<32x128xf32>, i32 -> vector<32x128xf32>
      %557 = arith.select %2, %555, %556 : vector<32x128xi1>, vector<32x128xf32>
      %558 = vector.extract_strided_slice %110 {offsets = [50, 0], sizes = [1, 128], strides = [1, 1]} : vector<81x128xf32> to vector<1x128xf32>
      %559 = vector.shape_cast %558 : vector<1x128xf32> to vector<128xf32>
      %560 = vector.shape_cast %559 : vector<128xf32> to vector<1x128xf32>
      %561 = vector.broadcast %560 : vector<1x128xf32> to vector<32x128xf32>
      %562 = arith.mulf %557, %561 : vector<32x128xf32>
      %563 = arith.addf %554, %562 : vector<32x128xf32>
      %c64_i32_140 = arith.constant 64 : i32
      %564 = tpu.dynamic_rotate %513 by %c64_i32_140 dim 1 : vector<32x128xf32>, i32 -> vector<32x128xf32>
      %c64_i32_141 = arith.constant 64 : i32
      %565 = tpu.dynamic_rotate %515 by %c64_i32_141 dim 1 : vector<32x128xf32>, i32 -> vector<32x128xf32>
      %566 = arith.select %4, %564, %565 : vector<32x128xi1>, vector<32x128xf32>
      %567 = vector.extract_strided_slice %110 {offsets = [51, 0], sizes = [1, 128], strides = [1, 1]} : vector<81x128xf32> to vector<1x128xf32>
      %568 = vector.shape_cast %567 : vector<1x128xf32> to vector<128xf32>
      %569 = vector.shape_cast %568 : vector<128xf32> to vector<1x128xf32>
      %570 = vector.broadcast %569 : vector<1x128xf32> to vector<32x128xf32>
      %571 = arith.mulf %566, %570 : vector<32x128xf32>
      %572 = arith.addf %563, %571 : vector<32x128xf32>
      %c32_i32_142 = arith.constant 32 : i32
      %573 = tpu.dynamic_rotate %513 by %c32_i32_142 dim 1 : vector<32x128xf32>, i32 -> vector<32x128xf32>
      %c32_i32_143 = arith.constant 32 : i32
      %574 = tpu.dynamic_rotate %515 by %c32_i32_143 dim 1 : vector<32x128xf32>, i32 -> vector<32x128xf32>
      %575 = arith.select %6, %573, %574 : vector<32x128xi1>, vector<32x128xf32>
      %576 = vector.extract_strided_slice %110 {offsets = [52, 0], sizes = [1, 128], strides = [1, 1]} : vector<81x128xf32> to vector<1x128xf32>
      %577 = vector.shape_cast %576 : vector<1x128xf32> to vector<128xf32>
      %578 = vector.shape_cast %577 : vector<128xf32> to vector<1x128xf32>
      %579 = vector.broadcast %578 : vector<1x128xf32> to vector<32x128xf32>
      %580 = arith.mulf %575, %579 : vector<32x128xf32>
      %581 = arith.addf %572, %580 : vector<32x128xf32>
      %582 = vector.extract_strided_slice %110 {offsets = [53, 0], sizes = [1, 128], strides = [1, 1]} : vector<81x128xf32> to vector<1x128xf32>
      %583 = vector.shape_cast %582 : vector<1x128xf32> to vector<128xf32>
      %584 = vector.shape_cast %583 : vector<128xf32> to vector<1x128xf32>
      %585 = vector.broadcast %584 : vector<1x128xf32> to vector<32x128xf32>
      %586 = arith.mulf %515, %585 : vector<32x128xf32>
      %587 = arith.addf %581, %586 : vector<32x128xf32>
      %c0_144 = arith.constant 0 : index
      %c0_145 = arith.constant 0 : index
      %c10 = arith.constant 10 : index
      %c0_146 = arith.constant 0 : index
      %588 = vector.load %arg10[%c0_144, %c0_145, %c10, %c0_146] : memref<2x4x24x128xf32, #tpu.memory_space<vmem>>, vector<2x4x8x128xf32>
      %589 = vector.extract_strided_slice %588 {offsets = [0, 0, 0, 0], sizes = [2, 2, 8, 128], strides = [1, 1, 1, 1]} : vector<2x4x8x128xf32> to vector<2x2x8x128xf32>
      %590 = vector.shape_cast %589 : vector<2x2x8x128xf32> to vector<32x128xf32>
      %591 = vector.extract_strided_slice %588 {offsets = [0, 1, 0, 0], sizes = [2, 2, 8, 128], strides = [1, 1, 1, 1]} : vector<2x4x8x128xf32> to vector<2x2x8x128xf32>
      %592 = vector.shape_cast %591 : vector<2x2x8x128xf32> to vector<32x128xf32>
      %593 = vector.extract_strided_slice %588 {offsets = [0, 2, 0, 0], sizes = [2, 2, 8, 128], strides = [1, 1, 1, 1]} : vector<2x4x8x128xf32> to vector<2x2x8x128xf32>
      %594 = vector.shape_cast %593 : vector<2x2x8x128xf32> to vector<32x128xf32>
      %595 = vector.extract_strided_slice %110 {offsets = [54, 0], sizes = [1, 128], strides = [1, 1]} : vector<81x128xf32> to vector<1x128xf32>
      %596 = vector.shape_cast %595 : vector<1x128xf32> to vector<128xf32>
      %597 = vector.shape_cast %596 : vector<128xf32> to vector<1x128xf32>
      %598 = vector.broadcast %597 : vector<1x128xf32> to vector<32x128xf32>
      %599 = arith.mulf %590, %598 : vector<32x128xf32>
      %600 = arith.addf %429, %599 : vector<32x128xf32>
      %c96_i32_147 = arith.constant 96 : i32
      %601 = tpu.dynamic_rotate %590 by %c96_i32_147 dim 1 : vector<32x128xf32>, i32 -> vector<32x128xf32>
      %c96_i32_148 = arith.constant 96 : i32
      %602 = tpu.dynamic_rotate %592 by %c96_i32_148 dim 1 : vector<32x128xf32>, i32 -> vector<32x128xf32>
      %603 = arith.select %2, %601, %602 : vector<32x128xi1>, vector<32x128xf32>
      %604 = vector.extract_strided_slice %110 {offsets = [55, 0], sizes = [1, 128], strides = [1, 1]} : vector<81x128xf32> to vector<1x128xf32>
      %605 = vector.shape_cast %604 : vector<1x128xf32> to vector<128xf32>
      %606 = vector.shape_cast %605 : vector<128xf32> to vector<1x128xf32>
      %607 = vector.broadcast %606 : vector<1x128xf32> to vector<32x128xf32>
      %608 = arith.mulf %603, %607 : vector<32x128xf32>
      %609 = arith.addf %600, %608 : vector<32x128xf32>
      %c64_i32_149 = arith.constant 64 : i32
      %610 = tpu.dynamic_rotate %590 by %c64_i32_149 dim 1 : vector<32x128xf32>, i32 -> vector<32x128xf32>
      %c64_i32_150 = arith.constant 64 : i32
      %611 = tpu.dynamic_rotate %592 by %c64_i32_150 dim 1 : vector<32x128xf32>, i32 -> vector<32x128xf32>
      %612 = arith.select %4, %610, %611 : vector<32x128xi1>, vector<32x128xf32>
      %613 = vector.extract_strided_slice %110 {offsets = [56, 0], sizes = [1, 128], strides = [1, 1]} : vector<81x128xf32> to vector<1x128xf32>
      %614 = vector.shape_cast %613 : vector<1x128xf32> to vector<128xf32>
      %615 = vector.shape_cast %614 : vector<128xf32> to vector<1x128xf32>
      %616 = vector.broadcast %615 : vector<1x128xf32> to vector<32x128xf32>
      %617 = arith.mulf %612, %616 : vector<32x128xf32>
      %618 = arith.addf %609, %617 : vector<32x128xf32>
      %c32_i32_151 = arith.constant 32 : i32
      %619 = tpu.dynamic_rotate %590 by %c32_i32_151 dim 1 : vector<32x128xf32>, i32 -> vector<32x128xf32>
      %c32_i32_152 = arith.constant 32 : i32
      %620 = tpu.dynamic_rotate %592 by %c32_i32_152 dim 1 : vector<32x128xf32>, i32 -> vector<32x128xf32>
      %621 = arith.select %6, %619, %620 : vector<32x128xi1>, vector<32x128xf32>
      %622 = vector.extract_strided_slice %110 {offsets = [57, 0], sizes = [1, 128], strides = [1, 1]} : vector<81x128xf32> to vector<1x128xf32>
      %623 = vector.shape_cast %622 : vector<1x128xf32> to vector<128xf32>
      %624 = vector.shape_cast %623 : vector<128xf32> to vector<1x128xf32>
      %625 = vector.broadcast %624 : vector<1x128xf32> to vector<32x128xf32>
      %626 = arith.mulf %621, %625 : vector<32x128xf32>
      %627 = arith.addf %618, %626 : vector<32x128xf32>
      %628 = vector.extract_strided_slice %110 {offsets = [58, 0], sizes = [1, 128], strides = [1, 1]} : vector<81x128xf32> to vector<1x128xf32>
      %629 = vector.shape_cast %628 : vector<1x128xf32> to vector<128xf32>
      %630 = vector.shape_cast %629 : vector<128xf32> to vector<1x128xf32>
      %631 = vector.broadcast %630 : vector<1x128xf32> to vector<32x128xf32>
      %632 = arith.mulf %592, %631 : vector<32x128xf32>
      %633 = arith.addf %627, %632 : vector<32x128xf32>
      %c96_i32_153 = arith.constant 96 : i32
      %634 = tpu.dynamic_rotate %592 by %c96_i32_153 dim 1 : vector<32x128xf32>, i32 -> vector<32x128xf32>
      %c96_i32_154 = arith.constant 96 : i32
      %635 = tpu.dynamic_rotate %594 by %c96_i32_154 dim 1 : vector<32x128xf32>, i32 -> vector<32x128xf32>
      %636 = arith.select %2, %634, %635 : vector<32x128xi1>, vector<32x128xf32>
      %637 = vector.extract_strided_slice %110 {offsets = [59, 0], sizes = [1, 128], strides = [1, 1]} : vector<81x128xf32> to vector<1x128xf32>
      %638 = vector.shape_cast %637 : vector<1x128xf32> to vector<128xf32>
      %639 = vector.shape_cast %638 : vector<128xf32> to vector<1x128xf32>
      %640 = vector.broadcast %639 : vector<1x128xf32> to vector<32x128xf32>
      %641 = arith.mulf %636, %640 : vector<32x128xf32>
      %642 = arith.addf %633, %641 : vector<32x128xf32>
      %c64_i32_155 = arith.constant 64 : i32
      %643 = tpu.dynamic_rotate %592 by %c64_i32_155 dim 1 : vector<32x128xf32>, i32 -> vector<32x128xf32>
      %c64_i32_156 = arith.constant 64 : i32
      %644 = tpu.dynamic_rotate %594 by %c64_i32_156 dim 1 : vector<32x128xf32>, i32 -> vector<32x128xf32>
      %645 = arith.select %4, %643, %644 : vector<32x128xi1>, vector<32x128xf32>
      %646 = vector.extract_strided_slice %110 {offsets = [60, 0], sizes = [1, 128], strides = [1, 1]} : vector<81x128xf32> to vector<1x128xf32>
      %647 = vector.shape_cast %646 : vector<1x128xf32> to vector<128xf32>
      %648 = vector.shape_cast %647 : vector<128xf32> to vector<1x128xf32>
      %649 = vector.broadcast %648 : vector<1x128xf32> to vector<32x128xf32>
      %650 = arith.mulf %645, %649 : vector<32x128xf32>
      %651 = arith.addf %642, %650 : vector<32x128xf32>
      %c32_i32_157 = arith.constant 32 : i32
      %652 = tpu.dynamic_rotate %592 by %c32_i32_157 dim 1 : vector<32x128xf32>, i32 -> vector<32x128xf32>
      %c32_i32_158 = arith.constant 32 : i32
      %653 = tpu.dynamic_rotate %594 by %c32_i32_158 dim 1 : vector<32x128xf32>, i32 -> vector<32x128xf32>
      %654 = arith.select %6, %652, %653 : vector<32x128xi1>, vector<32x128xf32>
      %655 = vector.extract_strided_slice %110 {offsets = [61, 0], sizes = [1, 128], strides = [1, 1]} : vector<81x128xf32> to vector<1x128xf32>
      %656 = vector.shape_cast %655 : vector<1x128xf32> to vector<128xf32>
      %657 = vector.shape_cast %656 : vector<128xf32> to vector<1x128xf32>
      %658 = vector.broadcast %657 : vector<1x128xf32> to vector<32x128xf32>
      %659 = arith.mulf %654, %658 : vector<32x128xf32>
      %660 = arith.addf %651, %659 : vector<32x128xf32>
      %661 = vector.extract_strided_slice %110 {offsets = [62, 0], sizes = [1, 128], strides = [1, 1]} : vector<81x128xf32> to vector<1x128xf32>
      %662 = vector.shape_cast %661 : vector<1x128xf32> to vector<128xf32>
      %663 = vector.shape_cast %662 : vector<128xf32> to vector<1x128xf32>
      %664 = vector.broadcast %663 : vector<1x128xf32> to vector<32x128xf32>
      %665 = arith.mulf %594, %664 : vector<32x128xf32>
      %666 = arith.addf %660, %665 : vector<32x128xf32>
      %c0_159 = arith.constant 0 : index
      %c0_160 = arith.constant 0 : index
      %c11 = arith.constant 11 : index
      %c0_161 = arith.constant 0 : index
      %667 = vector.load %arg10[%c0_159, %c0_160, %c11, %c0_161] : memref<2x4x24x128xf32, #tpu.memory_space<vmem>>, vector<2x4x8x128xf32>
      %668 = vector.extract_strided_slice %667 {offsets = [0, 0, 0, 0], sizes = [2, 2, 8, 128], strides = [1, 1, 1, 1]} : vector<2x4x8x128xf32> to vector<2x2x8x128xf32>
      %669 = vector.shape_cast %668 : vector<2x2x8x128xf32> to vector<32x128xf32>
      %670 = vector.extract_strided_slice %667 {offsets = [0, 1, 0, 0], sizes = [2, 2, 8, 128], strides = [1, 1, 1, 1]} : vector<2x4x8x128xf32> to vector<2x2x8x128xf32>
      %671 = vector.shape_cast %670 : vector<2x2x8x128xf32> to vector<32x128xf32>
      %672 = vector.extract_strided_slice %667 {offsets = [0, 2, 0, 0], sizes = [2, 2, 8, 128], strides = [1, 1, 1, 1]} : vector<2x4x8x128xf32> to vector<2x2x8x128xf32>
      %673 = vector.shape_cast %672 : vector<2x2x8x128xf32> to vector<32x128xf32>
      %674 = vector.extract_strided_slice %110 {offsets = [63, 0], sizes = [1, 128], strides = [1, 1]} : vector<81x128xf32> to vector<1x128xf32>
      %675 = vector.shape_cast %674 : vector<1x128xf32> to vector<128xf32>
      %676 = vector.shape_cast %675 : vector<128xf32> to vector<1x128xf32>
      %677 = vector.broadcast %676 : vector<1x128xf32> to vector<32x128xf32>
      %678 = arith.mulf %669, %677 : vector<32x128xf32>
      %679 = arith.addf %508, %678 : vector<32x128xf32>
      %c96_i32_162 = arith.constant 96 : i32
      %680 = tpu.dynamic_rotate %669 by %c96_i32_162 dim 1 : vector<32x128xf32>, i32 -> vector<32x128xf32>
      %c96_i32_163 = arith.constant 96 : i32
      %681 = tpu.dynamic_rotate %671 by %c96_i32_163 dim 1 : vector<32x128xf32>, i32 -> vector<32x128xf32>
      %682 = arith.select %2, %680, %681 : vector<32x128xi1>, vector<32x128xf32>
      %683 = vector.extract_strided_slice %110 {offsets = [64, 0], sizes = [1, 128], strides = [1, 1]} : vector<81x128xf32> to vector<1x128xf32>
      %684 = vector.shape_cast %683 : vector<1x128xf32> to vector<128xf32>
      %685 = vector.shape_cast %684 : vector<128xf32> to vector<1x128xf32>
      %686 = vector.broadcast %685 : vector<1x128xf32> to vector<32x128xf32>
      %687 = arith.mulf %682, %686 : vector<32x128xf32>
      %688 = arith.addf %679, %687 : vector<32x128xf32>
      %c64_i32_164 = arith.constant 64 : i32
      %689 = tpu.dynamic_rotate %669 by %c64_i32_164 dim 1 : vector<32x128xf32>, i32 -> vector<32x128xf32>
      %c64_i32_165 = arith.constant 64 : i32
      %690 = tpu.dynamic_rotate %671 by %c64_i32_165 dim 1 : vector<32x128xf32>, i32 -> vector<32x128xf32>
      %691 = arith.select %4, %689, %690 : vector<32x128xi1>, vector<32x128xf32>
      %692 = vector.extract_strided_slice %110 {offsets = [65, 0], sizes = [1, 128], strides = [1, 1]} : vector<81x128xf32> to vector<1x128xf32>
      %693 = vector.shape_cast %692 : vector<1x128xf32> to vector<128xf32>
      %694 = vector.shape_cast %693 : vector<128xf32> to vector<1x128xf32>
      %695 = vector.broadcast %694 : vector<1x128xf32> to vector<32x128xf32>
      %696 = arith.mulf %691, %695 : vector<32x128xf32>
      %697 = arith.addf %688, %696 : vector<32x128xf32>
      %c32_i32_166 = arith.constant 32 : i32
      %698 = tpu.dynamic_rotate %669 by %c32_i32_166 dim 1 : vector<32x128xf32>, i32 -> vector<32x128xf32>
      %c32_i32_167 = arith.constant 32 : i32
      %699 = tpu.dynamic_rotate %671 by %c32_i32_167 dim 1 : vector<32x128xf32>, i32 -> vector<32x128xf32>
      %700 = arith.select %6, %698, %699 : vector<32x128xi1>, vector<32x128xf32>
      %701 = vector.extract_strided_slice %110 {offsets = [66, 0], sizes = [1, 128], strides = [1, 1]} : vector<81x128xf32> to vector<1x128xf32>
      %702 = vector.shape_cast %701 : vector<1x128xf32> to vector<128xf32>
      %703 = vector.shape_cast %702 : vector<128xf32> to vector<1x128xf32>
      %704 = vector.broadcast %703 : vector<1x128xf32> to vector<32x128xf32>
      %705 = arith.mulf %700, %704 : vector<32x128xf32>
      %706 = arith.addf %697, %705 : vector<32x128xf32>
      %707 = vector.extract_strided_slice %110 {offsets = [67, 0], sizes = [1, 128], strides = [1, 1]} : vector<81x128xf32> to vector<1x128xf32>
      %708 = vector.shape_cast %707 : vector<1x128xf32> to vector<128xf32>
      %709 = vector.shape_cast %708 : vector<128xf32> to vector<1x128xf32>
      %710 = vector.broadcast %709 : vector<1x128xf32> to vector<32x128xf32>
      %711 = arith.mulf %671, %710 : vector<32x128xf32>
      %712 = arith.addf %706, %711 : vector<32x128xf32>
      %c96_i32_168 = arith.constant 96 : i32
      %713 = tpu.dynamic_rotate %671 by %c96_i32_168 dim 1 : vector<32x128xf32>, i32 -> vector<32x128xf32>
      %c96_i32_169 = arith.constant 96 : i32
      %714 = tpu.dynamic_rotate %673 by %c96_i32_169 dim 1 : vector<32x128xf32>, i32 -> vector<32x128xf32>
      %715 = arith.select %2, %713, %714 : vector<32x128xi1>, vector<32x128xf32>
      %716 = vector.extract_strided_slice %110 {offsets = [68, 0], sizes = [1, 128], strides = [1, 1]} : vector<81x128xf32> to vector<1x128xf32>
      %717 = vector.shape_cast %716 : vector<1x128xf32> to vector<128xf32>
      %718 = vector.shape_cast %717 : vector<128xf32> to vector<1x128xf32>
      %719 = vector.broadcast %718 : vector<1x128xf32> to vector<32x128xf32>
      %720 = arith.mulf %715, %719 : vector<32x128xf32>
      %721 = arith.addf %712, %720 : vector<32x128xf32>
      %c64_i32_170 = arith.constant 64 : i32
      %722 = tpu.dynamic_rotate %671 by %c64_i32_170 dim 1 : vector<32x128xf32>, i32 -> vector<32x128xf32>
      %c64_i32_171 = arith.constant 64 : i32
      %723 = tpu.dynamic_rotate %673 by %c64_i32_171 dim 1 : vector<32x128xf32>, i32 -> vector<32x128xf32>
      %724 = arith.select %4, %722, %723 : vector<32x128xi1>, vector<32x128xf32>
      %725 = vector.extract_strided_slice %110 {offsets = [69, 0], sizes = [1, 128], strides = [1, 1]} : vector<81x128xf32> to vector<1x128xf32>
      %726 = vector.shape_cast %725 : vector<1x128xf32> to vector<128xf32>
      %727 = vector.shape_cast %726 : vector<128xf32> to vector<1x128xf32>
      %728 = vector.broadcast %727 : vector<1x128xf32> to vector<32x128xf32>
      %729 = arith.mulf %724, %728 : vector<32x128xf32>
      %730 = arith.addf %721, %729 : vector<32x128xf32>
      %c32_i32_172 = arith.constant 32 : i32
      %731 = tpu.dynamic_rotate %671 by %c32_i32_172 dim 1 : vector<32x128xf32>, i32 -> vector<32x128xf32>
      %c32_i32_173 = arith.constant 32 : i32
      %732 = tpu.dynamic_rotate %673 by %c32_i32_173 dim 1 : vector<32x128xf32>, i32 -> vector<32x128xf32>
      %733 = arith.select %6, %731, %732 : vector<32x128xi1>, vector<32x128xf32>
      %734 = vector.extract_strided_slice %110 {offsets = [70, 0], sizes = [1, 128], strides = [1, 1]} : vector<81x128xf32> to vector<1x128xf32>
      %735 = vector.shape_cast %734 : vector<1x128xf32> to vector<128xf32>
      %736 = vector.shape_cast %735 : vector<128xf32> to vector<1x128xf32>
      %737 = vector.broadcast %736 : vector<1x128xf32> to vector<32x128xf32>
      %738 = arith.mulf %733, %737 : vector<32x128xf32>
      %739 = arith.addf %730, %738 : vector<32x128xf32>
      %740 = vector.extract_strided_slice %110 {offsets = [71, 0], sizes = [1, 128], strides = [1, 1]} : vector<81x128xf32> to vector<1x128xf32>
      %741 = vector.shape_cast %740 : vector<1x128xf32> to vector<128xf32>
      %742 = vector.shape_cast %741 : vector<128xf32> to vector<1x128xf32>
      %743 = vector.broadcast %742 : vector<1x128xf32> to vector<32x128xf32>
      %744 = arith.mulf %673, %743 : vector<32x128xf32>
      %745 = arith.addf %739, %744 : vector<32x128xf32>
      %c0_174 = arith.constant 0 : index
      %c0_175 = arith.constant 0 : index
      %c12 = arith.constant 12 : index
      %c0_176 = arith.constant 0 : index
      %746 = vector.load %arg10[%c0_174, %c0_175, %c12, %c0_176] : memref<2x4x24x128xf32, #tpu.memory_space<vmem>>, vector<2x4x8x128xf32>
      %747 = vector.extract_strided_slice %746 {offsets = [0, 0, 0, 0], sizes = [2, 2, 8, 128], strides = [1, 1, 1, 1]} : vector<2x4x8x128xf32> to vector<2x2x8x128xf32>
      %748 = vector.shape_cast %747 : vector<2x2x8x128xf32> to vector<32x128xf32>
      %749 = vector.extract_strided_slice %746 {offsets = [0, 1, 0, 0], sizes = [2, 2, 8, 128], strides = [1, 1, 1, 1]} : vector<2x4x8x128xf32> to vector<2x2x8x128xf32>
      %750 = vector.shape_cast %749 : vector<2x2x8x128xf32> to vector<32x128xf32>
      %751 = vector.extract_strided_slice %746 {offsets = [0, 2, 0, 0], sizes = [2, 2, 8, 128], strides = [1, 1, 1, 1]} : vector<2x4x8x128xf32> to vector<2x2x8x128xf32>
      %752 = vector.shape_cast %751 : vector<2x2x8x128xf32> to vector<32x128xf32>
      %753 = vector.extract_strided_slice %110 {offsets = [72, 0], sizes = [1, 128], strides = [1, 1]} : vector<81x128xf32> to vector<1x128xf32>
      %754 = vector.shape_cast %753 : vector<1x128xf32> to vector<128xf32>
      %755 = vector.shape_cast %754 : vector<128xf32> to vector<1x128xf32>
      %756 = vector.broadcast %755 : vector<1x128xf32> to vector<32x128xf32>
      %757 = arith.mulf %748, %756 : vector<32x128xf32>
      %758 = arith.addf %587, %757 : vector<32x128xf32>
      %c96_i32_177 = arith.constant 96 : i32
      %759 = tpu.dynamic_rotate %748 by %c96_i32_177 dim 1 : vector<32x128xf32>, i32 -> vector<32x128xf32>
      %c96_i32_178 = arith.constant 96 : i32
      %760 = tpu.dynamic_rotate %750 by %c96_i32_178 dim 1 : vector<32x128xf32>, i32 -> vector<32x128xf32>
      %761 = arith.select %2, %759, %760 : vector<32x128xi1>, vector<32x128xf32>
      %762 = vector.extract_strided_slice %110 {offsets = [73, 0], sizes = [1, 128], strides = [1, 1]} : vector<81x128xf32> to vector<1x128xf32>
      %763 = vector.shape_cast %762 : vector<1x128xf32> to vector<128xf32>
      %764 = vector.shape_cast %763 : vector<128xf32> to vector<1x128xf32>
      %765 = vector.broadcast %764 : vector<1x128xf32> to vector<32x128xf32>
      %766 = arith.mulf %761, %765 : vector<32x128xf32>
      %767 = arith.addf %758, %766 : vector<32x128xf32>
      %c64_i32_179 = arith.constant 64 : i32
      %768 = tpu.dynamic_rotate %748 by %c64_i32_179 dim 1 : vector<32x128xf32>, i32 -> vector<32x128xf32>
      %c64_i32_180 = arith.constant 64 : i32
      %769 = tpu.dynamic_rotate %750 by %c64_i32_180 dim 1 : vector<32x128xf32>, i32 -> vector<32x128xf32>
      %770 = arith.select %4, %768, %769 : vector<32x128xi1>, vector<32x128xf32>
      %771 = vector.extract_strided_slice %110 {offsets = [74, 0], sizes = [1, 128], strides = [1, 1]} : vector<81x128xf32> to vector<1x128xf32>
      %772 = vector.shape_cast %771 : vector<1x128xf32> to vector<128xf32>
      %773 = vector.shape_cast %772 : vector<128xf32> to vector<1x128xf32>
      %774 = vector.broadcast %773 : vector<1x128xf32> to vector<32x128xf32>
      %775 = arith.mulf %770, %774 : vector<32x128xf32>
      %776 = arith.addf %767, %775 : vector<32x128xf32>
      %c32_i32_181 = arith.constant 32 : i32
      %777 = tpu.dynamic_rotate %748 by %c32_i32_181 dim 1 : vector<32x128xf32>, i32 -> vector<32x128xf32>
      %c32_i32_182 = arith.constant 32 : i32
      %778 = tpu.dynamic_rotate %750 by %c32_i32_182 dim 1 : vector<32x128xf32>, i32 -> vector<32x128xf32>
      %779 = arith.select %6, %777, %778 : vector<32x128xi1>, vector<32x128xf32>
      %780 = vector.extract_strided_slice %110 {offsets = [75, 0], sizes = [1, 128], strides = [1, 1]} : vector<81x128xf32> to vector<1x128xf32>
      %781 = vector.shape_cast %780 : vector<1x128xf32> to vector<128xf32>
      %782 = vector.shape_cast %781 : vector<128xf32> to vector<1x128xf32>
      %783 = vector.broadcast %782 : vector<1x128xf32> to vector<32x128xf32>
      %784 = arith.mulf %779, %783 : vector<32x128xf32>
      %785 = arith.addf %776, %784 : vector<32x128xf32>
      %786 = vector.extract_strided_slice %110 {offsets = [76, 0], sizes = [1, 128], strides = [1, 1]} : vector<81x128xf32> to vector<1x128xf32>
      %787 = vector.shape_cast %786 : vector<1x128xf32> to vector<128xf32>
      %788 = vector.shape_cast %787 : vector<128xf32> to vector<1x128xf32>
      %789 = vector.broadcast %788 : vector<1x128xf32> to vector<32x128xf32>
      %790 = arith.mulf %750, %789 : vector<32x128xf32>
      %791 = arith.addf %785, %790 : vector<32x128xf32>
      %c96_i32_183 = arith.constant 96 : i32
      %792 = tpu.dynamic_rotate %750 by %c96_i32_183 dim 1 : vector<32x128xf32>, i32 -> vector<32x128xf32>
      %c96_i32_184 = arith.constant 96 : i32
      %793 = tpu.dynamic_rotate %752 by %c96_i32_184 dim 1 : vector<32x128xf32>, i32 -> vector<32x128xf32>
      %794 = arith.select %2, %792, %793 : vector<32x128xi1>, vector<32x128xf32>
      %795 = vector.extract_strided_slice %110 {offsets = [77, 0], sizes = [1, 128], strides = [1, 1]} : vector<81x128xf32> to vector<1x128xf32>
      %796 = vector.shape_cast %795 : vector<1x128xf32> to vector<128xf32>
      %797 = vector.shape_cast %796 : vector<128xf32> to vector<1x128xf32>
      %798 = vector.broadcast %797 : vector<1x128xf32> to vector<32x128xf32>
      %799 = arith.mulf %794, %798 : vector<32x128xf32>
      %800 = arith.addf %791, %799 : vector<32x128xf32>
      %c64_i32_185 = arith.constant 64 : i32
      %801 = tpu.dynamic_rotate %750 by %c64_i32_185 dim 1 : vector<32x128xf32>, i32 -> vector<32x128xf32>
      %c64_i32_186 = arith.constant 64 : i32
      %802 = tpu.dynamic_rotate %752 by %c64_i32_186 dim 1 : vector<32x128xf32>, i32 -> vector<32x128xf32>
      %803 = arith.select %4, %801, %802 : vector<32x128xi1>, vector<32x128xf32>
      %804 = vector.extract_strided_slice %110 {offsets = [78, 0], sizes = [1, 128], strides = [1, 1]} : vector<81x128xf32> to vector<1x128xf32>
      %805 = vector.shape_cast %804 : vector<1x128xf32> to vector<128xf32>
      %806 = vector.shape_cast %805 : vector<128xf32> to vector<1x128xf32>
      %807 = vector.broadcast %806 : vector<1x128xf32> to vector<32x128xf32>
      %808 = arith.mulf %803, %807 : vector<32x128xf32>
      %809 = arith.addf %800, %808 : vector<32x128xf32>
      %c32_i32_187 = arith.constant 32 : i32
      %810 = tpu.dynamic_rotate %750 by %c32_i32_187 dim 1 : vector<32x128xf32>, i32 -> vector<32x128xf32>
      %c32_i32_188 = arith.constant 32 : i32
      %811 = tpu.dynamic_rotate %752 by %c32_i32_188 dim 1 : vector<32x128xf32>, i32 -> vector<32x128xf32>
      %812 = arith.select %6, %810, %811 : vector<32x128xi1>, vector<32x128xf32>
      %813 = vector.extract_strided_slice %110 {offsets = [79, 0], sizes = [1, 128], strides = [1, 1]} : vector<81x128xf32> to vector<1x128xf32>
      %814 = vector.shape_cast %813 : vector<1x128xf32> to vector<128xf32>
      %815 = vector.shape_cast %814 : vector<128xf32> to vector<1x128xf32>
      %816 = vector.broadcast %815 : vector<1x128xf32> to vector<32x128xf32>
      %817 = arith.mulf %812, %816 : vector<32x128xf32>
      %818 = arith.addf %809, %817 : vector<32x128xf32>
      %819 = vector.extract_strided_slice %110 {offsets = [80, 0], sizes = [1, 128], strides = [1, 1]} : vector<81x128xf32> to vector<1x128xf32>
      %820 = vector.shape_cast %819 : vector<1x128xf32> to vector<128xf32>
      %821 = vector.shape_cast %820 : vector<128xf32> to vector<1x128xf32>
      %822 = vector.broadcast %821 : vector<1x128xf32> to vector<32x128xf32>
      %823 = arith.mulf %752, %822 : vector<32x128xf32>
      %824 = arith.addf %818, %823 : vector<32x128xf32>
      %825 = arith.addf %666, %745 : vector<32x128xf32>
      %826 = arith.addf %825, %824 : vector<32x128xf32>
      %827 = vector.extract_strided_slice %113 {offsets = [0, 0], sizes = [1, 128], strides = [1, 1]} : vector<8x128xf32> to vector<1x128xf32>
      %828 = vector.shape_cast %827 : vector<1x128xf32> to vector<128xf32>
      %829 = vector.shape_cast %828 : vector<128xf32> to vector<1x128xf32>
      %830 = vector.broadcast %829 : vector<1x128xf32> to vector<32x128xf32>
      %831 = arith.addf %826, %830 : vector<32x128xf32>
      %cst_189 = arith.constant 5.000000e-01 : f32
      %832 = vector.broadcast %cst_189 : f32 to vector<32x128xf32>
      %833 = arith.mulf %832, %831 : vector<32x128xf32>
      %cst_190 = arith.constant 0.707106769 : f32
      %834 = vector.broadcast %cst_190 : f32 to vector<32x128xf32>
      %835 = arith.mulf %831, %834 : vector<32x128xf32>
      %836 = math.absf %835 : vector<32x128xf32>
      %cst_191 = arith.constant 0.327591091 : f32
      %837 = vector.broadcast %cst_191 : f32 to vector<32x128xf32>
      %838 = arith.mulf %837, %836 : vector<32x128xf32>
      %cst_192 = arith.constant 1.000000e+00 : f32
      %839 = vector.broadcast %cst_192 : f32 to vector<32x128xf32>
      %840 = arith.addf %839, %838 : vector<32x128xf32>
      %841 = tpu.reciprocal %840 {approx = true} : vector<32x128xf32> -> vector<32x128xf32>
      %842 = arith.mulf %840, %841 : vector<32x128xf32>
      %cst_193 = arith.constant 2.000000e+00 : f32
      %843 = vector.broadcast %cst_193 : f32 to vector<32x128xf32>
      %844 = arith.subf %843, %842 : vector<32x128xf32>
      %845 = arith.mulf %841, %844 : vector<32x128xf32>
      %cst_194 = arith.constant 1.06140542 : f32
      %846 = vector.broadcast %cst_194 : f32 to vector<32x128xf32>
      %847 = arith.mulf %845, %846 : vector<32x128xf32>
      %cst_195 = arith.constant -1.45315206 : f32
      %848 = vector.broadcast %cst_195 : f32 to vector<32x128xf32>
      %849 = arith.addf %848, %847 : vector<32x128xf32>
      %850 = arith.mulf %845, %849 : vector<32x128xf32>
      %cst_196 = arith.constant 1.42141378 : f32
      %851 = vector.broadcast %cst_196 : f32 to vector<32x128xf32>
      %852 = arith.addf %851, %850 : vector<32x128xf32>
      %853 = arith.mulf %845, %852 : vector<32x128xf32>
      %cst_197 = arith.constant -0.284496725 : f32
      %854 = vector.broadcast %cst_197 : f32 to vector<32x128xf32>
      %855 = arith.addf %854, %853 : vector<32x128xf32>
      %856 = arith.mulf %845, %855 : vector<32x128xf32>
      %cst_198 = arith.constant 0.254829586 : f32
      %857 = vector.broadcast %cst_198 : f32 to vector<32x128xf32>
      %858 = arith.addf %857, %856 : vector<32x128xf32>
      %859 = arith.mulf %845, %858 : vector<32x128xf32>
      %cst_199 = arith.constant 0.000000e+00 : f32
      %860 = vector.broadcast %cst_199 : f32 to vector<32x128xf32>
      %861 = arith.subf %860, %836 : vector<32x128xf32>
      %862 = arith.mulf %861, %836 : vector<32x128xf32>
      %863 = math.exp %862 : vector<32x128xf32>
      %864 = arith.mulf %859, %863 : vector<32x128xf32>
      %cst_200 = arith.constant 1.000000e+00 : f32
      %865 = vector.broadcast %cst_200 : f32 to vector<32x128xf32>
      %866 = arith.subf %865, %864 : vector<32x128xf32>
      %cst_201 = arith.constant 0.000000e+00 : f32
      %867 = vector.broadcast %cst_201 : f32 to vector<32x128xf32>
      %868 = arith.cmpf olt, %835, %867 : vector<32x128xf32>
      %cst_202 = arith.constant 0.000000e+00 : f32
      %869 = vector.broadcast %cst_202 : f32 to vector<32x128xf32>
      %870 = arith.subf %869, %866 : vector<32x128xf32>
      %871 = arith.select %868, %870, %866 : vector<32x128xi1>, vector<32x128xf32>
      %cst_203 = arith.constant 1.000000e+00 : f32
      %872 = vector.broadcast %cst_203 : f32 to vector<32x128xf32>
      %873 = arith.addf %872, %871 : vector<32x128xf32>
      %874 = arith.mulf %833, %873 : vector<32x128xf32>
      %875 = vector.extract_strided_slice %113 {offsets = [1, 0], sizes = [1, 128], strides = [1, 1]} : vector<8x128xf32> to vector<1x128xf32>
      %876 = vector.shape_cast %875 : vector<1x128xf32> to vector<128xf32>
      %877 = vector.extract_strided_slice %113 {offsets = [2, 0], sizes = [1, 128], strides = [1, 1]} : vector<8x128xf32> to vector<1x128xf32>
      %878 = vector.shape_cast %877 : vector<1x128xf32> to vector<128xf32>
      %cst_204 = arith.constant dense<0.000000e+00> : vector<128xf32>
      %879 = vector.multi_reduction <add>, %874, %cst_204 [0] : vector<32x128xf32> to vector<128xf32>
      %880 = vector.shape_cast %879 : vector<128xf32> to vector<1x128xf32>
      %c64_i32_205 = arith.constant 64 : i32
      %881 = tpu.dynamic_rotate %880 by %c64_i32_205 dim 1 : vector<1x128xf32>, i32 -> vector<1x128xf32>
      %882 = arith.addf %880, %881 : vector<1x128xf32>
      %c32_i32_206 = arith.constant 32 : i32
      %883 = tpu.dynamic_rotate %882 by %c32_i32_206 dim 1 : vector<1x128xf32>, i32 -> vector<1x128xf32>
      %884 = arith.addf %882, %883 : vector<1x128xf32>
      %cst_207 = arith.constant 7.812500e-03 : f32
      %885 = vector.broadcast %cst_207 : f32 to vector<1x128xf32>
      %886 = arith.mulf %884, %885 : vector<1x128xf32>
      %887 = vector.broadcast %886 : vector<1x128xf32> to vector<32x128xf32>
      %888 = arith.subf %874, %887 : vector<32x128xf32>
      %889 = arith.mulf %888, %888 : vector<32x128xf32>
      %cst_208 = arith.constant dense<0.000000e+00> : vector<128xf32>
      %890 = vector.multi_reduction <add>, %889, %cst_208 [0] : vector<32x128xf32> to vector<128xf32>
      %891 = vector.shape_cast %890 : vector<128xf32> to vector<1x128xf32>
      %c64_i32_209 = arith.constant 64 : i32
      %892 = tpu.dynamic_rotate %891 by %c64_i32_209 dim 1 : vector<1x128xf32>, i32 -> vector<1x128xf32>
      %893 = arith.addf %891, %892 : vector<1x128xf32>
      %c32_i32_210 = arith.constant 32 : i32
      %894 = tpu.dynamic_rotate %893 by %c32_i32_210 dim 1 : vector<1x128xf32>, i32 -> vector<1x128xf32>
      %895 = arith.addf %893, %894 : vector<1x128xf32>
      %cst_211 = arith.constant 7.812500e-03 : f32
      %896 = vector.broadcast %cst_211 : f32 to vector<1x128xf32>
      %897 = arith.mulf %895, %896 : vector<1x128xf32>
      %cst_212 = arith.constant 9.99999974E-6 : f32
      %898 = vector.broadcast %cst_212 : f32 to vector<1x128xf32>
      %899 = arith.addf %897, %898 : vector<1x128xf32>
      %900 = math.rsqrt %899 : vector<1x128xf32>
      %901 = vector.shape_cast %876 : vector<128xf32> to vector<1x128xf32>
      %902 = arith.mulf %900, %901 : vector<1x128xf32>
      %903 = vector.broadcast %902 : vector<1x128xf32> to vector<32x128xf32>
      %904 = arith.mulf %888, %903 : vector<32x128xf32>
      %905 = vector.shape_cast %878 : vector<128xf32> to vector<1x128xf32>
      %906 = vector.broadcast %905 : vector<1x128xf32> to vector<32x128xf32>
      %907 = arith.addf %904, %906 : vector<32x128xf32>
      %908 = arith.addf %arg12, %907 : vector<32x128xf32>
      %cst_213 = arith.constant dense<0.000000e+00> : vector<32x128xf32>
      %909 = tpu.matmul %908, %116, %cst_213 {dimension_numbers = #tpu.dot_dimension_numbers<[1], [0], [0], [1], [0, 0, 1, 1], [], []>, precision = #tpu.contract_precision<fp32>} : vector<32x128xf32>, vector<128x128xf32>, vector<32x128xf32> -> vector<32x128xf32>
      %910 = vector.extract_strided_slice %113 {offsets = [3, 0], sizes = [1, 128], strides = [1, 1]} : vector<8x128xf32> to vector<1x128xf32>
      %911 = vector.shape_cast %910 : vector<1x128xf32> to vector<128xf32>
      %912 = vector.shape_cast %911 : vector<128xf32> to vector<1x128xf32>
      %913 = vector.broadcast %912 : vector<1x128xf32> to vector<32x128xf32>
      %914 = arith.addf %909, %913 : vector<32x128xf32>
      %cst_214 = arith.constant 5.000000e-01 : f32
      %915 = vector.broadcast %cst_214 : f32 to vector<32x128xf32>
      %916 = arith.mulf %915, %914 : vector<32x128xf32>
      %cst_215 = arith.constant 0.707106769 : f32
      %917 = vector.broadcast %cst_215 : f32 to vector<32x128xf32>
      %918 = arith.mulf %914, %917 : vector<32x128xf32>
      %919 = math.absf %918 : vector<32x128xf32>
      %cst_216 = arith.constant 0.327591091 : f32
      %920 = vector.broadcast %cst_216 : f32 to vector<32x128xf32>
      %921 = arith.mulf %920, %919 : vector<32x128xf32>
      %cst_217 = arith.constant 1.000000e+00 : f32
      %922 = vector.broadcast %cst_217 : f32 to vector<32x128xf32>
      %923 = arith.addf %922, %921 : vector<32x128xf32>
      %924 = tpu.reciprocal %923 {approx = true} : vector<32x128xf32> -> vector<32x128xf32>
      %925 = arith.mulf %923, %924 : vector<32x128xf32>
      %cst_218 = arith.constant 2.000000e+00 : f32
      %926 = vector.broadcast %cst_218 : f32 to vector<32x128xf32>
      %927 = arith.subf %926, %925 : vector<32x128xf32>
      %928 = arith.mulf %924, %927 : vector<32x128xf32>
      %cst_219 = arith.constant 1.06140542 : f32
      %929 = vector.broadcast %cst_219 : f32 to vector<32x128xf32>
      %930 = arith.mulf %928, %929 : vector<32x128xf32>
      %cst_220 = arith.constant -1.45315206 : f32
      %931 = vector.broadcast %cst_220 : f32 to vector<32x128xf32>
      %932 = arith.addf %931, %930 : vector<32x128xf32>
      %933 = arith.mulf %928, %932 : vector<32x128xf32>
      %cst_221 = arith.constant 1.42141378 : f32
      %934 = vector.broadcast %cst_221 : f32 to vector<32x128xf32>
      %935 = arith.addf %934, %933 : vector<32x128xf32>
      %936 = arith.mulf %928, %935 : vector<32x128xf32>
      %cst_222 = arith.constant -0.284496725 : f32
      %937 = vector.broadcast %cst_222 : f32 to vector<32x128xf32>
      %938 = arith.addf %937, %936 : vector<32x128xf32>
      %939 = arith.mulf %928, %938 : vector<32x128xf32>
      %cst_223 = arith.constant 0.254829586 : f32
      %940 = vector.broadcast %cst_223 : f32 to vector<32x128xf32>
      %941 = arith.addf %940, %939 : vector<32x128xf32>
      %942 = arith.mulf %928, %941 : vector<32x128xf32>
      %cst_224 = arith.constant 0.000000e+00 : f32
      %943 = vector.broadcast %cst_224 : f32 to vector<32x128xf32>
      %944 = arith.subf %943, %919 : vector<32x128xf32>
      %945 = arith.mulf %944, %919 : vector<32x128xf32>
      %946 = math.exp %945 : vector<32x128xf32>
      %947 = arith.mulf %942, %946 : vector<32x128xf32>
      %cst_225 = arith.constant 1.000000e+00 : f32
      %948 = vector.broadcast %cst_225 : f32 to vector<32x128xf32>
      %949 = arith.subf %948, %947 : vector<32x128xf32>
      %cst_226 = arith.constant 0.000000e+00 : f32
      %950 = vector.broadcast %cst_226 : f32 to vector<32x128xf32>
      %951 = arith.cmpf olt, %918, %950 : vector<32x128xf32>
      %cst_227 = arith.constant 0.000000e+00 : f32
      %952 = vector.broadcast %cst_227 : f32 to vector<32x128xf32>
      %953 = arith.subf %952, %949 : vector<32x128xf32>
      %954 = arith.select %951, %953, %949 : vector<32x128xi1>, vector<32x128xf32>
      %cst_228 = arith.constant 1.000000e+00 : f32
      %955 = vector.broadcast %cst_228 : f32 to vector<32x128xf32>
      %956 = arith.addf %955, %954 : vector<32x128xf32>
      %957 = arith.mulf %916, %956 : vector<32x128xf32>
      %958 = vector.extract_strided_slice %113 {offsets = [4, 0], sizes = [1, 128], strides = [1, 1]} : vector<8x128xf32> to vector<1x128xf32>
      %959 = vector.shape_cast %958 : vector<1x128xf32> to vector<128xf32>
      %960 = vector.extract_strided_slice %113 {offsets = [5, 0], sizes = [1, 128], strides = [1, 1]} : vector<8x128xf32> to vector<1x128xf32>
      %961 = vector.shape_cast %960 : vector<1x128xf32> to vector<128xf32>
      %cst_229 = arith.constant dense<0.000000e+00> : vector<128xf32>
      %962 = vector.multi_reduction <add>, %957, %cst_229 [0] : vector<32x128xf32> to vector<128xf32>
      %963 = vector.shape_cast %962 : vector<128xf32> to vector<1x128xf32>
      %c64_i32_230 = arith.constant 64 : i32
      %964 = tpu.dynamic_rotate %963 by %c64_i32_230 dim 1 : vector<1x128xf32>, i32 -> vector<1x128xf32>
      %965 = arith.addf %963, %964 : vector<1x128xf32>
      %c32_i32_231 = arith.constant 32 : i32
      %966 = tpu.dynamic_rotate %965 by %c32_i32_231 dim 1 : vector<1x128xf32>, i32 -> vector<1x128xf32>
      %967 = arith.addf %965, %966 : vector<1x128xf32>
      %cst_232 = arith.constant 7.812500e-03 : f32
      %968 = vector.broadcast %cst_232 : f32 to vector<1x128xf32>
      %969 = arith.mulf %967, %968 : vector<1x128xf32>
      %970 = vector.broadcast %969 : vector<1x128xf32> to vector<32x128xf32>
      %971 = arith.subf %957, %970 : vector<32x128xf32>
      %972 = arith.mulf %971, %971 : vector<32x128xf32>
      %cst_233 = arith.constant dense<0.000000e+00> : vector<128xf32>
      %973 = vector.multi_reduction <add>, %972, %cst_233 [0] : vector<32x128xf32> to vector<128xf32>
      %974 = vector.shape_cast %973 : vector<128xf32> to vector<1x128xf32>
      %c64_i32_234 = arith.constant 64 : i32
      %975 = tpu.dynamic_rotate %974 by %c64_i32_234 dim 1 : vector<1x128xf32>, i32 -> vector<1x128xf32>
      %976 = arith.addf %974, %975 : vector<1x128xf32>
      %c32_i32_235 = arith.constant 32 : i32
      %977 = tpu.dynamic_rotate %976 by %c32_i32_235 dim 1 : vector<1x128xf32>, i32 -> vector<1x128xf32>
      %978 = arith.addf %976, %977 : vector<1x128xf32>
      %cst_236 = arith.constant 7.812500e-03 : f32
      %979 = vector.broadcast %cst_236 : f32 to vector<1x128xf32>
      %980 = arith.mulf %978, %979 : vector<1x128xf32>
      %cst_237 = arith.constant 9.99999974E-6 : f32
      %981 = vector.broadcast %cst_237 : f32 to vector<1x128xf32>
      %982 = arith.addf %980, %981 : vector<1x128xf32>
      %983 = math.rsqrt %982 : vector<1x128xf32>
      %984 = vector.shape_cast %959 : vector<128xf32> to vector<1x128xf32>
      %985 = arith.mulf %983, %984 : vector<1x128xf32>
      %986 = vector.broadcast %985 : vector<1x128xf32> to vector<32x128xf32>
      %987 = arith.mulf %971, %986 : vector<32x128xf32>
      %988 = vector.shape_cast %961 : vector<128xf32> to vector<1x128xf32>
      %989 = vector.broadcast %988 : vector<1x128xf32> to vector<32x128xf32>
      %990 = arith.addf %987, %989 : vector<32x128xf32>
      scf.yield %990 : vector<32x128xf32>
    }
    %c32_i32_35 = arith.constant 32 : i32
    %96 = vector.shape_cast %95 : vector<32x128xf32> to vector<2x16x128xf32>
    %cst_36 = arith.constant dense<0.000000e+00> : vector<2x128xf32>
    %97 = vector.multi_reduction <add>, %96, %cst_36 [1] : vector<2x16x128xf32> to vector<2x128xf32>
    %cst_37 = arith.constant 6.250000e-02 : f32
    %98 = vector.broadcast %cst_37 : f32 to vector<2x128xf32>
    %99 = arith.mulf %97, %98 : vector<2x128xf32>
    %c0_38 = arith.constant 0 : index
    %c0_39 = arith.constant 0 : index
    %100 = vector.load %arg7[%c0_38, %c0_39] : memref<128x100xf32, #tpu.memory_space<vmem>>, vector<128x100xf32>
    %cst_40 = arith.constant dense<0.000000e+00> : vector<2x100xf32>
    %101 = tpu.matmul %99, %100, %cst_40 {dimension_numbers = #tpu.dot_dimension_numbers<[1], [0], [0], [1], [0, 0, 1, 1], [], []>} : vector<2x128xf32>, vector<128x100xf32>, vector<2x100xf32> -> vector<2x100xf32>
    %c0_41 = arith.constant 0 : index
    %c0_42 = arith.constant 0 : index
    %102 = vector.load %arg8[%c0_41, %c0_42] : memref<1x100xf32, #tpu.memory_space<vmem>>, vector<1x100xf32>
    %103 = vector.broadcast %102 : vector<1x100xf32> to vector<2x100xf32>
    %104 = arith.addf %101, %103 : vector<2x100xf32>
    %c0_43 = arith.constant 0 : index
    %c0_44 = arith.constant 0 : index
    %105 = vector.load %arg9[%c0_43, %c0_44] : memref<2x100xf32, #tpu.memory_space<vmem>>, vector<2x100xf32>
    tpu.vector_store %arg9[%c0_43, %c0_44], %104 {strides = array<i32>} : memref<2x100xf32, #tpu.memory_space<vmem>>, vector<2x100xf32>,
    return
  }
  func.func @transform_0(%arg0: i32) -> (i32, i32) {
    %c0_i32 = arith.constant 0 : i32
    %c0_i32_0 = arith.constant 0 : i32
    %c0_i32_1 = arith.constant 0 : i32
    return %c0_i32, %c0_i32_0 : i32, i32
  }
  func.func @transform_1(%arg0: i32) -> (i32, i32) {
    %c0_i32 = arith.constant 0 : i32
    %c0_i32_0 = arith.constant 0 : i32
    %c0_i32_1 = arith.constant 0 : i32
    return %c0_i32, %c0_i32_0 : i32, i32
  }
  func.func @transform_2(%arg0: i32) -> (i32, i32) {
    %c0_i32 = arith.constant 0 : i32
    %c0_i32_0 = arith.constant 0 : i32
    %c0_i32_1 = arith.constant 0 : i32
    return %c0_i32, %c0_i32_0 : i32, i32
  }
  func.func @transform_3(%arg0: i32) -> (i32, i32, i32) {
    %c0_i32 = arith.constant 0 : i32
    %c0_i32_0 = arith.constant 0 : i32
    %c0_i32_1 = arith.constant 0 : i32
    %c0_i32_2 = arith.constant 0 : i32
    return %c0_i32, %c0_i32_0, %c0_i32_1 : i32, i32, i32
  }
  func.func @transform_4(%arg0: i32) -> (i32, i32, i32) {
    %c0_i32 = arith.constant 0 : i32
    %c0_i32_0 = arith.constant 0 : i32
    %c0_i32_1 = arith.constant 0 : i32
    %c0_i32_2 = arith.constant 0 : i32
    return %c0_i32, %c0_i32_0, %c0_i32_1 : i32, i32, i32
  }
  func.func @transform_5(%arg0: i32) -> (i32, i32, i32) {
    %c0_i32 = arith.constant 0 : i32
    %c0_i32_0 = arith.constant 0 : i32
    %c0_i32_1 = arith.constant 0 : i32
    %c0_i32_2 = arith.constant 0 : i32
    return %c0_i32, %c0_i32_0, %c0_i32_1 : i32, i32, i32
  }
  func.func @transform_6(%arg0: i32) -> (i32, i32) {
    %c0_i32 = arith.constant 0 : i32
    %c0_i32_0 = arith.constant 0 : i32
    %c0_i32_1 = arith.constant 0 : i32
    return %c0_i32, %c0_i32_0 : i32, i32
  }
  func.func @transform_7(%arg0: i32) -> (i32, i32) {
    %c0_i32 = arith.constant 0 : i32
    %c0_i32_0 = arith.constant 0 : i32
    %c0_i32_1 = arith.constant 0 : i32
    return %c0_i32, %c0_i32_0 : i32, i32
  }
  func.func @transform_8(%arg0: i32) -> (i32, i32) {
    %c0_i32 = arith.constant 0 : i32
    %c0_i32_0 = arith.constant 0 : i32
    %c0_i32_1 = arith.constant 0 : i32
    return %c0_i32, %c0_i32_0 : i32, i32
  }
}

</mosaic_0001>

<llo_original>
// kernel: tile.48
$region0: #{tile.48}
  #allocation0 [shape = 's32[1]{0}', space=sflag, size = 0x4, scoped, tag = 'scoped memory for tile.48']
  %s0 = inlined_call_operand.vmem [shape: f32[32], index: 0, kind: input, shape index: {}]
  %s1 = inlined_call_operand.vmem [shape: f32[4,32], index: 1, kind: output, shape index: {}]
  // Predicated region
  $region2: #{tile.48} parent=0 // pred_check
    _
  $region3: #{tile.48} parent=0 // pred_check_branch
    %3 = sbr.rel (0) target = $region5
  $region4: #{tile.48} parent=0 // pred_region
    _
  $region5: #{tile.48} parent=0 // pred_fallthru
    _
  %v4 = vld [vmem:[%s0] ss:$0 sm:$0xff]
  %5 = vst [vmem:[%s1] sm:$0xf] %v4

// kernel: tile.55
$region0: #{tile.55}
  %s0 = inlined_call_operand.vmem [shape: f32[4,32], index: 0, kind: input, shape index: {}]
  %s1 = inlined_call_operand.vmem [shape: f32[1,128], index: 1, kind: output, shape index: {}]
  $region1: #{tile.55} parent=0
    #allocation0 [shape = 'u8[4096]{0}', space=vmem, size = 0x1000, scoped, tag = 'scoped mem for output reshape']
    #allocation1 [shape = 'u8[4096]{0}', space=vmem, size = 0x1000, scoped, tag = 'scoped mem for input reshape']
    %s3 = sshll.u32 1, 4
    %s4 = ssub.s32 %s3, 1
    %v5 = vld [vmem:[%s0] sm:%s4]
    %6 = vst [vmem:[#allocation1] sm:%s4] %v5
    %v7 = vld [vmem:[#allocation1] sm:$0x1]
    %vm8 = vcmask 261120
    %9 = vst.msk [vmem:[#allocation0] sm:$0x1] %vm8, %v7
    %s10 = scalar_lea.vmem [#allocation1], 3
    %v11 = vld [vmem:[%s10] sm:$0x1]
    %12 = vrot.lane.b32.xlu0 %v11, 96
    %v13 = vpop.permute.xlu0 %12
    %vm14 = vcmask 1048320
    %15 = vst.msk [vmem:[#allocation0] sm:$0x1] %vm14, %v13
    %s16 = scalar_lea.vmem [#allocation1], 2
    %v17 = vld [vmem:[%s16] sm:$0x1]
    %18 = vrot.lane.b32.xlu0 %v17, 64
    %v19 = vpop.permute.xlu0 %18
    %vm20 = vcmask 785920
    %21 = vst.msk [vmem:[#allocation0] sm:$0x1] %vm20, %v19
    %s22 = scalar_lea.vmem [#allocation1], 1
    %v23 = vld [vmem:[%s22] sm:$0x1]
    %24 = vrot.lane.b32.xlu0 %v23, 32
    %v25 = vpop.permute.xlu0 %24
    %vm26 = vcmask 523520
    %27 = vst.msk [vmem:[#allocation0] sm:$0x1] %vm26, %v25
    %s29 = sshll.u32 1, 1
    %s30 = ssub.s32 %s29, 1
    %v32 = vld [vmem:[#allocation0] sm:%s30]
    %s33 = sshll.u32 1, 1
    %s34 = ssub.s32 %s33, 1
    %35 = vst [vmem:[%s1] sm:%s34] %v32

// kernel: convmixer_forward.1
$region0: #{convmixer_forward.1}
  #allocation0 [shape = 'u32[]', space=smem, size = 0x4, offset = 0x4, fixed_abs, tag = 'smem constant byte address 0x4 - core index']
  #allocation1 [shape = 'u32[144,128]{1,0:T(1,128)}', space=vmem, size = 0x12000, scoped, tag = 'internal scratch']
  #allocation2 [shape = 'f32[2,4,24,128]{3,2,1,0:T(8,128)}', space=vmem, size = 0x18000, scoped, tag = 'scratch operand']
  %s0 = inlined_call_operand.vmem [shape: f32[32,48], index: 0, kind: input, shape index: {}]
  %s1 = inlined_call_operand.vmem [shape: f32[48,128], index: 1, kind: input, shape index: {}]
  %s2 = inlined_call_operand.vmem [shape: f32[8,128], index: 2, kind: input, shape index: {}]
  %s3 = inlined_call_operand.vmem [shape: f32[32,81,128], index: 3, kind: input, shape index: {}]
  %s4 = inlined_call_operand.vmem [shape: f32[32,8,128], index: 4, kind: input, shape index: {}]
  %s5 = inlined_call_operand.vmem [shape: f32[32,128,128], index: 5, kind: input, shape index: {}]
  %s6 = inlined_call_operand.vmem [shape: f32[128,100], index: 6, kind: input, shape index: {}]
  %s7 = inlined_call_operand.vmem [shape: f32[1,100], index: 7, kind: input, shape index: {}]
  %s8 = inlined_call_operand.hbm [shape: f32[2,100], index: 8, kind: output, shape index: {}]
  %s9 = sld [smem:[#allocation0]]
  $region49: #{convmixer_forward.1} parent=0
    _
  %s11 = ssub.s32 1, %s9
  %s12 = scalar_select 0, %s11, %s9
  $region1: #{convmixer_forward.1} parent=0
    #allocation3 [shape = 'u8[1024]{0}', space=vmem, size = 0x400, scoped, tag = 'output window, operand 0, single buffered']
    #allocation4 [shape = 's32[1]{0}', space=sflag, size = 0x4, scoped, tag = 'scoped memory for convmixer_forward.1']
    %13 = vsyncpa [#allocation4], 0
    // Predicated region
    $region2: #{convmixer_forward.1} parent=1 // pred_check
      _
    $region3: #{convmixer_forward.1} parent=1 // pred_check_branch
      %15 = sbr.rel (0) target = $region5
    $region4: #{convmixer_forward.1} parent=1 // pred_region
      _
    $region5: #{convmixer_forward.1} parent=1 // pred_fallthru
      _
    // Predicated region
    $region6: #{convmixer_forward.1} parent=1 // pred_check
      _
    $region7: #{convmixer_forward.1} parent=1 // pred_check_branch
      %17 = sbr.rel (0) target = $region9
    $region8: #{convmixer_forward.1} parent=1 // pred_region
      _
    $region9: #{convmixer_forward.1} parent=1 // pred_fallthru
      _
    // Predicated region
    $region10: #{convmixer_forward.1} parent=1 // pred_check
      _
    $region11: #{convmixer_forward.1} parent=1 // pred_check_branch
      %19 = sbr.rel (0) target = $region13
    $region12: #{convmixer_forward.1} parent=1 // pred_region
      _
    $region13: #{convmixer_forward.1} parent=1 // pred_fallthru
      _
    // Predicated region
    $region14: #{convmixer_forward.1} parent=1 // pred_check
      _
    $region15: #{convmixer_forward.1} parent=1 // pred_check_branch
      %21 = sbr.rel (0) target = $region17
    $region16: #{convmixer_forward.1} parent=1 // pred_region
      _
    $region17: #{convmixer_forward.1} parent=1 // pred_fallthru
      _
    // Predicated region
    $region18: #{convmixer_forward.1} parent=1 // pred_check
      _
    $region19: #{convmixer_forward.1} parent=1 // pred_check_branch
      %23 = sbr.rel (0) target = $region21
    $region20: #{convmixer_forward.1} parent=1 // pred_region
      _
    $region21: #{convmixer_forward.1} parent=1 // pred_fallthru
      _
    // Predicated region
    $region22: #{convmixer_forward.1} parent=1 // pred_check
      _
    $region23: #{convmixer_forward.1} parent=1 // pred_check_branch
      %25 = sbr.rel (0) target = $region25
    $region24: #{convmixer_forward.1} parent=1 // pred_region
      _
    $region25: #{convmixer_forward.1} parent=1 // pred_fallthru
      _
    // Predicated region
    $region26: #{convmixer_forward.1} parent=1 // pred_check
      _
    $region27: #{convmixer_forward.1} parent=1 // pred_check_branch
      %27 = sbr.rel (0) target = $region29
    $region28: #{convmixer_forward.1} parent=1 // pred_region
      _
    $region29: #{convmixer_forward.1} parent=1 // pred_fallthru
      _
    // Predicated region
    $region30: #{convmixer_forward.1} parent=1 // pred_check
      _
    $region31: #{convmixer_forward.1} parent=1 // pred_check_branch
      %29 = sbr.rel (0) target = $region33
    $region32: #{convmixer_forward.1} parent=1 // pred_region
      _
    $region33: #{convmixer_forward.1} parent=1 // pred_fallthru
      _
    %v30 = vlaneseq
    %v31 = vand.u32 %v30, 127
    %vm32 = vcmp.lt.s32.totalorder %v31, 96
    %vm33 = vcmp.lt.s32.totalorder %v31, 64
    %vm34 = vcmp.lt.s32.totalorder %v31, 32
    %35 = vst [vmem:[#allocation2] sm:$0xff] 0.0
    %36 = vst [vmem:[#allocation2 + $0x8] sm:$0xff] 0.0
    %37 = vst [vmem:[#allocation2 + $0x10] sm:$0xff] 0.0
    %38 = vst [vmem:[#allocation2 + $0x18] sm:$0xff] 0.0
    %39 = vst [vmem:[#allocation2 + $0x20] sm:$0xff] 0.0
    %40 = vst [vmem:[#allocation2 + $0x28] sm:$0xff] 0.0
    %41 = vst [vmem:[#allocation2 + $0x30] sm:$0xff] 0.0
    %42 = vst [vmem:[#allocation2 + $0x38] sm:$0xff] 0.0
    %43 = vst [vmem:[#allocation2 + $0x40] sm:$0xff] 0.0
    %44 = vst [vmem:[#allocation2 + $0x48] sm:$0xff] 0.0
    %45 = vst [vmem:[#allocation2 + $0x50] sm:$0xff] 0.0
    %46 = vst [vmem:[#allocation2 + $0x58] sm:$0xff] 0.0
    %47 = vst [vmem:[#allocation2 + $0x60] sm:$0xff] 0.0
    %48 = vst [vmem:[#allocation2 + $0x68] sm:$0xff] 0.0
    %49 = vst [vmem:[#allocation2 + $0x70] sm:$0xff] 0.0
    %50 = vst [vmem:[#allocation2 + $0x78] sm:$0xff] 0.0
    %51 = vst [vmem:[#allocation2 + $0x80] sm:$0xff] 0.0
    %52 = vst [vmem:[#allocation2 + $0x88] sm:$0xff] 0.0
    %53 = vst [vmem:[#allocation2 + $0x90] sm:$0xff] 0.0
    %54 = vst [vmem:[#allocation2 + $0x98] sm:$0xff] 0.0
    %55 = vst [vmem:[#allocation2 + $0xa0] sm:$0xff] 0.0
    %56 = vst [vmem:[#allocation2 + $0xa8] sm:$0xff] 0.0
    %57 = vst [vmem:[#allocation2 + $0xb0] sm:$0xff] 0.0
    %58 = vst [vmem:[#allocation2 + $0xb8] sm:$0xff] 0.0
    %v59 = vld [vmem:[%s2] sm:$0xff]
    %v60 = vld [vmem:[%s0] sm:$0xff]
    %v61 = vld [vmem:[%s0 + $0x8] sm:$0xff]
    %v62 = vld [vmem:[%s0 + $0x10] sm:$0xff]
    %v63 = vld [vmem:[%s0 + $0x18] sm:$0xff]
    %v64 = vld [vmem:[%s1] sm:$0xff]
    %v65 = vld [vmem:[%s1 + $0x8] sm:$0xff]
    %v66 = vld [vmem:[%s1 + $0x10] sm:$0xff]
    %v67 = vld [vmem:[%s1 + $0x18] sm:$0xff]
    %v68 = vld [vmem:[%s1 + $0x20] sm:$0xff]
    %v69 = vld [vmem:[%s1 + $0x28] sm:$0xff]
    %v70 = vlaneseq
    %v71 = vshrl.u32 %v70, 7
    %v72 = vsub.s32 0, %v71
    %v73 = vrot.slane %v59, %v72
    %vm74 = vcmask 392192
    %v76 = vsel %vm74, %v60, 0
    %v79 = vsel %vm74, %v61, 0
    %v82 = vsel %vm74, %v62, 0
    %v85 = vsel %vm74, %v63, 0
    %87 = vmatprep.subr.mxu0 0.0
    %88 = vmatpush1.msra.mxu0 0.0
    %89 = vmatprep.subr.mxu0 0.0
    %90 = vmatpush1.msra.mxu0 0.0
    %91 = vmatprep.subr.mxu0 0.0
    %92 = vmatpush1.msra.mxu0 0.0
    %93 = vmatprep.subr.mxu0 0.0
    %94 = vmatpush1.msra.mxu0 0.0
    %95 = vmatprep.subr.mxu0 0.0
    %96 = vmatpush1.msra.mxu0 0.0
    %97 = vmatprep.subr.mxu0 0.0
    %98 = vmatpush1.msra.mxu0 0.0
    %99 = vmatprep.subr.mxu0 0.0
    %100 = vmatpush1.msra.mxu0 0.0
    %101 = vmatprep.subr.mxu0 0.0
    %102 = vmatpush1.msra.mxu0 0.0
    %103 = vmatprep.subr.mxu0 0.0
    %104 = vmatpush1.msra.mxu0 0.0
    %105 = vmatprep.subr.mxu0 0.0
    %106 = vmatpush1.msra.mxu0 0.0
    %107 = vmatprep.subr.mxu0 0.0
    %v108 = vand.u32 %v69, 4294901760
    %109 = vmatpush1.msra.mxu0 %v108
    %110 = vmatprep.subr.mxu0 0.0
    %v111 = vand.u32 %v68, 4294901760
    %112 = vmatpush1.msra.mxu0 %v111
    %113 = vmatprep.subr.mxu0 0.0
    %v114 = vand.u32 %v67, 4294901760
    %115 = vmatpush1.msra.mxu0 %v114
    %116 = vmatprep.subr.mxu0 0.0
    %v117 = vand.u32 %v66, 4294901760
    %118 = vmatpush1.msra.mxu0 %v117
    %119 = vmatprep.subr.mxu0 0.0
    %v120 = vand.u32 %v65, 4294901760
    %121 = vmatpush1.msra.mxu0 %v120
    %122 = vmatprep.subr.mxu0 0.0
    %v123 = vand.u32 %v64, 4294901760
    %124 = vmatpush1.msra.mxu0 %v123
    %125 = vmatprep.subr.mxu0 0.0
    %126 = vmatpush2.msra.mxu0 0.0
    %127 = vmatprep.subr.mxu0 0.0
    %128 = vmatpush2.msra.mxu0 0.0
    %129 = vmatprep.subr.mxu0 0.0
    %130 = vmatpush2.msra.mxu0 0.0
    %131 = vmatprep.subr.mxu0 0.0
    %132 = vmatpush2.msra.mxu0 0.0
    %133 = vmatprep.subr.mxu0 0.0
    %134 = vmatpush2.msra.mxu0 0.0
    %135 = vmatprep.subr.mxu0 0.0
    %136 = vmatpush2.msra.mxu0 0.0
    %137 = vmatprep.subr.mxu0 0.0
    %138 = vmatpush2.msra.mxu0 0.0
    %139 = vmatprep.subr.mxu0 0.0
    %140 = vmatpush2.msra.mxu0 0.0
    %141 = vmatprep.subr.mxu0 0.0
    %142 = vmatpush2.msra.mxu0 0.0
    %143 = vmatprep.subr.mxu0 0.0
    %144 = vmatpush2.msra.mxu0 0.0
    %145 = vmatprep.subr.mxu0 0.0
    %146 = vmatpush2.msra.mxu0 0.0
    %147 = vmatprep.subr.mxu0 0.0
    %148 = vmatpush2.msra.mxu0 0.0
    %149 = vmatprep.subr.mxu0 0.0
    %150 = vmatpush2.msra.mxu0 0.0
    %151 = vmatprep.subr.mxu0 0.0
    %152 = vmatpush2.msra.mxu0 0.0
    %153 = vmatprep.subr.mxu0 0.0
    %154 = vmatpush2.msra.mxu0 0.0
    %155 = vmatprep.subr.mxu0 0.0
    %156 = vmatpush2.msra.mxu0 0.0
    %157 = vmatprep.mubr.f32.mxu0 0.0
    %v158 = vand.u32 %v76, 4294901760
    %v159 = vsub.f32 %v76, %v158
    %v160 = vand.u32 %v159, 4294901760
    %v161 = vsub.f32 %v159, %v160
    %v162 = vand.u32 %v161, 4294901760
    %163 = vmatmul.mubr.f32.gmra.mxu0 %v162
    %v164 = vpop.f32.mrf.mxu0
    %v165 = vadd.f32 %v73, %v164
    %v166 = vpop.f32.mrf.mxu0
    %167 = vmatprep.mubr.f32.mxu0 0.0
    %v168 = vand.u32 %v79, 4294901760
    %v169 = vsub.f32 %v79, %v168
    %v170 = vand.u32 %v169, 4294901760
    %v171 = vsub.f32 %v169, %v170
    %v172 = vand.u32 %v171, 4294901760
    %173 = vmatmul.mubr.f32.gmra.mxu0 %v172
    %v174 = vpop.f32.mrf.mxu0
    %v175 = vadd.f32 %v73, %v174
    %v176 = vpop.f32.mrf.mxu0
    %177 = vmatprep.mubr.f32.mxu0 0.0
    %v178 = vand.u32 %v82, 4294901760
    %v179 = vsub.f32 %v82, %v178
    %v180 = vand.u32 %v179, 4294901760
    %v181 = vsub.f32 %v179, %v180
    %v182 = vand.u32 %v181, 4294901760
    %183 = vmatmul.mubr.f32.gmra.mxu0 %v182
    %v184 = vpop.f32.mrf.mxu0
    %v185 = vadd.f32 %v73, %v184
    %v186 = vpop.f32.mrf.mxu0
    %187 = vmatprep.mubr.f32.mxu0 0.0
    %v188 = vand.u32 %v85, 4294901760
    %v189 = vsub.f32 %v85, %v188
    %v190 = vand.u32 %v189, 4294901760
    %v191 = vsub.f32 %v189, %v190
    %v192 = vand.u32 %v191, 4294901760
    %193 = vmatmul.mubr.f32.gmra.mxu0 %v192
    %v194 = vpop.f32.mrf.mxu0
    %v195 = vadd.f32 %v73, %v194
    %v196 = vpop.f32.mrf.mxu0
    %197 = vdwg.mxu0
    %198 = vmatprep.subr.mxu0 0.0
    %199 = vmatpush1.msra.mxu0 0.0
    %200 = vmatprep.subr.mxu0 0.0
    %201 = vmatpush1.msra.mxu0 0.0
    %202 = vmatprep.subr.mxu0 0.0
    %203 = vmatpush1.msra.mxu0 0.0
    %204 = vmatprep.subr.mxu0 0.0
    %205 = vmatpush1.msra.mxu0 0.0
    %206 = vmatprep.subr.mxu0 0.0
    %207 = vmatpush1.msra.mxu0 0.0
    %208 = vmatprep.subr.mxu0 0.0
    %209 = vmatpush1.msra.mxu0 0.0
    %210 = vmatprep.subr.mxu0 0.0
    %211 = vmatpush1.msra.mxu0 0.0
    %212 = vmatprep.subr.mxu0 0.0
    %213 = vmatpush1.msra.mxu0 0.0
    %214 = vmatprep.subr.mxu0 0.0
    %215 = vmatpush1.msra.mxu0 0.0
    %216 = vmatprep.subr.mxu0 0.0
    %217 = vmatpush1.msra.mxu0 0.0
    %218 = vmatprep.subr.mxu0 0.0
    %v219 = vand.u32 %v69, 4294901760
    %v220 = vsub.f32 %v69, %v219
    %v221 = vand.u32 %v220, 4294901760
    %v222 = vsub.f32 %v220, %v221
    %v223 = vand.u32 %v222, 4294901760
    %224 = vmatpush1.msra.mxu0 %v223
    %225 = vmatprep.subr.mxu0 0.0
    %v226 = vand.u32 %v68, 4294901760
    %v227 = vsub.f32 %v68, %v226
    %v228 = vand.u32 %v227, 4294901760
    %v229 = vsub.f32 %v227, %v228
    %v230 = vand.u32 %v229, 4294901760
    %231 = vmatpush1.msra.mxu0 %v230
    %232 = vmatprep.subr.mxu0 0.0
    %v233 = vand.u32 %v67, 4294901760
    %v234 = vsub.f32 %v67, %v233
    %v235 = vand.u32 %v234, 4294901760
    %v236 = vsub.f32 %v234, %v235
    %v237 = vand.u32 %v236, 4294901760
    %238 = vmatpush1.msra.mxu0 %v237
    %239 = vmatprep.subr.mxu0 0.0
    %v240 = vand.u32 %v66, 4294901760
    %v241 = vsub.f32 %v66, %v240
    %v242 = vand.u32 %v241, 4294901760
    %v243 = vsub.f32 %v241, %v242
    %v244 = vand.u32 %v243, 4294901760
    %245 = vmatpush1.msra.mxu0 %v244
    %246 = vmatprep.subr.mxu0 0.0
    %v247 = vand.u32 %v65, 4294901760
    %v248 = vsub.f32 %v65, %v247
    %v249 = vand.u32 %v248, 4294901760
    %v250 = vsub.f32 %v248, %v249
    %v251 = vand.u32 %v250, 4294901760
    %252 = vmatpush1.msra.mxu0 %v251
    %253 = vmatprep.subr.mxu0 0.0
    %v254 = vand.u32 %v64, 4294901760
    %v255 = vsub.f32 %v64, %v254
    %v256 = vand.u32 %v255, 4294901760
    %v257 = vsub.f32 %v255, %v256
    %v258 = vand.u32 %v257, 4294901760
    %259 = vmatpush1.msra.mxu0 %v258
    %260 = vmatprep.subr.mxu0 0.0
    %261 = vmatpush2.msra.mxu0 0.0
    %262 = vmatprep.subr.mxu0 0.0
    %263 = vmatpush2.msra.mxu0 0.0
    %264 = vmatprep.subr.mxu0 0.0
    %265 = vmatpush2.msra.mxu0 0.0
    %266 = vmatprep.subr.mxu0 0.0
    %267 = vmatpush2.msra.mxu0 0.0
    %268 = vmatprep.subr.mxu0 0.0
    %269 = vmatpush2.msra.mxu0 0.0
    %270 = vmatprep.subr.mxu0 0.0
    %271 = vmatpush2.msra.mxu0 0.0
    %272 = vmatprep.subr.mxu0 0.0
    %273 = vmatpush2.msra.mxu0 0.0
    %274 = vmatprep.subr.mxu0 0.0
    %275 = vmatpush2.msra.mxu0 0.0
    %276 = vmatprep.subr.mxu0 0.0
    %277 = vmatpush2.msra.mxu0 0.0
    %278 = vmatprep.subr.mxu0 0.0
    %279 = vmatpush2.msra.mxu0 0.0
    %280 = vmatprep.subr.mxu0 0.0
    %281 = vmatpush2.msra.mxu0 0.0
    %282 = vmatprep.subr.mxu0 0.0
    %283 = vmatpush2.msra.mxu0 0.0
    %284 = vmatprep.subr.mxu0 0.0
    %285 = vmatpush2.msra.mxu0 0.0
    %286 = vmatprep.subr.mxu0 0.0
    %287 = vmatpush2.msra.mxu0 0.0
    %288 = vmatprep.subr.mxu0 0.0
    %289 = vmatpush2.msra.mxu0 0.0
    %290 = vmatprep.subr.mxu0 0.0
    %291 = vmatpush2.msra.mxu0 0.0
    %292 = vmatprep.mubr.f32.mxu0 0.0
    %v293 = vand.u32 %v76, 4294901760
    %294 = vmatmul.mubr.f32.gmra.mxu0 %v293
    %v295 = vpop.f32.mrf.mxu0
    %v296 = vadd.f32 %v165, %v295
    %v297 = vpop.f32.mrf.mxu0
    %298 = vmatprep.mubr.f32.mxu0 0.0
    %v299 = vand.u32 %v79, 4294901760
    %300 = vmatmul.mubr.f32.gmra.mxu0 %v299
    %v301 = vpop.f32.mrf.mxu0
    %v302 = vadd.f32 %v175, %v301
    %v303 = vpop.f32.mrf.mxu0
    %304 = vmatprep.mubr.f32.mxu0 0.0
    %v305 = vand.u32 %v82, 4294901760
    %306 = vmatmul.mubr.f32.gmra.mxu0 %v305
    %v307 = vpop.f32.mrf.mxu0
    %v308 = vadd.f32 %v185, %v307
    %v309 = vpop.f32.mrf.mxu0
    %310 = vmatprep.mubr.f32.mxu0 0.0
    %v311 = vand.u32 %v85, 4294901760
    %312 = vmatmul.mubr.f32.gmra.mxu0 %v311
    %v313 = vpop.f32.mrf.mxu0
    %v314 = vadd.f32 %v195, %v313
    %v315 = vpop.f32.mrf.mxu0
    %316 = vdwg.mxu0
    %317 = vmatprep.subr.mxu0 0.0
    %318 = vmatpush1.msra.mxu0 0.0
    %319 = vmatprep.subr.mxu0 0.0
    %320 = vmatpush1.msra.mxu0 0.0
    %321 = vmatprep.subr.mxu0 0.0
    %322 = vmatpush1.msra.mxu0 0.0
    %323 = vmatprep.subr.mxu0 0.0
    %324 = vmatpush1.msra.mxu0 0.0
    %325 = vmatprep.subr.mxu0 0.0
    %326 = vmatpush1.msra.mxu0 0.0
    %327 = vmatprep.subr.mxu0 0.0
    %328 = vmatpush1.msra.mxu0 0.0
    %329 = vmatprep.subr.mxu0 0.0
    %330 = vmatpush1.msra.mxu0 0.0
    %331 = vmatprep.subr.mxu0 0.0
    %332 = vmatpush1.msra.mxu0 0.0
    %333 = vmatprep.subr.mxu0 0.0
    %334 = vmatpush1.msra.mxu0 0.0
    %335 = vmatprep.subr.mxu0 0.0
    %336 = vmatpush1.msra.mxu0 0.0
    %337 = vmatprep.subr.mxu0 0.0
    %v338 = vand.u32 %v69, 4294901760
    %v339 = vsub.f32 %v69, %v338
    %340 = vmatpush1.msra.mxu0 %v339
    %341 = vmatprep.subr.mxu0 0.0
    %v342 = vand.u32 %v68, 4294901760
    %v343 = vsub.f32 %v68, %v342
    %344 = vmatpush1.msra.mxu0 %v343
    %345 = vmatprep.subr.mxu0 0.0
    %v346 = vand.u32 %v67, 4294901760
    %v347 = vsub.f32 %v67, %v346
    %348 = vmatpush1.msra.mxu0 %v347
    %349 = vmatprep.subr.mxu0 0.0
    %v350 = vand.u32 %v66, 4294901760
    %v351 = vsub.f32 %v66, %v350
    %352 = vmatpush1.msra.mxu0 %v351
    %353 = vmatprep.subr.mxu0 0.0
    %v354 = vand.u32 %v65, 4294901760
    %v355 = vsub.f32 %v65, %v354
    %356 = vmatpush1.msra.mxu0 %v355
    %357 = vmatprep.subr.mxu0 0.0
    %v358 = vand.u32 %v64, 4294901760
    %v359 = vsub.f32 %v64, %v358
    %360 = vmatpush1.msra.mxu0 %v359
    %361 = vmatprep.subr.mxu0 0.0
    %362 = vmatpush2.msra.mxu0 0.0
    %363 = vmatprep.subr.mxu0 0.0
    %364 = vmatpush2.msra.mxu0 0.0
    %365 = vmatprep.subr.mxu0 0.0
    %366 = vmatpush2.msra.mxu0 0.0
    %367 = vmatprep.subr.mxu0 0.0
    %368 = vmatpush2.msra.mxu0 0.0
    %369 = vmatprep.subr.mxu0 0.0
    %370 = vmatpush2.msra.mxu0 0.0
    %371 = vmatprep.subr.mxu0 0.0
    %372 = vmatpush2.msra.mxu0 0.0
    %373 = vmatprep.subr.mxu0 0.0
    %374 = vmatpush2.msra.mxu0 0.0
    %375 = vmatprep.subr.mxu0 0.0
    %376 = vmatpush2.msra.mxu0 0.0
    %377 = vmatprep.subr.mxu0 0.0
    %378 = vmatpush2.msra.mxu0 0.0
    %379 = vmatprep.subr.mxu0 0.0
    %380 = vmatpush2.msra.mxu0 0.0
    %381 = vmatprep.subr.mxu0 0.0
    %382 = vmatpush2.msra.mxu0 0.0
    %383 = vmatprep.subr.mxu0 0.0
    %384 = vmatpush2.msra.mxu0 0.0
    %385 = vmatprep.subr.mxu0 0.0
    %386 = vmatpush2.msra.mxu0 0.0
    %387 = vmatprep.subr.mxu0 0.0
    %388 = vmatpush2.msra.mxu0 0.0
    %389 = vmatprep.subr.mxu0 0.0
    %390 = vmatpush2.msra.mxu0 0.0
    %391 = vmatprep.subr.mxu0 0.0
    %392 = vmatpush2.msra.mxu0 0.0
    %393 = vmatprep.mubr.f32.mxu0 0.0
    %v394 = vand.u32 %v76, 4294901760
    %v395 = vsub.f32 %v76, %v394
    %396 = vmatmul.mubr.f32.gmra.mxu0 %v395
    %v397 = vpop.f32.mrf.mxu0
    %v398 = vadd.f32 %v296, %v397
    %v399 = vpop.f32.mrf.mxu0
    %400 = vmatprep.mubr.f32.mxu0 0.0
    %v401 = vand.u32 %v79, 4294901760
    %v402 = vsub.f32 %v79, %v401
    %403 = vmatmul.mubr.f32.gmra.mxu0 %v402
    %v404 = vpop.f32.mrf.mxu0
    %v405 = vadd.f32 %v302, %v404
    %v406 = vpop.f32.mrf.mxu0
    %407 = vmatprep.mubr.f32.mxu0 0.0
    %v408 = vand.u32 %v82, 4294901760
    %v409 = vsub.f32 %v82, %v408
    %410 = vmatmul.mubr.f32.gmra.mxu0 %v409
    %v411 = vpop.f32.mrf.mxu0
    %v412 = vadd.f32 %v308, %v411
    %v413 = vpop.f32.mrf.mxu0
    %414 = vmatprep.mubr.f32.mxu0 0.0
    %v415 = vand.u32 %v85, 4294901760
    %v416 = vsub.f32 %v85, %v415
    %417 = vmatmul.mubr.f32.gmra.mxu0 %v416
    %v418 = vpop.f32.mrf.mxu0
    %v419 = vadd.f32 %v314, %v418
    %v420 = vpop.f32.mrf.mxu0
    %421 = vdwg.mxu0
    %422 = vmatprep.subr.mxu0 0.0
    %423 = vmatpush1.msra.mxu0 0.0
    %424 = vmatprep.subr.mxu0 0.0
    %425 = vmatpush1.msra.mxu0 0.0
    %426 = vmatprep.subr.mxu0 0.0
    %427 = vmatpush1.msra.mxu0 0.0
    %428 = vmatprep.subr.mxu0 0.0
    %429 = vmatpush1.msra.mxu0 0.0
    %430 = vmatprep.subr.mxu0 0.0
    %431 = vmatpush1.msra.mxu0 0.0
    %432 = vmatprep.subr.mxu0 0.0
    %433 = vmatpush1.msra.mxu0 0.0
    %434 = vmatprep.subr.mxu0 0.0
    %435 = vmatpush1.msra.mxu0 0.0
    %436 = vmatprep.subr.mxu0 0.0
    %437 = vmatpush1.msra.mxu0 0.0
    %438 = vmatprep.subr.mxu0 0.0
    %439 = vmatpush1.msra.mxu0 0.0
    %440 = vmatprep.subr.mxu0 0.0
    %441 = vmatpush1.msra.mxu0 0.0
    %442 = vmatprep.subr.mxu0 0.0
    %v443 = vand.u32 %v69, 4294901760
    %444 = vmatpush1.msra.mxu0 %v443
    %445 = vmatprep.subr.mxu0 0.0
    %v446 = vand.u32 %v68, 4294901760
    %447 = vmatpush1.msra.mxu0 %v446
    %448 = vmatprep.subr.mxu0 0.0
    %v449 = vand.u32 %v67, 4294901760
    %450 = vmatpush1.msra.mxu0 %v449
    %451 = vmatprep.subr.mxu0 0.0
    %v452 = vand.u32 %v66, 4294901760
    %453 = vmatpush1.msra.mxu0 %v452
    %454 = vmatprep.subr.mxu0 0.0
    %v455 = vand.u32 %v65, 4294901760
    %456 = vmatpush1.msra.mxu0 %v455
    %457 = vmatprep.subr.mxu0 0.0
    %v458 = vand.u32 %v64, 4294901760
    %459 = vmatpush1.msra.mxu0 %v458
    %460 = vmatprep.subr.mxu0 0.0
    %461 = vmatpush2.msra.mxu0 0.0
    %462 = vmatprep.subr.mxu0 0.0
    %463 = vmatpush2.msra.mxu0 0.0
    %464 = vmatprep.subr.mxu0 0.0
    %465 = vmatpush2.msra.mxu0 0.0
    %466 = vmatprep.subr.mxu0 0.0
    %467 = vmatpush2.msra.mxu0 0.0
    %468 = vmatprep.subr.mxu0 0.0
    %469 = vmatpush2.msra.mxu0 0.0
    %470 = vmatprep.subr.mxu0 0.0
    %471 = vmatpush2.msra.mxu0 0.0
    %472 = vmatprep.subr.mxu0 0.0
    %473 = vmatpush2.msra.mxu0 0.0
    %474 = vmatprep.subr.mxu0 0.0
    %475 = vmatpush2.msra.mxu0 0.0
    %476 = vmatprep.subr.mxu0 0.0
    %477 = vmatpush2.msra.mxu0 0.0
    %478 = vmatprep.subr.mxu0 0.0
    %479 = vmatpush2.msra.mxu0 0.0
    %480 = vmatprep.subr.mxu0 0.0
    %481 = vmatpush2.msra.mxu0 0.0
    %482 = vmatprep.subr.mxu0 0.0
    %483 = vmatpush2.msra.mxu0 0.0
    %484 = vmatprep.subr.mxu0 0.0
    %485 = vmatpush2.msra.mxu0 0.0
    %486 = vmatprep.subr.mxu0 0.0
    %487 = vmatpush2.msra.mxu0 0.0
    %488 = vmatprep.subr.mxu0 0.0
    %489 = vmatpush2.msra.mxu0 0.0
    %490 = vmatprep.subr.mxu0 0.0
    %491 = vmatpush2.msra.mxu0 0.0
    %492 = vmatprep.mubr.f32.mxu0 0.0
    %v493 = vand.u32 %v76, 4294901760
    %v494 = vsub.f32 %v76, %v493
    %v495 = vand.u32 %v494, 4294901760
    %496 = vmatmul.mubr.f32.gmra.mxu0 %v495
    %v497 = vpop.f32.mrf.mxu0
    %v498 = vadd.f32 %v398, %v497
    %v499 = vpop.f32.mrf.mxu0
    %500 = vmatprep.mubr.f32.mxu0 0.0
    %v501 = vand.u32 %v79, 4294901760
    %v502 = vsub.f32 %v79, %v501
    %v503 = vand.u32 %v502, 4294901760
    %504 = vmatmul.mubr.f32.gmra.mxu0 %v503
    %v505 = vpop.f32.mrf.mxu0
    %v506 = vadd.f32 %v405, %v505
    %v507 = vpop.f32.mrf.mxu0
    %508 = vmatprep.mubr.f32.mxu0 0.0
    %v509 = vand.u32 %v82, 4294901760
    %v510 = vsub.f32 %v82, %v509
    %v511 = vand.u32 %v510, 4294901760
    %512 = vmatmul.mubr.f32.gmra.mxu0 %v511
    %v513 = vpop.f32.mrf.mxu0
    %v514 = vadd.f32 %v412, %v513
    %v515 = vpop.f32.mrf.mxu0
    %516 = vmatprep.mubr.f32.mxu0 0.0
    %v517 = vand.u32 %v85, 4294901760
    %v518 = vsub.f32 %v85, %v517
    %v519 = vand.u32 %v518, 4294901760
    %520 = vmatmul.mubr.f32.gmra.mxu0 %v519
    %v521 = vpop.f32.mrf.mxu0
    %v522 = vadd.f32 %v419, %v521
    %v523 = vpop.f32.mrf.mxu0
    %524 = vdwg.mxu0
    %525 = vmatprep.subr.mxu0 0.0
    %526 = vmatpush1.msra.mxu0 0.0
    %527 = vmatprep.subr.mxu0 0.0
    %528 = vmatpush1.msra.mxu0 0.0
    %529 = vmatprep.subr.mxu0 0.0
    %530 = vmatpush1.msra.mxu0 0.0
    %531 = vmatprep.subr.mxu0 0.0
    %532 = vmatpush1.msra.mxu0 0.0
    %533 = vmatprep.subr.mxu0 0.0
    %534 = vmatpush1.msra.mxu0 0.0
    %535 = vmatprep.subr.mxu0 0.0
    %536 = vmatpush1.msra.mxu0 0.0
    %537 = vmatprep.subr.mxu0 0.0
    %538 = vmatpush1.msra.mxu0 0.0
    %539 = vmatprep.subr.mxu0 0.0
    %540 = vmatpush1.msra.mxu0 0.0
    %541 = vmatprep.subr.mxu0 0.0
    %542 = vmatpush1.msra.mxu0 0.0
    %543 = vmatprep.subr.mxu0 0.0
    %544 = vmatpush1.msra.mxu0 0.0
    %545 = vmatprep.subr.mxu0 0.0
    %v546 = vand.u32 %v69, 4294901760
    %v547 = vsub.f32 %v69, %v546
    %v548 = vand.u32 %v547, 4294901760
    %549 = vmatpush1.msra.mxu0 %v548
    %550 = vmatprep.subr.mxu0 0.0
    %v551 = vand.u32 %v68, 4294901760
    %v552 = vsub.f32 %v68, %v551
    %v553 = vand.u32 %v552, 4294901760
    %554 = vmatpush1.msra.mxu0 %v553
    %555 = vmatprep.subr.mxu0 0.0
    %v556 = vand.u32 %v67, 4294901760
    %v557 = vsub.f32 %v67, %v556
    %v558 = vand.u32 %v557, 4294901760
    %559 = vmatpush1.msra.mxu0 %v558
    %560 = vmatprep.subr.mxu0 0.0
    %v561 = vand.u32 %v66, 4294901760
    %v562 = vsub.f32 %v66, %v561
    %v563 = vand.u32 %v562, 4294901760
    %564 = vmatpush1.msra.mxu0 %v563
    %565 = vmatprep.subr.mxu0 0.0
    %v566 = vand.u32 %v65, 4294901760
    %v567 = vsub.f32 %v65, %v566
    %v568 = vand.u32 %v567, 4294901760
    %569 = vmatpush1.msra.mxu0 %v568
    %570 = vmatprep.subr.mxu0 0.0
    %v571 = vand.u32 %v64, 4294901760
    %v572 = vsub.f32 %v64, %v571
    %v573 = vand.u32 %v572, 4294901760
    %574 = vmatpush1.msra.mxu0 %v573
    %575 = vmatprep.subr.mxu0 0.0
    %576 = vmatpush2.msra.mxu0 0.0
    %577 = vmatprep.subr.mxu0 0.0
    %578 = vmatpush2.msra.mxu0 0.0
    %579 = vmatprep.subr.mxu0 0.0
    %580 = vmatpush2.msra.mxu0 0.0
    %581 = vmatprep.subr.mxu0 0.0
    %582 = vmatpush2.msra.mxu0 0.0
    %583 = vmatprep.subr.mxu0 0.0
    %584 = vmatpush2.msra.mxu0 0.0
    %585 = vmatprep.subr.mxu0 0.0
    %586 = vmatpush2.msra.mxu0 0.0
    %587 = vmatprep.subr.mxu0 0.0
    %588 = vmatpush2.msra.mxu0 0.0
    %589 = vmatprep.subr.mxu0 0.0
    %590 = vmatpush2.msra.mxu0 0.0
    %591 = vmatprep.subr.mxu0 0.0
    %592 = vmatpush2.msra.mxu0 0.0
    %593 = vmatprep.subr.mxu0 0.0
    %594 = vmatpush2.msra.mxu0 0.0
    %595 = vmatprep.subr.mxu0 0.0
    %596 = vmatpush2.msra.mxu0 0.0
    %597 = vmatprep.subr.mxu0 0.0
    %598 = vmatpush2.msra.mxu0 0.0
    %599 = vmatprep.subr.mxu0 0.0
    %600 = vmatpush2.msra.mxu0 0.0
    %601 = vmatprep.subr.mxu0 0.0
    %602 = vmatpush2.msra.mxu0 0.0
    %603 = vmatprep.subr.mxu0 0.0
    %604 = vmatpush2.msra.mxu0 0.0
    %605 = vmatprep.subr.mxu0 0.0
    %606 = vmatpush2.msra.mxu0 0.0
    %607 = vmatprep.mubr.f32.mxu0 0.0
    %v608 = vand.u32 %v76, 4294901760
    %609 = vmatmul.mubr.f32.gmra.mxu0 %v608
    %v610 = vpop.f32.mrf.mxu0
    %v611 = vadd.f32 %v498, %v610
    %v612 = vpop.f32.mrf.mxu0
    %613 = vmatprep.mubr.f32.mxu0 0.0
    %v614 = vand.u32 %v79, 4294901760
    %615 = vmatmul.mubr.f32.gmra.mxu0 %v614
    %v616 = vpop.f32.mrf.mxu0
    %v617 = vadd.f32 %v506, %v616
    %v618 = vpop.f32.mrf.mxu0
    %619 = vmatprep.mubr.f32.mxu0 0.0
    %v620 = vand.u32 %v82, 4294901760
    %621 = vmatmul.mubr.f32.gmra.mxu0 %v620
    %v622 = vpop.f32.mrf.mxu0
    %v623 = vadd.f32 %v514, %v622
    %v624 = vpop.f32.mrf.mxu0
    %625 = vmatprep.mubr.f32.mxu0 0.0
    %v626 = vand.u32 %v85, 4294901760
    %627 = vmatmul.mubr.f32.gmra.mxu0 %v626
    %v628 = vpop.f32.mrf.mxu0
    %v629 = vadd.f32 %v522, %v628
    %v630 = vpop.f32.mrf.mxu0
    %631 = vdwg.mxu0
    %632 = vmatprep.subr.mxu0 0.0
    %633 = vmatpush1.msra.mxu0 0.0
    %634 = vmatprep.subr.mxu0 0.0
    %635 = vmatpush1.msra.mxu0 0.0
    %636 = vmatprep.subr.mxu0 0.0
    %637 = vmatpush1.msra.mxu0 0.0
    %638 = vmatprep.subr.mxu0 0.0
    %639 = vmatpush1.msra.mxu0 0.0
    %640 = vmatprep.subr.mxu0 0.0
    %641 = vmatpush1.msra.mxu0 0.0
    %642 = vmatprep.subr.mxu0 0.0
    %643 = vmatpush1.msra.mxu0 0.0
    %644 = vmatprep.subr.mxu0 0.0
    %645 = vmatpush1.msra.mxu0 0.0
    %646 = vmatprep.subr.mxu0 0.0
    %647 = vmatpush1.msra.mxu0 0.0
    %648 = vmatprep.subr.mxu0 0.0
    %649 = vmatpush1.msra.mxu0 0.0
    %650 = vmatprep.subr.mxu0 0.0
    %651 = vmatpush1.msra.mxu0 0.0
    %652 = vmatprep.subr.mxu0 0.0
    %v653 = vand.u32 %v69, 4294901760
    %654 = vmatpush1.msra.mxu0 %v653
    %655 = vmatprep.subr.mxu0 0.0
    %v656 = vand.u32 %v68, 4294901760
    %657 = vmatpush1.msra.mxu0 %v656
    %658 = vmatprep.subr.mxu0 0.0
    %v659 = vand.u32 %v67, 4294901760
    %660 = vmatpush1.msra.mxu0 %v659
    %661 = vmatprep.subr.mxu0 0.0
    %v662 = vand.u32 %v66, 4294901760
    %663 = vmatpush1.msra.mxu0 %v662
    %664 = vmatprep.subr.mxu0 0.0
    %v665 = vand.u32 %v65, 4294901760
    %666 = vmatpush1.msra.mxu0 %v665
    %667 = vmatprep.subr.mxu0 0.0
    %v668 = vand.u32 %v64, 4294901760
    %669 = vmatpush1.msra.mxu0 %v668
    %670 = vmatprep.subr.mxu0 0.0
    %671 = vmatpush2.msra.mxu0 0.0
    %672 = vmatprep.subr.mxu0 0.0
    %673 = vmatpush2.msra.mxu0 0.0
    %674 = vmatprep.subr.mxu0 0.0
    %675 = vmatpush2.msra.mxu0 0.0
    %676 = vmatprep.subr.mxu0 0.0
    %677 = vmatpush2.msra.mxu0 0.0
    %678 = vmatprep.subr.mxu0 0.0
    %679 = vmatpush2.msra.mxu0 0.0
    %680 = vmatprep.subr.mxu0 0.0
    %681 = vmatpush2.msra.mxu0 0.0
    %682 = vmatprep.subr.mxu0 0.0
    %683 = vmatpush2.msra.mxu0 0.0
    %684 = vmatprep.subr.mxu0 0.0
    %685 = vmatpush2.msra.mxu0 0.0
    %686 = vmatprep.subr.mxu0 0.0
    %687 = vmatpush2.msra.mxu0 0.0
    %688 = vmatprep.subr.mxu0 0.0
    %689 = vmatpush2.msra.mxu0 0.0
    %690 = vmatprep.subr.mxu0 0.0
    %691 = vmatpush2.msra.mxu0 0.0
    %692 = vmatprep.subr.mxu0 0.0
    %693 = vmatpush2.msra.mxu0 0.0
    %694 = vmatprep.subr.mxu0 0.0
    %695 = vmatpush2.msra.mxu0 0.0
    %696 = vmatprep.subr.mxu0 0.0
    %697 = vmatpush2.msra.mxu0 0.0
    %698 = vmatprep.subr.mxu0 0.0
    %699 = vmatpush2.msra.mxu0 0.0
    %700 = vmatprep.subr.mxu0 0.0
    %701 = vmatpush2.msra.mxu0 0.0
    %702 = vmatprep.mubr.f32.mxu0 0.0
    %v703 = vand.u32 %v76, 4294901760
    %704 = vmatmul.mubr.f32.gmra.mxu0 %v703
    %v705 = vpop.f32.mrf.mxu0
    %v706 = vadd.f32 %v611, %v705
    %v707 = vpop.f32.mrf.mxu0
    %708 = vmatprep.mubr.f32.mxu0 0.0
    %v709 = vand.u32 %v79, 4294901760
    %710 = vmatmul.mubr.f32.gmra.mxu0 %v709
    %v711 = vpop.f32.mrf.mxu0
    %v712 = vadd.f32 %v617, %v711
    %v713 = vpop.f32.mrf.mxu0
    %714 = vmatprep.mubr.f32.mxu0 0.0
    %v715 = vand.u32 %v82, 4294901760
    %716 = vmatmul.mubr.f32.gmra.mxu0 %v715
    %v717 = vpop.f32.mrf.mxu0
    %v718 = vadd.f32 %v623, %v717
    %v719 = vpop.f32.mrf.mxu0
    %720 = vmatprep.mubr.f32.mxu0 0.0
    %v721 = vand.u32 %v85, 4294901760
    %722 = vmatmul.mubr.f32.gmra.mxu0 %v721
    %v723 = vpop.f32.mrf.mxu0
    %v724 = vadd.f32 %v629, %v723
    %v725 = vpop.f32.mrf.mxu0
    %726 = vdwg.mxu0
    %v727 = vmul.f32 %v706, 0.5
    %v728 = vmul.f32 %v712, 0.5
    %v729 = vmul.f32 %v718, 0.5
    %v730 = vmul.f32 %v724, 0.5
    %v731 = vmul.f32 %v706, 0.70710677
    %v732 = vmul.f32 %v712, 0.70710677
    %v733 = vmul.f32 %v718, 0.70710677
    %v734 = vmul.f32 %v724, 0.70710677
    %v735 = vand.u32 2147483647, %v731
    %v736 = vand.u32 2147483647, %v732
    %v737 = vand.u32 2147483647, %v733
    %v738 = vand.u32 2147483647, %v734
    %v739 = vmul.f32 %v735, 0.3275911
    %v740 = vmul.f32 %v736, 0.3275911
    %v741 = vmul.f32 %v737, 0.3275911
    %v742 = vmul.f32 %v738, 0.3275911
    %v743 = vadd.f32 %v739, 1.0
    %v744 = vadd.f32 %v740, 1.0
    %v745 = vadd.f32 %v741, 1.0
    %v746 = vadd.f32 %v742, 1.0
    %v747 = vrcp.pop %v743
    %v748 = vrcp.pop %v744
    %v749 = vrcp.pop %v745
    %v750 = vrcp.pop %v746
    %v751 = vmul.f32 %v743, %v747
    %v752 = vmul.f32 %v744, %v748
    %v753 = vmul.f32 %v745, %v749
    %v754 = vmul.f32 %v746, %v750
    %v755 = vsub.f32 2.0, %v751
    %v756 = vsub.f32 2.0, %v752
    %v757 = vsub.f32 2.0, %v753
    %v758 = vsub.f32 2.0, %v754
    %v759 = vmul.f32 %v747, %v755
    %v760 = vmul.f32 %v748, %v756
    %v761 = vmul.f32 %v749, %v757
    %v762 = vmul.f32 %v750, %v758
    %v763 = vmul.f32 %v759, 1.0614054
    %v764 = vmul.f32 %v760, 1.0614054
    %v765 = vmul.f32 %v761, 1.0614054
    %v766 = vmul.f32 %v762, 1.0614054
    %v767 = vadd.f32 %v763, -1.4531521
    %v768 = vadd.f32 %v764, -1.4531521
    %v769 = vadd.f32 %v765, -1.4531521
    %v770 = vadd.f32 %v766, -1.4531521
    %v771 = vmul.f32 %v759, %v767
    %v772 = vmul.f32 %v760, %v768
    %v773 = vmul.f32 %v761, %v769
    %v774 = vmul.f32 %v762, %v770
    %v775 = vadd.f32 %v771, 1.4214138
    %v776 = vadd.f32 %v772, 1.4214138
    %v777 = vadd.f32 %v773, 1.4214138
    %v778 = vadd.f32 %v774, 1.4214138
    %v779 = vmul.f32 %v759, %v775
    %v780 = vmul.f32 %v760, %v776
    %v781 = vmul.f32 %v761, %v777
    %v782 = vmul.f32 %v762, %v778
    %v783 = vadd.f32 %v779, -0.28449672
    %v784 = vadd.f32 %v780, -0.28449672
    %v785 = vadd.f32 %v781, -0.28449672
    %v786 = vadd.f32 %v782, -0.28449672
    %v787 = vmul.f32 %v759, %v783
    %v788 = vmul.f32 %v760, %v784
    %v789 = vmul.f32 %v761, %v785
    %v790 = vmul.f32 %v762, %v786
    %v791 = vadd.f32 %v787, 0.2548296
    %v792 = vadd.f32 %v788, 0.2548296
    %v793 = vadd.f32 %v789, 0.2548296
    %v794 = vadd.f32 %v790, 0.2548296
    %v795 = vmul.f32 %v759, %v791
    %v796 = vmul.f32 %v760, %v792
    %v797 = vmul.f32 %v761, %v793
    %v798 = vmul.f32 %v762, %v794
    %v799 = vsub.f32 0.0, %v735
    %v800 = vsub.f32 0.0, %v736
    %v801 = vsub.f32 0.0, %v737
    %v802 = vsub.f32 0.0, %v738
    %v803 = vmul.f32 %v799, %v735
    %v804 = vmul.f32 %v800, %v736
    %v805 = vmul.f32 %v801, %v737
    %v806 = vmul.f32 %v802, %v738
    %v807 = vmul.f32 %v803, 1.442695
    %v808 = vpow.pop %v807
    %v809 = vmul.f32 %v804, 1.442695
    %v810 = vpow.pop %v809
    %v811 = vmul.f32 %v805, 1.442695
    %v812 = vpow.pop %v811
    %v813 = vmul.f32 %v806, 1.442695
    %v814 = vpow.pop %v813
    %v815 = vmul.f32 %v795, %v808
    %v816 = vmul.f32 %v796, %v810
    %v817 = vmul.f32 %v797, %v812
    %v818 = vmul.f32 %v798, %v814
    %v819 = vsub.f32 1.0, %v815
    %v820 = vsub.f32 1.0, %v816
    %v821 = vsub.f32 1.0, %v817
    %v822 = vsub.f32 1.0, %v818
    %vm823 = vcmp.lt.f32.partialorder %v731, 0.0
    %vm824 = vcmp.lt.f32.partialorder %v732, 0.0
    %vm825 = vcmp.lt.f32.partialorder %v733, 0.0
    %vm826 = vcmp.lt.f32.partialorder %v734, 0.0
    %v827 = vsub.f32 0.0, %v819
    %v828 = vsub.f32 0.0, %v820
    %v829 = vsub.f32 0.0, %v821
    %v830 = vsub.f32 0.0, %v822
    %v831 = vsel %vm823, %v827, %v819
    %v832 = vsel %vm824, %v828, %v820
    %v833 = vsel %vm825, %v829, %v821
    %v834 = vsel %vm826, %v830, %v822
    %v835 = vadd.f32 %v831, 1.0
    %v836 = vadd.f32 %v832, 1.0
    %v837 = vadd.f32 %v833, 1.0
    %v838 = vadd.f32 %v834, 1.0
    %v839 = vmul.f32 %v727, %v835
    %v840 = vmul.f32 %v728, %v836
    %v841 = vmul.f32 %v729, %v837
    %v842 = vmul.f32 %v730, %v838
    %v843 = vadd.f32 %v839, %v840
    %v844 = vadd.f32 %v843, %v841
    %v845 = vadd.f32 %v844, %v842
    %v846 = vrot.slane %v845, 4
    %v847 = vadd.f32 %v845, %v846
    %v848 = vrot.slane %v847, 2
    %v849 = vadd.f32 %v847, %v848
    %v850 = vrot.slane %v849, 1
    %v851 = vadd.f32 %v849, %v850
    %852 = vrot.lane.b32.xlu0 %v851, 64
    %v853 = vpop.permute.xlu0 %852
    %v854 = vadd.f32 %v851, %v853
    %855 = vrot.lane.b32.xlu0 %v854, 32
    %v856 = vpop.permute.xlu0 %855
    %v857 = vadd.f32 %v854, %v856
    %v858 = vmul.f32 %v857, 0.0078125
    %v859 = vlaneseq
    %v860 = vshrl.u32 %v859, 7
    %v861 = vsub.s32 0, %v860
    %v862 = vrot.slane %v858, %v861
    %v863 = vsub.f32 %v839, %v862
    %v864 = vsub.f32 %v840, %v862
    %v865 = vsub.f32 %v841, %v862
    %v866 = vsub.f32 %v842, %v862
    %v867 = vmul.f32 %v863, %v863
    %v868 = vmul.f32 %v864, %v864
    %v869 = vmul.f32 %v865, %v865
    %v870 = vmul.f32 %v866, %v866
    %v871 = vadd.f32 %v867, %v868
    %v872 = vadd.f32 %v871, %v869
    %v873 = vadd.f32 %v872, %v870
    %v874 = vrot.slane %v873, 4
    %v875 = vadd.f32 %v873, %v874
    %v876 = vrot.slane %v875, 2
    %v877 = vadd.f32 %v875, %v876
    %v878 = vrot.slane %v877, 1
    %v879 = vadd.f32 %v877, %v878
    %880 = vrot.lane.b32.xlu0 %v879, 64
    %v881 = vpop.permute.xlu0 %880
    %v882 = vadd.f32 %v879, %v881
    %883 = vrot.lane.b32.xlu0 %v882, 32
    %v884 = vpop.permute.xlu0 %883
    %v885 = vadd.f32 %v882, %v884
    %v886 = vmul.f32 %v885, 0.0078125
    %v887 = vadd.f32 %v886, 1e-05
    %v888 = vrsqrt.pop %v887
    %v890 = vrot.slane %v59, 1
    %v892 = vmul.f32 %v888, %v890
    %v893 = vlaneseq
    %v894 = vshrl.u32 %v893, 7
    %v895 = vsub.s32 0, %v894
    %v896 = vrot.slane %v892, %v895
    %v897 = vmul.f32 %v863, %v896
    %v898 = vmul.f32 %v864, %v896
    %v899 = vmul.f32 %v865, %v896
    %v900 = vmul.f32 %v866, %v896
    %v901 = vlaneseq
    %v902 = vshrl.u32 %v901, 7
    %v903 = vsub.s32 2, %v902
    %v904 = vrot.slane %v59, %v903
    %v905 = vadd.f32 %v897, %v904
    %v906 = vadd.f32 %v898, %v904
    %v907 = vadd.f32 %v899, %v904
    %v908 = vadd.f32 %v900, %v904
    loop: start=0, step=1, limit=32
    $region34: #{convmixer_forward.1} parent=1 // loop_pre_header
      _
    $region35: #{convmixer_forward.1} parent=1 // loop_header
      %s910 = sphi 0, %s914
      %p911 = scmp.ge.s32.totalorder %s910, 32
      %v915 = vphi %v905, %v3737
      %v916 = vphi %v906, %v3738
      %v917 = vphi %v907, %v3739
      %v918 = vphi %v908, %v3740
    $region36: #{convmixer_forward.1} parent=1 // loop_header_branch
      %913 = sbr.rel (%p911) target = $region40
    $region37: #{convmixer_forward.1} parent=1 // loop_body
      %s919 = scalar_lea.vmem [#allocation2], 24
      %920 = vst [vmem:[%s919 + $0x8] sm:$0xff] %v915
      %921 = vst [vmem:[%s919 + $0x20] sm:$0xff] %v916
      %922 = vst [vmem:[%s919 + $0x68] sm:$0xff] %v917
      %923 = vst [vmem:[%s919 + $0x80] sm:$0xff] %v918
      %s924 = smul.u32 %s910, 88
      %s925 = scalar_lea.vmem %s3, %s924
      %v926 = vld [vmem:[%s925] sm:$0xff]
      %v927 = vld [vmem:[%s925 + $0x8] sm:$0xff]
      %v928 = vld [vmem:[%s925 + $0x10] sm:$0xff]
      %v929 = vld [vmem:[%s925 + $0x18] sm:$0xff]
      %v930 = vld [vmem:[%s925 + $0x20] sm:$0xff]
      %v931 = vld [vmem:[%s925 + $0x28] sm:$0xff]
      %v932 = vld [vmem:[%s925 + $0x30] sm:$0xff]
      %v933 = vld [vmem:[%s925 + $0x38] sm:$0xff]
      %v934 = vld [vmem:[%s925 + $0x40] sm:$0xff]
      %v935 = vld [vmem:[%s925 + $0x48] sm:$0xff]
      %v936 = vld [vmem:[%s925 + $0x50] sm:$0x1]
      %s937 = smul.u32 %s910, 8
      %s938 = scalar_lea.vmem %s4, %s937
      %v939 = vld [vmem:[%s938] sm:$0xff]
      %s940 = smul.u32 %s910, 128
      %s941 = scalar_lea.vmem %s5, %s940
      %v942 = vld [vmem:[%s941] sm:$0xff]
      %v943 = vld [vmem:[%s941 + $0x8] sm:$0xff]
      %v944 = vld [vmem:[%s941 + $0x10] sm:$0xff]
      %v945 = vld [vmem:[%s941 + $0x18] sm:$0xff]
      %v946 = vld [vmem:[%s941 + $0x20] sm:$0xff]
      %v947 = vld [vmem:[%s941 + $0x28] sm:$0xff]
      %v948 = vld [vmem:[%s941 + $0x30] sm:$0xff]
      %v949 = vld [vmem:[%s941 + $0x38] sm:$0xff]
      %v950 = vld [vmem:[%s941 + $0x40] sm:$0xff]
      %v951 = vld [vmem:[%s941 + $0x48] sm:$0xff]
      %v952 = vld [vmem:[%s941 + $0x50] sm:$0xff]
      %v953 = vld [vmem:[%s941 + $0x58] sm:$0xff]
      %v954 = vld [vmem:[%s941 + $0x60] sm:$0xff]
      %v955 = vld [vmem:[%s941 + $0x68] sm:$0xff]
      %v956 = vld [vmem:[%s941 + $0x70] sm:$0xff]
      %v957 = vld [vmem:[%s941 + $0x78] sm:$0xff]
      %v958 = vld [vmem:[#allocation2 + $0x4] sm:$0xff]
      %v959 = vld [vmem:[#allocation2 + $0x1c] sm:$0xff]
      %v960 = vld [vmem:[#allocation2 + $0x34] sm:$0xff]
      %v961 = vld [vmem:[#allocation2 + $0x4c] sm:$0xff]
      %v962 = vld [vmem:[#allocation2 + $0x64] sm:$0xff]
      %v963 = vld [vmem:[#allocation2 + $0x7c] sm:$0xff]
      %v964 = vld [vmem:[#allocation2 + $0x94] sm:$0xff]
      %v965 = vld [vmem:[#allocation2 + $0xac] sm:$0xff]
      %v966 = vlaneseq
      %v967 = vshrl.u32 %v966, 7
      %v968 = vsub.s32 0, %v967
      %v969 = vrot.slane %v926, %v968
      %v970 = vmul.f32 %v958, %v969
      %v971 = vmul.f32 %v959, %v969
      %v972 = vmul.f32 %v962, %v969
      %v973 = vmul.f32 %v963, %v969
      %974 = vrot.lane.b32.xlu0 %v958, 96
      %v975 = vpop.permute.xlu0 %974
      %976 = vrot.lane.b32.xlu0 %v959, 96
      %v977 = vpop.permute.xlu0 %976
      %978 = vrot.lane.b32.xlu0 %v962, 96
      %v979 = vpop.permute.xlu0 %978
      %980 = vrot.lane.b32.xlu0 %v963, 96
      %v981 = vpop.permute.xlu0 %980
      %982 = vrot.lane.b32.xlu0 %v960, 96
      %v983 = vpop.permute.xlu0 %982
      %984 = vrot.lane.b32.xlu0 %v964, 96
      %v985 = vpop.permute.xlu0 %984
      %v986 = vsel %vm32, %v975, %v977
      %v987 = vsel %vm32, %v977, %v983
      %v988 = vsel %vm32, %v979, %v981
      %v989 = vsel %vm32, %v981, %v985
      %v990 = vlaneseq
      %v991 = vshrl.u32 %v990, 7
      %v992 = vsub.s32 1, %v991
      %v993 = vrot.slane %v926, %v992
      %v994 = vmul.f32 %v986, %v993
      %v995 = vmul.f32 %v987, %v993
      %v996 = vmul.f32 %v988, %v993
      %v997 = vmul.f32 %v989, %v993
      %v998 = vadd.f32 %v970, %v994
      %v999 = vadd.f32 %v971, %v995
      %v1000 = vadd.f32 %v972, %v996
      %v1001 = vadd.f32 %v973, %v997
      %1002 = vrot.lane.b32.xlu0 %v958, 64
      %v1003 = vpop.permute.xlu0 %1002
      %1004 = vrot.lane.b32.xlu0 %v959, 64
      %v1005 = vpop.permute.xlu0 %1004
      %1006 = vrot.lane.b32.xlu0 %v962, 64
      %v1007 = vpop.permute.xlu0 %1006
      %1008 = vrot.lane.b32.xlu0 %v963, 64
      %v1009 = vpop.permute.xlu0 %1008
      %1010 = vrot.lane.b32.xlu0 %v960, 64
      %v1011 = vpop.permute.xlu0 %1010
      %1012 = vrot.lane.b32.xlu0 %v964, 64
      %v1013 = vpop.permute.xlu0 %1012
      %v1014 = vsel %vm33, %v1003, %v1005
      %v1015 = vsel %vm33, %v1005, %v1011
      %v1016 = vsel %vm33, %v1007, %v1009
      %v1017 = vsel %vm33, %v1009, %v1013
      %v1018 = vlaneseq
      %v1019 = vshrl.u32 %v1018, 7
      %v1020 = vsub.s32 2, %v1019
      %v1021 = vrot.slane %v926, %v1020
      %v1022 = vmul.f32 %v1014, %v1021
      %v1023 = vmul.f32 %v1015, %v1021
      %v1024 = vmul.f32 %v1016, %v1021
      %v1025 = vmul.f32 %v1017, %v1021
      %v1026 = vadd.f32 %v998, %v1022
      %v1027 = vadd.f32 %v999, %v1023
      %v1028 = vadd.f32 %v1000, %v1024
      %v1029 = vadd.f32 %v1001, %v1025
      %1030 = vrot.lane.b32.xlu0 %v958, 32
      %v1031 = vpop.permute.xlu0 %1030
      %1032 = vrot.lane.b32.xlu0 %v959, 32
      %v1033 = vpop.permute.xlu0 %1032
      %1034 = vrot.lane.b32.xlu0 %v962, 32
      %v1035 = vpop.permute.xlu0 %1034
      %1036 = vrot.lane.b32.xlu0 %v963, 32
      %v1037 = vpop.permute.xlu0 %1036
      %1038 = vrot.lane.b32.xlu0 %v960, 32
      %v1039 = vpop.permute.xlu0 %1038
      %1040 = vrot.lane.b32.xlu0 %v964, 32
      %v1041 = vpop.permute.xlu0 %1040
      %v1042 = vsel %vm34, %v1031, %v1033
      %v1043 = vsel %vm34, %v1033, %v1039
      %v1044 = vsel %vm34, %v1035, %v1037
      %v1045 = vsel %vm34, %v1037, %v1041
      %v1046 = vlaneseq
      %v1047 = vshrl.u32 %v1046, 7
      %v1048 = vsub.s32 3, %v1047
      %v1049 = vrot.slane %v926, %v1048
      %v1050 = vmul.f32 %v1042, %v1049
      %v1051 = vmul.f32 %v1043, %v1049
      %v1052 = vmul.f32 %v1044, %v1049
      %v1053 = vmul.f32 %v1045, %v1049
      %v1054 = vadd.f32 %v1026, %v1050
      %v1055 = vadd.f32 %v1027, %v1051
      %v1056 = vadd.f32 %v1028, %v1052
      %v1057 = vadd.f32 %v1029, %v1053
      %v1058 = vlaneseq
      %v1059 = vshrl.u32 %v1058, 7
      %v1060 = vsub.s32 4, %v1059
      %v1061 = vrot.slane %v926, %v1060
      %v1062 = vmul.f32 %v959, %v1061
      %v1063 = vmul.f32 %v960, %v1061
      %v1064 = vmul.f32 %v963, %v1061
      %v1065 = vmul.f32 %v964, %v1061
      %v1066 = vadd.f32 %v1054, %v1062
      %v1067 = vadd.f32 %v1055, %v1063
      %v1068 = vadd.f32 %v1056, %v1064
      %v1069 = vadd.f32 %v1057, %v1065
      %1070 = vrot.lane.b32.xlu0 %v961, 96
      %v1071 = vpop.permute.xlu0 %1070
      %1072 = vrot.lane.b32.xlu0 %v965, 96
      %v1073 = vpop.permute.xlu0 %1072
      %v1074 = vsel %vm32, %v983, %v1071
      %v1075 = vsel %vm32, %v985, %v1073
      %v1076 = vlaneseq
      %v1077 = vshrl.u32 %v1076, 7
      %v1078 = vsub.s32 5, %v1077
      %v1079 = vrot.slane %v926, %v1078
      %v1080 = vmul.f32 %v987, %v1079
      %v1081 = vmul.f32 %v1074, %v1079
      %v1082 = vmul.f32 %v989, %v1079
      %v1083 = vmul.f32 %v1075, %v1079
      %v1084 = vadd.f32 %v1066, %v1080
      %v1085 = vadd.f32 %v1067, %v1081
      %v1086 = vadd.f32 %v1068, %v1082
      %v1087 = vadd.f32 %v1069, %v1083
      %1088 = vrot.lane.b32.xlu0 %v961, 64
      %v1089 = vpop.permute.xlu0 %1088
      %1090 = vrot.lane.b32.xlu0 %v965, 64
      %v1091 = vpop.permute.xlu0 %1090
      %v1092 = vsel %vm33, %v1011, %v1089
      %v1093 = vsel %vm33, %v1013, %v1091
      %v1094 = vlaneseq
      %v1095 = vshrl.u32 %v1094, 7
      %v1096 = vsub.s32 6, %v1095
      %v1097 = vrot.slane %v926, %v1096
      %v1098 = vmul.f32 %v1015, %v1097
      %v1099 = vmul.f32 %v1092, %v1097
      %v1100 = vmul.f32 %v1017, %v1097
      %v1101 = vmul.f32 %v1093, %v1097
      %v1102 = vadd.f32 %v1084, %v1098
      %v1103 = vadd.f32 %v1085, %v1099
      %v1104 = vadd.f32 %v1086, %v1100
      %v1105 = vadd.f32 %v1087, %v1101
      %1106 = vrot.lane.b32.xlu0 %v961, 32
      %v1107 = vpop.permute.xlu0 %1106
      %1108 = vrot.lane.b32.xlu0 %v965, 32
      %v1109 = vpop.permute.xlu0 %1108
      %v1110 = vsel %vm34, %v1039, %v1107
      %v1111 = vsel %vm34, %v1041, %v1109
      %v1112 = vlaneseq
      %v1113 = vshrl.u32 %v1112, 7
      %v1114 = vsub.s32 7, %v1113
      %v1115 = vrot.slane %v926, %v1114
      %v1116 = vmul.f32 %v1043, %v1115
      %v1117 = vmul.f32 %v1110, %v1115
      %v1118 = vmul.f32 %v1045, %v1115
      %v1119 = vmul.f32 %v1111, %v1115
      %v1120 = vadd.f32 %v1102, %v1116
      %v1121 = vadd.f32 %v1103, %v1117
      %v1122 = vadd.f32 %v1104, %v1118
      %v1123 = vadd.f32 %v1105, %v1119
      %v1124 = vlaneseq
      %v1125 = vshrl.u32 %v1124, 7
      %v1126 = vsub.s32 0, %v1125
      %v1127 = vrot.slane %v927, %v1126
      %v1128 = vmul.f32 %v960, %v1127
      %v1129 = vmul.f32 %v961, %v1127
      %v1130 = vmul.f32 %v964, %v1127
      %v1131 = vmul.f32 %v965, %v1127
      %v1132 = vadd.f32 %v1120, %v1128
      %v1133 = vadd.f32 %v1121, %v1129
      %v1134 = vadd.f32 %v1122, %v1130
      %v1135 = vadd.f32 %v1123, %v1131
      %v1136 = vld [vmem:[#allocation2 + $0x5] sm:$0xff]
      %v1137 = vld [vmem:[#allocation2 + $0x1d] sm:$0xff]
      %v1138 = vld [vmem:[#allocation2 + $0x35] sm:$0xff]
      %v1139 = vld [vmem:[#allocation2 + $0x4d] sm:$0xff]
      %v1140 = vld [vmem:[#allocation2 + $0x65] sm:$0xff]
      %v1141 = vld [vmem:[#allocation2 + $0x7d] sm:$0xff]
      %v1142 = vld [vmem:[#allocation2 + $0x95] sm:$0xff]
      %v1143 = vld [vmem:[#allocation2 + $0xad] sm:$0xff]
      %v1144 = vlaneseq
      %v1145 = vshrl.u32 %v1144, 7
      %v1146 = vsub.s32 1, %v1145
      %v1147 = vrot.slane %v927, %v1146
      %v1148 = vmul.f32 %v1136, %v1147
      %v1149 = vmul.f32 %v1137, %v1147
      %v1150 = vmul.f32 %v1140, %v1147
      %v1151 = vmul.f32 %v1141, %v1147
      %1152 = vrot.lane.b32.xlu0 %v1136, 96
      %v1153 = vpop.permute.xlu0 %1152
      %1154 = vrot.lane.b32.xlu0 %v1137, 96
      %v1155 = vpop.permute.xlu0 %1154
      %1156 = vrot.lane.b32.xlu0 %v1140, 96
      %v1157 = vpop.permute.xlu0 %1156
      %1158 = vrot.lane.b32.xlu0 %v1141, 96
      %v1159 = vpop.permute.xlu0 %1158
      %1160 = vrot.lane.b32.xlu0 %v1138, 96
      %v1161 = vpop.permute.xlu0 %1160
      %1162 = vrot.lane.b32.xlu0 %v1142, 96
      %v1163 = vpop.permute.xlu0 %1162
      %v1164 = vsel %vm32, %v1153, %v1155
      %v1165 = vsel %vm32, %v1155, %v1161
      %v1166 = vsel %vm32, %v1157, %v1159
      %v1167 = vsel %vm32, %v1159, %v1163
      %v1168 = vlaneseq
      %v1169 = vshrl.u32 %v1168, 7
      %v1170 = vsub.s32 2, %v1169
      %v1171 = vrot.slane %v927, %v1170
      %v1172 = vmul.f32 %v1164, %v1171
      %v1173 = vmul.f32 %v1165, %v1171
      %v1174 = vmul.f32 %v1166, %v1171
      %v1175 = vmul.f32 %v1167, %v1171
      %v1176 = vadd.f32 %v1148, %v1172
      %v1177 = vadd.f32 %v1149, %v1173
      %v1178 = vadd.f32 %v1150, %v1174
      %v1179 = vadd.f32 %v1151, %v1175
      %1180 = vrot.lane.b32.xlu0 %v1136, 64
      %v1181 = vpop.permute.xlu0 %1180
      %1182 = vrot.lane.b32.xlu0 %v1137, 64
      %v1183 = vpop.permute.xlu0 %1182
      %1184 = vrot.lane.b32.xlu0 %v1140, 64
      %v1185 = vpop.permute.xlu0 %1184
      %1186 = vrot.lane.b32.xlu0 %v1141, 64
      %v1187 = vpop.permute.xlu0 %1186
      %1188 = vrot.lane.b32.xlu0 %v1138, 64
      %v1189 = vpop.permute.xlu0 %1188
      %1190 = vrot.lane.b32.xlu0 %v1142, 64
      %v1191 = vpop.permute.xlu0 %1190
      %v1192 = vsel %vm33, %v1181, %v1183
      %v1193 = vsel %vm33, %v1183, %v1189
      %v1194 = vsel %vm33, %v1185, %v1187
      %v1195 = vsel %vm33, %v1187, %v1191
      %v1196 = vlaneseq
      %v1197 = vshrl.u32 %v1196, 7
      %v1198 = vsub.s32 3, %v1197
      %v1199 = vrot.slane %v927, %v1198
      %v1200 = vmul.f32 %v1192, %v1199
      %v1201 = vmul.f32 %v1193, %v1199
      %v1202 = vmul.f32 %v1194, %v1199
      %v1203 = vmul.f32 %v1195, %v1199
      %v1204 = vadd.f32 %v1176, %v1200
      %v1205 = vadd.f32 %v1177, %v1201
      %v1206 = vadd.f32 %v1178, %v1202
      %v1207 = vadd.f32 %v1179, %v1203
      %1208 = vrot.lane.b32.xlu0 %v1136, 32
      %v1209 = vpop.permute.xlu0 %1208
      %1210 = vrot.lane.b32.xlu0 %v1137, 32
      %v1211 = vpop.permute.xlu0 %1210
      %1212 = vrot.lane.b32.xlu0 %v1140, 32
      %v1213 = vpop.permute.xlu0 %1212
      %1214 = vrot.lane.b32.xlu0 %v1141, 32
      %v1215 = vpop.permute.xlu0 %1214
      %1216 = vrot.lane.b32.xlu0 %v1138, 32
      %v1217 = vpop.permute.xlu0 %1216
      %1218 = vrot.lane.b32.xlu0 %v1142, 32
      %v1219 = vpop.permute.xlu0 %1218
      %v1220 = vsel %vm34, %v1209, %v1211
      %v1221 = vsel %vm34, %v1211, %v1217
      %v1222 = vsel %vm34, %v1213, %v1215
      %v1223 = vsel %vm34, %v1215, %v1219
      %v1224 = vlaneseq
      %v1225 = vshrl.u32 %v1224, 7
      %v1226 = vsub.s32 4, %v1225
      %v1227 = vrot.slane %v927, %v1226
      %v1228 = vmul.f32 %v1220, %v1227
      %v1229 = vmul.f32 %v1221, %v1227
      %v1230 = vmul.f32 %v1222, %v1227
      %v1231 = vmul.f32 %v1223, %v1227
      %v1232 = vadd.f32 %v1204, %v1228
      %v1233 = vadd.f32 %v1205, %v1229
      %v1234 = vadd.f32 %v1206, %v1230
      %v1235 = vadd.f32 %v1207, %v1231
      %v1236 = vlaneseq
      %v1237 = vshrl.u32 %v1236, 7
      %v1238 = vsub.s32 5, %v1237
      %v1239 = vrot.slane %v927, %v1238
      %v1240 = vmul.f32 %v1137, %v1239
      %v1241 = vmul.f32 %v1138, %v1239
      %v1242 = vmul.f32 %v1141, %v1239
      %v1243 = vmul.f32 %v1142, %v1239
      %v1244 = vadd.f32 %v1232, %v1240
      %v1245 = vadd.f32 %v1233, %v1241
      %v1246 = vadd.f32 %v1234, %v1242
      %v1247 = vadd.f32 %v1235, %v1243
      %1248 = vrot.lane.b32.xlu0 %v1139, 96
      %v1249 = vpop.permute.xlu0 %1248
      %1250 = vrot.lane.b32.xlu0 %v1143, 96
      %v1251 = vpop.permute.xlu0 %1250
      %v1252 = vsel %vm32, %v1161, %v1249
      %v1253 = vsel %vm32, %v1163, %v1251
      %v1254 = vlaneseq
      %v1255 = vshrl.u32 %v1254, 7
      %v1256 = vsub.s32 6, %v1255
      %v1257 = vrot.slane %v927, %v1256
      %v1258 = vmul.f32 %v1165, %v1257
      %v1259 = vmul.f32 %v1252, %v1257
      %v1260 = vmul.f32 %v1167, %v1257
      %v1261 = vmul.f32 %v1253, %v1257
      %v1262 = vadd.f32 %v1244, %v1258
      %v1263 = vadd.f32 %v1245, %v1259
      %v1264 = vadd.f32 %v1246, %v1260
      %v1265 = vadd.f32 %v1247, %v1261
      %1266 = vrot.lane.b32.xlu0 %v1139, 64
      %v1267 = vpop.permute.xlu0 %1266
      %1268 = vrot.lane.b32.xlu0 %v1143, 64
      %v1269 = vpop.permute.xlu0 %1268
      %v1270 = vsel %vm33, %v1189, %v1267
      %v1271 = vsel %vm33, %v1191, %v1269
      %v1272 = vlaneseq
      %v1273 = vshrl.u32 %v1272, 7
      %v1274 = vsub.s32 7, %v1273
      %v1275 = vrot.slane %v927, %v1274
      %v1276 = vmul.f32 %v1193, %v1275
      %v1277 = vmul.f32 %v1270, %v1275
      %v1278 = vmul.f32 %v1195, %v1275
      %v1279 = vmul.f32 %v1271, %v1275
      %v1280 = vadd.f32 %v1262, %v1276
      %v1281 = vadd.f32 %v1263, %v1277
      %v1282 = vadd.f32 %v1264, %v1278
      %v1283 = vadd.f32 %v1265, %v1279
      %1284 = vrot.lane.b32.xlu0 %v1139, 32
      %v1285 = vpop.permute.xlu0 %1284
      %1286 = vrot.lane.b32.xlu0 %v1143, 32
      %v1287 = vpop.permute.xlu0 %1286
      %v1288 = vsel %vm34, %v1217, %v1285
      %v1289 = vsel %vm34, %v1219, %v1287
      %v1290 = vlaneseq
      %v1291 = vshrl.u32 %v1290, 7
      %v1292 = vsub.s32 0, %v1291
      %v1293 = vrot.slane %v928, %v1292
      %v1294 = vmul.f32 %v1221, %v1293
      %v1295 = vmul.f32 %v1288, %v1293
      %v1296 = vmul.f32 %v1223, %v1293
      %v1297 = vmul.f32 %v1289, %v1293
      %v1298 = vadd.f32 %v1280, %v1294
      %v1299 = vadd.f32 %v1281, %v1295
      %v1300 = vadd.f32 %v1282, %v1296
      %v1301 = vadd.f32 %v1283, %v1297
      %v1302 = vlaneseq
      %v1303 = vshrl.u32 %v1302, 7
      %v1304 = vsub.s32 1, %v1303
      %v1305 = vrot.slane %v928, %v1304
      %v1306 = vmul.f32 %v1138, %v1305
      %v1307 = vmul.f32 %v1139, %v1305
      %v1308 = vmul.f32 %v1142, %v1305
      %v1309 = vmul.f32 %v1143, %v1305
      %v1310 = vadd.f32 %v1298, %v1306
      %v1311 = vadd.f32 %v1299, %v1307
      %v1312 = vadd.f32 %v1300, %v1308
      %v1313 = vadd.f32 %v1301, %v1309
      %v1314 = vld [vmem:[#allocation2 + $0x6] sm:$0xff]
      %v1315 = vld [vmem:[#allocation2 + $0x1e] sm:$0xff]
      %v1316 = vld [vmem:[#allocation2 + $0x36] sm:$0xff]
      %v1317 = vld [vmem:[#allocation2 + $0x4e] sm:$0xff]
      %v1318 = vld [vmem:[#allocation2 + $0x66] sm:$0xff]
      %v1319 = vld [vmem:[#allocation2 + $0x7e] sm:$0xff]
      %v1320 = vld [vmem:[#allocation2 + $0x96] sm:$0xff]
      %v1321 = vld [vmem:[#allocation2 + $0xae] sm:$0xff]
      %v1322 = vlaneseq
      %v1323 = vshrl.u32 %v1322, 7
      %v1324 = vsub.s32 2, %v1323
      %v1325 = vrot.slane %v928, %v1324
      %v1326 = vmul.f32 %v1314, %v1325
      %v1327 = vmul.f32 %v1315, %v1325
      %v1328 = vmul.f32 %v1318, %v1325
      %v1329 = vmul.f32 %v1319, %v1325
      %1330 = vrot.lane.b32.xlu0 %v1314, 96
      %v1331 = vpop.permute.xlu0 %1330
      %1332 = vrot.lane.b32.xlu0 %v1315, 96
      %v1333 = vpop.permute.xlu0 %1332
      %1334 = vrot.lane.b32.xlu0 %v1318, 96
      %v1335 = vpop.permute.xlu0 %1334
      %1336 = vrot.lane.b32.xlu0 %v1319, 96
      %v1337 = vpop.permute.xlu0 %1336
      %1338 = vrot.lane.b32.xlu0 %v1316, 96
      %v1339 = vpop.permute.xlu0 %1338
      %1340 = vrot.lane.b32.xlu0 %v1320, 96
      %v1341 = vpop.permute.xlu0 %1340
      %v1342 = vsel %vm32, %v1331, %v1333
      %v1343 = vsel %vm32, %v1333, %v1339
      %v1344 = vsel %vm32, %v1335, %v1337
      %v1345 = vsel %vm32, %v1337, %v1341
      %v1346 = vlaneseq
      %v1347 = vshrl.u32 %v1346, 7
      %v1348 = vsub.s32 3, %v1347
      %v1349 = vrot.slane %v928, %v1348
      %v1350 = vmul.f32 %v1342, %v1349
      %v1351 = vmul.f32 %v1343, %v1349
      %v1352 = vmul.f32 %v1344, %v1349
      %v1353 = vmul.f32 %v1345, %v1349
      %v1354 = vadd.f32 %v1326, %v1350
      %v1355 = vadd.f32 %v1327, %v1351
      %v1356 = vadd.f32 %v1328, %v1352
      %v1357 = vadd.f32 %v1329, %v1353
      %1358 = vrot.lane.b32.xlu0 %v1314, 64
      %v1359 = vpop.permute.xlu0 %1358
      %1360 = vrot.lane.b32.xlu0 %v1315, 64
      %v1361 = vpop.permute.xlu0 %1360
      %1362 = vrot.lane.b32.xlu0 %v1318, 64
      %v1363 = vpop.permute.xlu0 %1362
      %1364 = vrot.lane.b32.xlu0 %v1319, 64
      %v1365 = vpop.permute.xlu0 %1364
      %1366 = vrot.lane.b32.xlu0 %v1316, 64
      %v1367 = vpop.permute.xlu0 %1366
      %1368 = vrot.lane.b32.xlu0 %v1320, 64
      %v1369 = vpop.permute.xlu0 %1368
      %v1370 = vsel %vm33, %v1359, %v1361
      %v1371 = vsel %vm33, %v1361, %v1367
      %v1372 = vsel %vm33, %v1363, %v1365
      %v1373 = vsel %vm33, %v1365, %v1369
      %v1374 = vlaneseq
      %v1375 = vshrl.u32 %v1374, 7
      %v1376 = vsub.s32 4, %v1375
      %v1377 = vrot.slane %v928, %v1376
      %v1378 = vmul.f32 %v1370, %v1377
      %v1379 = vmul.f32 %v1371, %v1377
      %v1380 = vmul.f32 %v1372, %v1377
      %v1381 = vmul.f32 %v1373, %v1377
      %v1382 = vadd.f32 %v1354, %v1378
      %v1383 = vadd.f32 %v1355, %v1379
      %v1384 = vadd.f32 %v1356, %v1380
      %v1385 = vadd.f32 %v1357, %v1381
      %1386 = vrot.lane.b32.xlu0 %v1314, 32
      %v1387 = vpop.permute.xlu0 %1386
      %1388 = vrot.lane.b32.xlu0 %v1315, 32
      %v1389 = vpop.permute.xlu0 %1388
      %1390 = vrot.lane.b32.xlu0 %v1318, 32
      %v1391 = vpop.permute.xlu0 %1390
      %1392 = vrot.lane.b32.xlu0 %v1319, 32
      %v1393 = vpop.permute.xlu0 %1392
      %1394 = vrot.lane.b32.xlu0 %v1316, 32
      %v1395 = vpop.permute.xlu0 %1394
      %1396 = vrot.lane.b32.xlu0 %v1320, 32
      %v1397 = vpop.permute.xlu0 %1396
      %v1398 = vsel %vm34, %v1387, %v1389
      %v1399 = vsel %vm34, %v1389, %v1395
      %v1400 = vsel %vm34, %v1391, %v1393
      %v1401 = vsel %vm34, %v1393, %v1397
      %v1402 = vlaneseq
      %v1403 = vshrl.u32 %v1402, 7
      %v1404 = vsub.s32 5, %v1403
      %v1405 = vrot.slane %v928, %v1404
      %v1406 = vmul.f32 %v1398, %v1405
      %v1407 = vmul.f32 %v1399, %v1405
      %v1408 = vmul.f32 %v1400, %v1405
      %v1409 = vmul.f32 %v1401, %v1405
      %v1410 = vadd.f32 %v1382, %v1406
      %v1411 = vadd.f32 %v1383, %v1407
      %v1412 = vadd.f32 %v1384, %v1408
      %v1413 = vadd.f32 %v1385, %v1409
      %v1414 = vlaneseq
      %v1415 = vshrl.u32 %v1414, 7
      %v1416 = vsub.s32 6, %v1415
      %v1417 = vrot.slane %v928, %v1416
      %v1418 = vmul.f32 %v1315, %v1417
      %v1419 = vmul.f32 %v1316, %v1417
      %v1420 = vmul.f32 %v1319, %v1417
      %v1421 = vmul.f32 %v1320, %v1417
      %v1422 = vadd.f32 %v1410, %v1418
      %v1423 = vadd.f32 %v1411, %v1419
      %v1424 = vadd.f32 %v1412, %v1420
      %v1425 = vadd.f32 %v1413, %v1421
      %1426 = vrot.lane.b32.xlu0 %v1317, 96
      %v1427 = vpop.permute.xlu0 %1426
      %1428 = vrot.lane.b32.xlu0 %v1321, 96
      %v1429 = vpop.permute.xlu0 %1428
      %v1430 = vsel %vm32, %v1339, %v1427
      %v1431 = vsel %vm32, %v1341, %v1429
      %v1432 = vlaneseq
      %v1433 = vshrl.u32 %v1432, 7
      %v1434 = vsub.s32 7, %v1433
      %v1435 = vrot.slane %v928, %v1434
      %v1436 = vmul.f32 %v1343, %v1435
      %v1437 = vmul.f32 %v1430, %v1435
      %v1438 = vmul.f32 %v1345, %v1435
      %v1439 = vmul.f32 %v1431, %v1435
      %v1440 = vadd.f32 %v1422, %v1436
      %v1441 = vadd.f32 %v1423, %v1437
      %v1442 = vadd.f32 %v1424, %v1438
      %v1443 = vadd.f32 %v1425, %v1439
      %1444 = vrot.lane.b32.xlu0 %v1317, 64
      %v1445 = vpop.permute.xlu0 %1444
      %1446 = vrot.lane.b32.xlu0 %v1321, 64
      %v1447 = vpop.permute.xlu0 %1446
      %v1448 = vsel %vm33, %v1367, %v1445
      %v1449 = vsel %vm33, %v1369, %v1447
      %v1450 = vlaneseq
      %v1451 = vshrl.u32 %v1450, 7
      %v1452 = vsub.s32 0, %v1451
      %v1453 = vrot.slane %v929, %v1452
      %v1454 = vmul.f32 %v1371, %v1453
      %v1455 = vmul.f32 %v1448, %v1453
      %v1456 = vmul.f32 %v1373, %v1453
      %v1457 = vmul.f32 %v1449, %v1453
      %v1458 = vadd.f32 %v1440, %v1454
      %v1459 = vadd.f32 %v1441, %v1455
      %v1460 = vadd.f32 %v1442, %v1456
      %v1461 = vadd.f32 %v1443, %v1457
      %1462 = vrot.lane.b32.xlu0 %v1317, 32
      %v1463 = vpop.permute.xlu0 %1462
      %1464 = vrot.lane.b32.xlu0 %v1321, 32
      %v1465 = vpop.permute.xlu0 %1464
      %v1466 = vsel %vm34, %v1395, %v1463
      %v1467 = vsel %vm34, %v1397, %v1465
      %v1468 = vlaneseq
      %v1469 = vshrl.u32 %v1468, 7
      %v1470 = vsub.s32 1, %v1469
      %v1471 = vrot.slane %v929, %v1470
      %v1472 = vmul.f32 %v1399, %v1471
      %v1473 = vmul.f32 %v1466, %v1471
      %v1474 = vmul.f32 %v1401, %v1471
      %v1475 = vmul.f32 %v1467, %v1471
      %v1476 = vadd.f32 %v1458, %v1472
      %v1477 = vadd.f32 %v1459, %v1473
      %v1478 = vadd.f32 %v1460, %v1474
      %v1479 = vadd.f32 %v1461, %v1475
      %v1480 = vlaneseq
      %v1481 = vshrl.u32 %v1480, 7
      %v1482 = vsub.s32 2, %v1481
      %v1483 = vrot.slane %v929, %v1482
      %v1484 = vmul.f32 %v1316, %v1483
      %v1485 = vmul.f32 %v1317, %v1483
      %v1486 = vmul.f32 %v1320, %v1483
      %v1487 = vmul.f32 %v1321, %v1483
      %v1488 = vadd.f32 %v1476, %v1484
      %v1489 = vadd.f32 %v1477, %v1485
      %v1490 = vadd.f32 %v1478, %v1486
      %v1491 = vadd.f32 %v1479, %v1487
      %v1492 = vld [vmem:[#allocation2 + $0x7] sm:$0xff]
      %v1493 = vld [vmem:[#allocation2 + $0x1f] sm:$0xff]
      %v1494 = vld [vmem:[#allocation2 + $0x37] sm:$0xff]
      %v1495 = vld [vmem:[#allocation2 + $0x4f] sm:$0xff]
      %v1496 = vld [vmem:[#allocation2 + $0x67] sm:$0xff]
      %v1497 = vld [vmem:[#allocation2 + $0x7f] sm:$0xff]
      %v1498 = vld [vmem:[#allocation2 + $0x97] sm:$0xff]
      %v1499 = vld [vmem:[#allocation2 + $0xaf] sm:$0xff]
      %v1500 = vlaneseq
      %v1501 = vshrl.u32 %v1500, 7
      %v1502 = vsub.s32 3, %v1501
      %v1503 = vrot.slane %v929, %v1502
      %v1504 = vmul.f32 %v1492, %v1503
      %v1505 = vmul.f32 %v1493, %v1503
      %v1506 = vmul.f32 %v1496, %v1503
      %v1507 = vmul.f32 %v1497, %v1503
      %v1508 = vadd.f32 %v1132, %v1504
      %v1509 = vadd.f32 %v1133, %v1505
      %v1510 = vadd.f32 %v1134, %v1506
      %v1511 = vadd.f32 %v1135, %v1507
      %1512 = vrot.lane.b32.xlu0 %v1492, 96
      %v1513 = vpop.permute.xlu0 %1512
      %1514 = vrot.lane.b32.xlu0 %v1493, 96
      %v1515 = vpop.permute.xlu0 %1514
      %1516 = vrot.lane.b32.xlu0 %v1496, 96
      %v1517 = vpop.permute.xlu0 %1516
      %1518 = vrot.lane.b32.xlu0 %v1497, 96
      %v1519 = vpop.permute.xlu0 %1518
      %1520 = vrot.lane.b32.xlu0 %v1494, 96
      %v1521 = vpop.permute.xlu0 %1520
      %1522 = vrot.lane.b32.xlu0 %v1498, 96
      %v1523 = vpop.permute.xlu0 %1522
      %v1524 = vsel %vm32, %v1513, %v1515
      %v1525 = vsel %vm32, %v1515, %v1521
      %v1526 = vsel %vm32, %v1517, %v1519
      %v1527 = vsel %vm32, %v1519, %v1523
      %v1528 = vlaneseq
      %v1529 = vshrl.u32 %v1528, 7
      %v1530 = vsub.s32 4, %v1529
      %v1531 = vrot.slane %v929, %v1530
      %v1532 = vmul.f32 %v1524, %v1531
      %v1533 = vmul.f32 %v1525, %v1531
      %v1534 = vmul.f32 %v1526, %v1531
      %v1535 = vmul.f32 %v1527, %v1531
      %v1536 = vadd.f32 %v1508, %v1532
      %v1537 = vadd.f32 %v1509, %v1533
      %v1538 = vadd.f32 %v1510, %v1534
      %v1539 = vadd.f32 %v1511, %v1535
      %1540 = vrot.lane.b32.xlu0 %v1492, 64
      %v1541 = vpop.permute.xlu0 %1540
      %1542 = vrot.lane.b32.xlu0 %v1493, 64
      %v1543 = vpop.permute.xlu0 %1542
      %1544 = vrot.lane.b32.xlu0 %v1496, 64
      %v1545 = vpop.permute.xlu0 %1544
      %1546 = vrot.lane.b32.xlu0 %v1497, 64
      %v1547 = vpop.permute.xlu0 %1546
      %1548 = vrot.lane.b32.xlu0 %v1494, 64
      %v1549 = vpop.permute.xlu0 %1548
      %1550 = vrot.lane.b32.xlu0 %v1498, 64
      %v1551 = vpop.permute.xlu0 %1550
      %v1552 = vsel %vm33, %v1541, %v1543
      %v1553 = vsel %vm33, %v1543, %v1549
      %v1554 = vsel %vm33, %v1545, %v1547
      %v1555 = vsel %vm33, %v1547, %v1551
      %v1556 = vlaneseq
      %v1557 = vshrl.u32 %v1556, 7
      %v1558 = vsub.s32 5, %v1557
      %v1559 = vrot.slane %v929, %v1558
      %v1560 = vmul.f32 %v1552, %v1559
      %v1561 = vmul.f32 %v1553, %v1559
      %v1562 = vmul.f32 %v1554, %v1559
      %v1563 = vmul.f32 %v1555, %v1559
      %v1564 = vadd.f32 %v1536, %v1560
      %v1565 = vadd.f32 %v1537, %v1561
      %v1566 = vadd.f32 %v1538, %v1562
      %v1567 = vadd.f32 %v1539, %v1563
      %1568 = vrot.lane.b32.xlu0 %v1492, 32
      %v1569 = vpop.permute.xlu0 %1568
      %1570 = vrot.lane.b32.xlu0 %v1493, 32
      %v1571 = vpop.permute.xlu0 %1570
      %1572 = vrot.lane.b32.xlu0 %v1496, 32
      %v1573 = vpop.permute.xlu0 %1572
      %1574 = vrot.lane.b32.xlu0 %v1497, 32
      %v1575 = vpop.permute.xlu0 %1574
      %1576 = vrot.lane.b32.xlu0 %v1494, 32
      %v1577 = vpop.permute.xlu0 %1576
      %1578 = vrot.lane.b32.xlu0 %v1498, 32
      %v1579 = vpop.permute.xlu0 %1578
      %v1580 = vsel %vm34, %v1569, %v1571
      %v1581 = vsel %vm34, %v1571, %v1577
      %v1582 = vsel %vm34, %v1573, %v1575
      %v1583 = vsel %vm34, %v1575, %v1579
      %v1584 = vlaneseq
      %v1585 = vshrl.u32 %v1584, 7
      %v1586 = vsub.s32 6, %v1585
      %v1587 = vrot.slane %v929, %v1586
      %v1588 = vmul.f32 %v1580, %v1587
      %v1589 = vmul.f32 %v1581, %v1587
      %v1590 = vmul.f32 %v1582, %v1587
      %v1591 = vmul.f32 %v1583, %v1587
      %v1592 = vadd.f32 %v1564, %v1588
      %v1593 = vadd.f32 %v1565, %v1589
      %v1594 = vadd.f32 %v1566, %v1590
      %v1595 = vadd.f32 %v1567, %v1591
      %v1596 = vlaneseq
      %v1597 = vshrl.u32 %v1596, 7
      %v1598 = vsub.s32 7, %v1597
      %v1599 = vrot.slane %v929, %v1598
      %v1600 = vmul.f32 %v1493, %v1599
      %v1601 = vmul.f32 %v1494, %v1599
      %v1602 = vmul.f32 %v1497, %v1599
      %v1603 = vmul.f32 %v1498, %v1599
      %v1604 = vadd.f32 %v1592, %v1600
      %v1605 = vadd.f32 %v1593, %v1601
      %v1606 = vadd.f32 %v1594, %v1602
      %v1607 = vadd.f32 %v1595, %v1603
      %1608 = vrot.lane.b32.xlu0 %v1495, 96
      %v1609 = vpop.permute.xlu0 %1608
      %1610 = vrot.lane.b32.xlu0 %v1499, 96
      %v1611 = vpop.permute.xlu0 %1610
      %v1612 = vsel %vm32, %v1521, %v1609
      %v1613 = vsel %vm32, %v1523, %v1611
      %v1614 = vlaneseq
      %v1615 = vshrl.u32 %v1614, 7
      %v1616 = vsub.s32 0, %v1615
      %v1617 = vrot.slane %v930, %v1616
      %v1618 = vmul.f32 %v1525, %v1617
      %v1619 = vmul.f32 %v1612, %v1617
      %v1620 = vmul.f32 %v1527, %v1617
      %v1621 = vmul.f32 %v1613, %v1617
      %v1622 = vadd.f32 %v1604, %v1618
      %v1623 = vadd.f32 %v1605, %v1619
      %v1624 = vadd.f32 %v1606, %v1620
      %v1625 = vadd.f32 %v1607, %v1621
      %1626 = vrot.lane.b32.xlu0 %v1495, 64
      %v1627 = vpop.permute.xlu0 %1626
      %1628 = vrot.lane.b32.xlu0 %v1499, 64
      %v1629 = vpop.permute.xlu0 %1628
      %v1630 = vsel %vm33, %v1549, %v1627
      %v1631 = vsel %vm33, %v1551, %v1629
      %v1632 = vlaneseq
      %v1633 = vshrl.u32 %v1632, 7
      %v1634 = vsub.s32 1, %v1633
      %v1635 = vrot.slane %v930, %v1634
      %v1636 = vmul.f32 %v1553, %v1635
      %v1637 = vmul.f32 %v1630, %v1635
      %v1638 = vmul.f32 %v1555, %v1635
      %v1639 = vmul.f32 %v1631, %v1635
      %v1640 = vadd.f32 %v1622, %v1636
      %v1641 = vadd.f32 %v1623, %v1637
      %v1642 = vadd.f32 %v1624, %v1638
      %v1643 = vadd.f32 %v1625, %v1639
      %1644 = vrot.lane.b32.xlu0 %v1495, 32
      %v1645 = vpop.permute.xlu0 %1644
      %1646 = vrot.lane.b32.xlu0 %v1499, 32
      %v1647 = vpop.permute.xlu0 %1646
      %v1648 = vsel %vm34, %v1577, %v1645
      %v1649 = vsel %vm34, %v1579, %v1647
      %v1650 = vlaneseq
      %v1651 = vshrl.u32 %v1650, 7
      %v1652 = vsub.s32 2, %v1651
      %v1653 = vrot.slane %v930, %v1652
      %v1654 = vmul.f32 %v1581, %v1653
      %v1655 = vmul.f32 %v1648, %v1653
      %v1656 = vmul.f32 %v1583, %v1653
      %v1657 = vmul.f32 %v1649, %v1653
      %v1658 = vadd.f32 %v1640, %v1654
      %v1659 = vadd.f32 %v1641, %v1655
      %v1660 = vadd.f32 %v1642, %v1656
      %v1661 = vadd.f32 %v1643, %v1657
      %v1662 = vlaneseq
      %v1663 = vshrl.u32 %v1662, 7
      %v1664 = vsub.s32 3, %v1663
      %v1665 = vrot.slane %v930, %v1664
      %v1666 = vmul.f32 %v1494, %v1665
      %v1667 = vmul.f32 %v1495, %v1665
      %v1668 = vmul.f32 %v1498, %v1665
      %v1669 = vmul.f32 %v1499, %v1665
      %v1670 = vadd.f32 %v1658, %v1666
      %v1671 = vadd.f32 %v1659, %v1667
      %v1672 = vadd.f32 %v1660, %v1668
      %v1673 = vadd.f32 %v1661, %v1669
      %v1674 = vld [vmem:[#allocation2 + $0x8] sm:$0xff]
      %v1675 = vld [vmem:[#allocation2 + $0x20] sm:$0xff]
      %v1676 = vld [vmem:[#allocation2 + $0x38] sm:$0xff]
      %v1677 = vld [vmem:[#allocation2 + $0x50] sm:$0xff]
      %v1678 = vld [vmem:[#allocation2 + $0x68] sm:$0xff]
      %v1679 = vld [vmem:[#allocation2 + $0x80] sm:$0xff]
      %v1680 = vld [vmem:[#allocation2 + $0x98] sm:$0xff]
      %v1681 = vld [vmem:[#allocation2 + $0xb0] sm:$0xff]
      %v1682 = vlaneseq
      %v1683 = vshrl.u32 %v1682, 7
      %v1684 = vsub.s32 4, %v1683
      %v1685 = vrot.slane %v930, %v1684
      %v1686 = vmul.f32 %v1674, %v1685
      %v1687 = vmul.f32 %v1675, %v1685
      %v1688 = vmul.f32 %v1678, %v1685
      %v1689 = vmul.f32 %v1679, %v1685
      %v1690 = vadd.f32 %v1310, %v1686
      %v1691 = vadd.f32 %v1311, %v1687
      %v1692 = vadd.f32 %v1312, %v1688
      %v1693 = vadd.f32 %v1313, %v1689
      %1694 = vrot.lane.b32.xlu0 %v1674, 96
      %v1695 = vpop.permute.xlu0 %1694
      %1696 = vrot.lane.b32.xlu0 %v1675, 96
      %v1697 = vpop.permute.xlu0 %1696
      %1698 = vrot.lane.b32.xlu0 %v1678, 96
      %v1699 = vpop.permute.xlu0 %1698
      %1700 = vrot.lane.b32.xlu0 %v1679, 96
      %v1701 = vpop.permute.xlu0 %1700
      %1702 = vrot.lane.b32.xlu0 %v1676, 96
      %v1703 = vpop.permute.xlu0 %1702
      %1704 = vrot.lane.b32.xlu0 %v1680, 96
      %v1705 = vpop.permute.xlu0 %1704
      %v1706 = vsel %vm32, %v1695, %v1697
      %v1707 = vsel %vm32, %v1697, %v1703
      %v1708 = vsel %vm32, %v1699, %v1701
      %v1709 = vsel %vm32, %v1701, %v1705
      %v1710 = vlaneseq
      %v1711 = vshrl.u32 %v1710, 7
      %v1712 = vsub.s32 5, %v1711
      %v1713 = vrot.slane %v930, %v1712
      %v1714 = vmul.f32 %v1706, %v1713
      %v1715 = vmul.f32 %v1707, %v1713
      %v1716 = vmul.f32 %v1708, %v1713
      %v1717 = vmul.f32 %v1709, %v1713
      %v1718 = vadd.f32 %v1690, %v1714
      %v1719 = vadd.f32 %v1691, %v1715
      %v1720 = vadd.f32 %v1692, %v1716
      %v1721 = vadd.f32 %v1693, %v1717
      %1722 = vrot.lane.b32.xlu0 %v1674, 64
      %v1723 = vpop.permute.xlu0 %1722
      %1724 = vrot.lane.b32.xlu0 %v1675, 64
      %v1725 = vpop.permute.xlu0 %1724
      %1726 = vrot.lane.b32.xlu0 %v1678, 64
      %v1727 = vpop.permute.xlu0 %1726
      %1728 = vrot.lane.b32.xlu0 %v1679, 64
      %v1729 = vpop.permute.xlu0 %1728
      %1730 = vrot.lane.b32.xlu0 %v1676, 64
      %v1731 = vpop.permute.xlu0 %1730
      %1732 = vrot.lane.b32.xlu0 %v1680, 64
      %v1733 = vpop.permute.xlu0 %1732
      %v1734 = vsel %vm33, %v1723, %v1725
      %v1735 = vsel %vm33, %v1725, %v1731
      %v1736 = vsel %vm33, %v1727, %v1729
      %v1737 = vsel %vm33, %v1729, %v1733
      %v1738 = vlaneseq
      %v1739 = vshrl.u32 %v1738, 7
      %v1740 = vsub.s32 6, %v1739
      %v1741 = vrot.slane %v930, %v1740
      %v1742 = vmul.f32 %v1734, %v1741
      %v1743 = vmul.f32 %v1735, %v1741
      %v1744 = vmul.f32 %v1736, %v1741
      %v1745 = vmul.f32 %v1737, %v1741
      %v1746 = vadd.f32 %v1718, %v1742
      %v1747 = vadd.f32 %v1719, %v1743
      %v1748 = vadd.f32 %v1720, %v1744
      %v1749 = vadd.f32 %v1721, %v1745
      %1750 = vrot.lane.b32.xlu0 %v1674, 32
      %v1751 = vpop.permute.xlu0 %1750
      %1752 = vrot.lane.b32.xlu0 %v1675, 32
      %v1753 = vpop.permute.xlu0 %1752
      %1754 = vrot.lane.b32.xlu0 %v1678, 32
      %v1755 = vpop.permute.xlu0 %1754
      %1756 = vrot.lane.b32.xlu0 %v1679, 32
      %v1757 = vpop.permute.xlu0 %1756
      %1758 = vrot.lane.b32.xlu0 %v1676, 32
      %v1759 = vpop.permute.xlu0 %1758
      %1760 = vrot.lane.b32.xlu0 %v1680, 32
      %v1761 = vpop.permute.xlu0 %1760
      %v1762 = vsel %vm34, %v1751, %v1753
      %v1763 = vsel %vm34, %v1753, %v1759
      %v1764 = vsel %vm34, %v1755, %v1757
      %v1765 = vsel %vm34, %v1757, %v1761
      %v1766 = vlaneseq
      %v1767 = vshrl.u32 %v1766, 7
      %v1768 = vsub.s32 7, %v1767
      %v1769 = vrot.slane %v930, %v1768
      %v1770 = vmul.f32 %v1762, %v1769
      %v1771 = vmul.f32 %v1763, %v1769
      %v1772 = vmul.f32 %v1764, %v1769
      %v1773 = vmul.f32 %v1765, %v1769
      %v1774 = vadd.f32 %v1746, %v1770
      %v1775 = vadd.f32 %v1747, %v1771
      %v1776 = vadd.f32 %v1748, %v1772
      %v1777 = vadd.f32 %v1749, %v1773
      %v1778 = vlaneseq
      %v1779 = vshrl.u32 %v1778, 7
      %v1780 = vsub.s32 0, %v1779
      %v1781 = vrot.slane %v931, %v1780
      %v1782 = vmul.f32 %v1675, %v1781
      %v1783 = vmul.f32 %v1676, %v1781
      %v1784 = vmul.f32 %v1679, %v1781
      %v1785 = vmul.f32 %v1680, %v1781
      %v1786 = vadd.f32 %v1774, %v1782
      %v1787 = vadd.f32 %v1775, %v1783
      %v1788 = vadd.f32 %v1776, %v1784
      %v1789 = vadd.f32 %v1777, %v1785
      %1790 = vrot.lane.b32.xlu0 %v1677, 96
      %v1791 = vpop.permute.xlu0 %1790
      %1792 = vrot.lane.b32.xlu0 %v1681, 96
      %v1793 = vpop.permute.xlu0 %1792
      %v1794 = vsel %vm32, %v1703, %v1791
      %v1795 = vsel %vm32, %v1705, %v1793
      %v1796 = vlaneseq
      %v1797 = vshrl.u32 %v1796, 7
      %v1798 = vsub.s32 1, %v1797
      %v1799 = vrot.slane %v931, %v1798
      %v1800 = vmul.f32 %v1707, %v1799
      %v1801 = vmul.f32 %v1794, %v1799
      %v1802 = vmul.f32 %v1709, %v1799
      %v1803 = vmul.f32 %v1795, %v1799
      %v1804 = vadd.f32 %v1786, %v1800
      %v1805 = vadd.f32 %v1787, %v1801
      %v1806 = vadd.f32 %v1788, %v1802
      %v1807 = vadd.f32 %v1789, %v1803
      %1808 = vrot.lane.b32.xlu0 %v1677, 64
      %v1809 = vpop.permute.xlu0 %1808
      %1810 = vrot.lane.b32.xlu0 %v1681, 64
      %v1811 = vpop.permute.xlu0 %1810
      %v1812 = vsel %vm33, %v1731, %v1809
      %v1813 = vsel %vm33, %v1733, %v1811
      %v1814 = vlaneseq
      %v1815 = vshrl.u32 %v1814, 7
      %v1816 = vsub.s32 2, %v1815
      %v1817 = vrot.slane %v931, %v1816
      %v1818 = vmul.f32 %v1735, %v1817
      %v1819 = vmul.f32 %v1812, %v1817
      %v1820 = vmul.f32 %v1737, %v1817
      %v1821 = vmul.f32 %v1813, %v1817
      %v1822 = vadd.f32 %v1804, %v1818
      %v1823 = vadd.f32 %v1805, %v1819
      %v1824 = vadd.f32 %v1806, %v1820
      %v1825 = vadd.f32 %v1807, %v1821
      %1826 = vrot.lane.b32.xlu0 %v1677, 32
      %v1827 = vpop.permute.xlu0 %1826
      %1828 = vrot.lane.b32.xlu0 %v1681, 32
      %v1829 = vpop.permute.xlu0 %1828
      %v1830 = vsel %vm34, %v1759, %v1827
      %v1831 = vsel %vm34, %v1761, %v1829
      %v1832 = vlaneseq
      %v1833 = vshrl.u32 %v1832, 7
      %v1834 = vsub.s32 3, %v1833
      %v1835 = vrot.slane %v931, %v1834
      %v1836 = vmul.f32 %v1763, %v1835
      %v1837 = vmul.f32 %v1830, %v1835
      %v1838 = vmul.f32 %v1765, %v1835
      %v1839 = vmul.f32 %v1831, %v1835
      %v1840 = vadd.f32 %v1822, %v1836
      %v1841 = vadd.f32 %v1823, %v1837
      %v1842 = vadd.f32 %v1824, %v1838
      %v1843 = vadd.f32 %v1825, %v1839
      %v1844 = vlaneseq
      %v1845 = vshrl.u32 %v1844, 7
      %v1846 = vsub.s32 4, %v1845
      %v1847 = vrot.slane %v931, %v1846
      %v1848 = vmul.f32 %v1676, %v1847
      %v1849 = vmul.f32 %v1677, %v1847
      %v1850 = vmul.f32 %v1680, %v1847
      %v1851 = vmul.f32 %v1681, %v1847
      %v1852 = vadd.f32 %v1840, %v1848
      %v1853 = vadd.f32 %v1841, %v1849
      %v1854 = vadd.f32 %v1842, %v1850
      %v1855 = vadd.f32 %v1843, %v1851
      %v1856 = vld [vmem:[#allocation2 + $0x9] sm:$0xff]
      %v1857 = vld [vmem:[#allocation2 + $0x21] sm:$0xff]
      %v1858 = vld [vmem:[#allocation2 + $0x39] sm:$0xff]
      %v1859 = vld [vmem:[#allocation2 + $0x51] sm:$0xff]
      %v1860 = vld [vmem:[#allocation2 + $0x69] sm:$0xff]
      %v1861 = vld [vmem:[#allocation2 + $0x81] sm:$0xff]
      %v1862 = vld [vmem:[#allocation2 + $0x99] sm:$0xff]
      %v1863 = vld [vmem:[#allocation2 + $0xb1] sm:$0xff]
      %v1864 = vlaneseq
      %v1865 = vshrl.u32 %v1864, 7
      %v1866 = vsub.s32 5, %v1865
      %v1867 = vrot.slane %v931, %v1866
      %v1868 = vmul.f32 %v1856, %v1867
      %v1869 = vmul.f32 %v1857, %v1867
      %v1870 = vmul.f32 %v1860, %v1867
      %v1871 = vmul.f32 %v1861, %v1867
      %v1872 = vadd.f32 %v1488, %v1868
      %v1873 = vadd.f32 %v1489, %v1869
      %v1874 = vadd.f32 %v1490, %v1870
      %v1875 = vadd.f32 %v1491, %v1871
      %1876 = vrot.lane.b32.xlu0 %v1856, 96
      %v1877 = vpop.permute.xlu0 %1876
      %1878 = vrot.lane.b32.xlu0 %v1857, 96
      %v1879 = vpop.permute.xlu0 %1878
      %1880 = vrot.lane.b32.xlu0 %v1860, 96
      %v1881 = vpop.permute.xlu0 %1880
      %1882 = vrot.lane.b32.xlu0 %v1861, 96
      %v1883 = vpop.permute.xlu0 %1882
      %1884 = vrot.lane.b32.xlu0 %v1858, 96
      %v1885 = vpop.permute.xlu0 %1884
      %1886 = vrot.lane.b32.xlu0 %v1862, 96
      %v1887 = vpop.permute.xlu0 %1886
      %v1888 = vsel %vm32, %v1877, %v1879
      %v1889 = vsel %vm32, %v1879, %v1885
      %v1890 = vsel %vm32, %v1881, %v1883
      %v1891 = vsel %vm32, %v1883, %v1887
      %v1892 = vlaneseq
      %v1893 = vshrl.u32 %v1892, 7
      %v1894 = vsub.s32 6, %v1893
      %v1895 = vrot.slane %v931, %v1894
      %v1896 = vmul.f32 %v1888, %v1895
      %v1897 = vmul.f32 %v1889, %v1895
      %v1898 = vmul.f32 %v1890, %v1895
      %v1899 = vmul.f32 %v1891, %v1895
      %v1900 = vadd.f32 %v1872, %v1896
      %v1901 = vadd.f32 %v1873, %v1897
      %v1902 = vadd.f32 %v1874, %v1898
      %v1903 = vadd.f32 %v1875, %v1899
      %1904 = vrot.lane.b32.xlu0 %v1856, 64
      %v1905 = vpop.permute.xlu0 %1904
      %1906 = vrot.lane.b32.xlu0 %v1857, 64
      %v1907 = vpop.permute.xlu0 %1906
      %1908 = vrot.lane.b32.xlu0 %v1860, 64
      %v1909 = vpop.permute.xlu0 %1908
      %1910 = vrot.lane.b32.xlu0 %v1861, 64
      %v1911 = vpop.permute.xlu0 %1910
      %1912 = vrot.lane.b32.xlu0 %v1858, 64
      %v1913 = vpop.permute.xlu0 %1912
      %1914 = vrot.lane.b32.xlu0 %v1862, 64
      %v1915 = vpop.permute.xlu0 %1914
      %v1916 = vsel %vm33, %v1905, %v1907
      %v1917 = vsel %vm33, %v1907, %v1913
      %v1918 = vsel %vm33, %v1909, %v1911
      %v1919 = vsel %vm33, %v1911, %v1915
      %v1920 = vlaneseq
      %v1921 = vshrl.u32 %v1920, 7
      %v1922 = vsub.s32 7, %v1921
      %v1923 = vrot.slane %v931, %v1922
      %v1924 = vmul.f32 %v1916, %v1923
      %v1925 = vmul.f32 %v1917, %v1923
      %v1926 = vmul.f32 %v1918, %v1923
      %v1927 = vmul.f32 %v1919, %v1923
      %v1928 = vadd.f32 %v1900, %v1924
      %v1929 = vadd.f32 %v1901, %v1925
      %v1930 = vadd.f32 %v1902, %v1926
      %v1931 = vadd.f32 %v1903, %v1927
      %1932 = vrot.lane.b32.xlu0 %v1856, 32
      %v1933 = vpop.permute.xlu0 %1932
      %1934 = vrot.lane.b32.xlu0 %v1857, 32
      %v1935 = vpop.permute.xlu0 %1934
      %1936 = vrot.lane.b32.xlu0 %v1860, 32
      %v1937 = vpop.permute.xlu0 %1936
      %1938 = vrot.lane.b32.xlu0 %v1861, 32
      %v1939 = vpop.permute.xlu0 %1938
      %1940 = vrot.lane.b32.xlu0 %v1858, 32
      %v1941 = vpop.permute.xlu0 %1940
      %1942 = vrot.lane.b32.xlu0 %v1862, 32
      %v1943 = vpop.permute.xlu0 %1942
      %v1944 = vsel %vm34, %v1933, %v1935
      %v1945 = vsel %vm34, %v1935, %v1941
      %v1946 = vsel %vm34, %v1937, %v1939
      %v1947 = vsel %vm34, %v1939, %v1943
      %v1948 = vlaneseq
      %v1949 = vshrl.u32 %v1948, 7
      %v1950 = vsub.s32 0, %v1949
      %v1951 = vrot.slane %v932, %v1950
      %v1952 = vmul.f32 %v1944, %v1951
      %v1953 = vmul.f32 %v1945, %v1951
      %v1954 = vmul.f32 %v1946, %v1951
      %v1955 = vmul.f32 %v1947, %v1951
      %v1956 = vadd.f32 %v1928, %v1952
      %v1957 = vadd.f32 %v1929, %v1953
      %v1958 = vadd.f32 %v1930, %v1954
      %v1959 = vadd.f32 %v1931, %v1955
      %v1960 = vlaneseq
      %v1961 = vshrl.u32 %v1960, 7
      %v1962 = vsub.s32 1, %v1961
      %v1963 = vrot.slane %v932, %v1962
      %v1964 = vmul.f32 %v1857, %v1963
      %v1965 = vmul.f32 %v1858, %v1963
      %v1966 = vmul.f32 %v1861, %v1963
      %v1967 = vmul.f32 %v1862, %v1963
      %v1968 = vadd.f32 %v1956, %v1964
      %v1969 = vadd.f32 %v1957, %v1965
      %v1970 = vadd.f32 %v1958, %v1966
      %v1971 = vadd.f32 %v1959, %v1967
      %1972 = vrot.lane.b32.xlu0 %v1859, 96
      %v1973 = vpop.permute.xlu0 %1972
      %1974 = vrot.lane.b32.xlu0 %v1863, 96
      %v1975 = vpop.permute.xlu0 %1974
      %v1976 = vsel %vm32, %v1885, %v1973
      %v1977 = vsel %vm32, %v1887, %v1975
      %v1978 = vlaneseq
      %v1979 = vshrl.u32 %v1978, 7
      %v1980 = vsub.s32 2, %v1979
      %v1981 = vrot.slane %v932, %v1980
      %v1982 = vmul.f32 %v1889, %v1981
      %v1983 = vmul.f32 %v1976, %v1981
      %v1984 = vmul.f32 %v1891, %v1981
      %v1985 = vmul.f32 %v1977, %v1981
      %v1986 = vadd.f32 %v1968, %v1982
      %v1987 = vadd.f32 %v1969, %v1983
      %v1988 = vadd.f32 %v1970, %v1984
      %v1989 = vadd.f32 %v1971, %v1985
      %1990 = vrot.lane.b32.xlu0 %v1859, 64
      %v1991 = vpop.permute.xlu0 %1990
      %1992 = vrot.lane.b32.xlu0 %v1863, 64
      %v1993 = vpop.permute.xlu0 %1992
      %v1994 = vsel %vm33, %v1913, %v1991
      %v1995 = vsel %vm33, %v1915, %v1993
      %v1996 = vlaneseq
      %v1997 = vshrl.u32 %v1996, 7
      %v1998 = vsub.s32 3, %v1997
      %v1999 = vrot.slane %v932, %v1998
      %v2000 = vmul.f32 %v1917, %v1999
      %v2001 = vmul.f32 %v1994, %v1999
      %v2002 = vmul.f32 %v1919, %v1999
      %v2003 = vmul.f32 %v1995, %v1999
      %v2004 = vadd.f32 %v1986, %v2000
      %v2005 = vadd.f32 %v1987, %v2001
      %v2006 = vadd.f32 %v1988, %v2002
      %v2007 = vadd.f32 %v1989, %v2003
      %2008 = vrot.lane.b32.xlu0 %v1859, 32
      %v2009 = vpop.permute.xlu0 %2008
      %2010 = vrot.lane.b32.xlu0 %v1863, 32
      %v2011 = vpop.permute.xlu0 %2010
      %v2012 = vsel %vm34, %v1941, %v2009
      %v2013 = vsel %vm34, %v1943, %v2011
      %v2014 = vlaneseq
      %v2015 = vshrl.u32 %v2014, 7
      %v2016 = vsub.s32 4, %v2015
      %v2017 = vrot.slane %v932, %v2016
      %v2018 = vmul.f32 %v1945, %v2017
      %v2019 = vmul.f32 %v2012, %v2017
      %v2020 = vmul.f32 %v1947, %v2017
      %v2021 = vmul.f32 %v2013, %v2017
      %v2022 = vadd.f32 %v2004, %v2018
      %v2023 = vadd.f32 %v2005, %v2019
      %v2024 = vadd.f32 %v2006, %v2020
      %v2025 = vadd.f32 %v2007, %v2021
      %v2026 = vlaneseq
      %v2027 = vshrl.u32 %v2026, 7
      %v2028 = vsub.s32 5, %v2027
      %v2029 = vrot.slane %v932, %v2028
      %v2030 = vmul.f32 %v1858, %v2029
      %v2031 = vmul.f32 %v1859, %v2029
      %v2032 = vmul.f32 %v1862, %v2029
      %v2033 = vmul.f32 %v1863, %v2029
      %v2034 = vadd.f32 %v2022, %v2030
      %v2035 = vadd.f32 %v2023, %v2031
      %v2036 = vadd.f32 %v2024, %v2032
      %v2037 = vadd.f32 %v2025, %v2033
      %v2038 = vld [vmem:[#allocation2 + $0xa] sm:$0xff]
      %v2039 = vld [vmem:[#allocation2 + $0x22] sm:$0xff]
      %v2040 = vld [vmem:[#allocation2 + $0x3a] sm:$0xff]
      %v2041 = vld [vmem:[#allocation2 + $0x52] sm:$0xff]
      %v2042 = vld [vmem:[#allocation2 + $0x6a] sm:$0xff]
      %v2043 = vld [vmem:[#allocation2 + $0x82] sm:$0xff]
      %v2044 = vld [vmem:[#allocation2 + $0x9a] sm:$0xff]
      %v2045 = vld [vmem:[#allocation2 + $0xb2] sm:$0xff]
      %v2046 = vlaneseq
      %v2047 = vshrl.u32 %v2046, 7
      %v2048 = vsub.s32 6, %v2047
      %v2049 = vrot.slane %v932, %v2048
      %v2050 = vmul.f32 %v2038, %v2049
      %v2051 = vmul.f32 %v2039, %v2049
      %v2052 = vmul.f32 %v2042, %v2049
      %v2053 = vmul.f32 %v2043, %v2049
      %v2054 = vadd.f32 %v1670, %v2050
      %v2055 = vadd.f32 %v1671, %v2051
      %v2056 = vadd.f32 %v1672, %v2052
      %v2057 = vadd.f32 %v1673, %v2053
      %2058 = vrot.lane.b32.xlu0 %v2038, 96
      %v2059 = vpop.permute.xlu0 %2058
      %2060 = vrot.lane.b32.xlu0 %v2039, 96
      %v2061 = vpop.permute.xlu0 %2060
      %2062 = vrot.lane.b32.xlu0 %v2042, 96
      %v2063 = vpop.permute.xlu0 %2062
      %2064 = vrot.lane.b32.xlu0 %v2043, 96
      %v2065 = vpop.permute.xlu0 %2064
      %2066 = vrot.lane.b32.xlu0 %v2040, 96
      %v2067 = vpop.permute.xlu0 %2066
      %2068 = vrot.lane.b32.xlu0 %v2044, 96
      %v2069 = vpop.permute.xlu0 %2068
      %v2070 = vsel %vm32, %v2059, %v2061
      %v2071 = vsel %vm32, %v2061, %v2067
      %v2072 = vsel %vm32, %v2063, %v2065
      %v2073 = vsel %vm32, %v2065, %v2069
      %v2074 = vlaneseq
      %v2075 = vshrl.u32 %v2074, 7
      %v2076 = vsub.s32 7, %v2075
      %v2077 = vrot.slane %v932, %v2076
      %v2078 = vmul.f32 %v2070, %v2077
      %v2079 = vmul.f32 %v2071, %v2077
      %v2080 = vmul.f32 %v2072, %v2077
      %v2081 = vmul.f32 %v2073, %v2077
      %v2082 = vadd.f32 %v2054, %v2078
      %v2083 = vadd.f32 %v2055, %v2079
      %v2084 = vadd.f32 %v2056, %v2080
      %v2085 = vadd.f32 %v2057, %v2081
      %2086 = vrot.lane.b32.xlu0 %v2038, 64
      %v2087 = vpop.permute.xlu0 %2086
      %2088 = vrot.lane.b32.xlu0 %v2039, 64
      %v2089 = vpop.permute.xlu0 %2088
      %2090 = vrot.lane.b32.xlu0 %v2042, 64
      %v2091 = vpop.permute.xlu0 %2090
      %2092 = vrot.lane.b32.xlu0 %v2043, 64
      %v2093 = vpop.permute.xlu0 %2092
      %2094 = vrot.lane.b32.xlu0 %v2040, 64
      %v2095 = vpop.permute.xlu0 %2094
      %2096 = vrot.lane.b32.xlu0 %v2044, 64
      %v2097 = vpop.permute.xlu0 %2096
      %v2098 = vsel %vm33, %v2087, %v2089
      %v2099 = vsel %vm33, %v2089, %v2095
      %v2100 = vsel %vm33, %v2091, %v2093
      %v2101 = vsel %vm33, %v2093, %v2097
      %v2102 = vlaneseq
      %v2103 = vshrl.u32 %v2102, 7
      %v2104 = vsub.s32 0, %v2103
      %v2105 = vrot.slane %v933, %v2104
      %v2106 = vmul.f32 %v2098, %v2105
      %v2107 = vmul.f32 %v2099, %v2105
      %v2108 = vmul.f32 %v2100, %v2105
      %v2109 = vmul.f32 %v2101, %v2105
      %v2110 = vadd.f32 %v2082, %v2106
      %v2111 = vadd.f32 %v2083, %v2107
      %v2112 = vadd.f32 %v2084, %v2108
      %v2113 = vadd.f32 %v2085, %v2109
      %2114 = vrot.lane.b32.xlu0 %v2038, 32
      %v2115 = vpop.permute.xlu0 %2114
      %2116 = vrot.lane.b32.xlu0 %v2039, 32
      %v2117 = vpop.permute.xlu0 %2116
      %2118 = vrot.lane.b32.xlu0 %v2042, 32
      %v2119 = vpop.permute.xlu0 %2118
      %2120 = vrot.lane.b32.xlu0 %v2043, 32
      %v2121 = vpop.permute.xlu0 %2120
      %2122 = vrot.lane.b32.xlu0 %v2040, 32
      %v2123 = vpop.permute.xlu0 %2122
      %2124 = vrot.lane.b32.xlu0 %v2044, 32
      %v2125 = vpop.permute.xlu0 %2124
      %v2126 = vsel %vm34, %v2115, %v2117
      %v2127 = vsel %vm34, %v2117, %v2123
      %v2128 = vsel %vm34, %v2119, %v2121
      %v2129 = vsel %vm34, %v2121, %v2125
      %v2130 = vlaneseq
      %v2131 = vshrl.u32 %v2130, 7
      %v2132 = vsub.s32 1, %v2131
      %v2133 = vrot.slane %v933, %v2132
      %v2134 = vmul.f32 %v2126, %v2133
      %v2135 = vmul.f32 %v2127, %v2133
      %v2136 = vmul.f32 %v2128, %v2133
      %v2137 = vmul.f32 %v2129, %v2133
      %v2138 = vadd.f32 %v2110, %v2134
      %v2139 = vadd.f32 %v2111, %v2135
      %v2140 = vadd.f32 %v2112, %v2136
      %v2141 = vadd.f32 %v2113, %v2137
      %v2142 = vlaneseq
      %v2143 = vshrl.u32 %v2142, 7
      %v2144 = vsub.s32 2, %v2143
      %v2145 = vrot.slane %v933, %v2144
      %v2146 = vmul.f32 %v2039, %v2145
      %v2147 = vmul.f32 %v2040, %v2145
      %v2148 = vmul.f32 %v2043, %v2145
      %v2149 = vmul.f32 %v2044, %v2145
      %v2150 = vadd.f32 %v2138, %v2146
      %v2151 = vadd.f32 %v2139, %v2147
      %v2152 = vadd.f32 %v2140, %v2148
      %v2153 = vadd.f32 %v2141, %v2149
      %2154 = vrot.lane.b32.xlu0 %v2041, 96
      %v2155 = vpop.permute.xlu0 %2154
      %2156 = vrot.lane.b32.xlu0 %v2045, 96
      %v2157 = vpop.permute.xlu0 %2156
      %v2158 = vsel %vm32, %v2067, %v2155
      %v2159 = vsel %vm32, %v2069, %v2157
      %v2160 = vlaneseq
      %v2161 = vshrl.u32 %v2160, 7
      %v2162 = vsub.s32 3, %v2161
      %v2163 = vrot.slane %v933, %v2162
      %v2164 = vmul.f32 %v2071, %v2163
      %v2165 = vmul.f32 %v2158, %v2163
      %v2166 = vmul.f32 %v2073, %v2163
      %v2167 = vmul.f32 %v2159, %v2163
      %v2168 = vadd.f32 %v2150, %v2164
      %v2169 = vadd.f32 %v2151, %v2165
      %v2170 = vadd.f32 %v2152, %v2166
      %v2171 = vadd.f32 %v2153, %v2167
      %2172 = vrot.lane.b32.xlu0 %v2041, 64
      %v2173 = vpop.permute.xlu0 %2172
      %2174 = vrot.lane.b32.xlu0 %v2045, 64
      %v2175 = vpop.permute.xlu0 %2174
      %v2176 = vsel %vm33, %v2095, %v2173
      %v2177 = vsel %vm33, %v2097, %v2175
      %v2178 = vlaneseq
      %v2179 = vshrl.u32 %v2178, 7
      %v2180 = vsub.s32 4, %v2179
      %v2181 = vrot.slane %v933, %v2180
      %v2182 = vmul.f32 %v2099, %v2181
      %v2183 = vmul.f32 %v2176, %v2181
      %v2184 = vmul.f32 %v2101, %v2181
      %v2185 = vmul.f32 %v2177, %v2181
      %v2186 = vadd.f32 %v2168, %v2182
      %v2187 = vadd.f32 %v2169, %v2183
      %v2188 = vadd.f32 %v2170, %v2184
      %v2189 = vadd.f32 %v2171, %v2185
      %2190 = vrot.lane.b32.xlu0 %v2041, 32
      %v2191 = vpop.permute.xlu0 %2190
      %2192 = vrot.lane.b32.xlu0 %v2045, 32
      %v2193 = vpop.permute.xlu0 %2192
      %v2194 = vsel %vm34, %v2123, %v2191
      %v2195 = vsel %vm34, %v2125, %v2193
      %v2196 = vlaneseq
      %v2197 = vshrl.u32 %v2196, 7
      %v2198 = vsub.s32 5, %v2197
      %v2199 = vrot.slane %v933, %v2198
      %v2200 = vmul.f32 %v2127, %v2199
      %v2201 = vmul.f32 %v2194, %v2199
      %v2202 = vmul.f32 %v2129, %v2199
      %v2203 = vmul.f32 %v2195, %v2199
      %v2204 = vadd.f32 %v2186, %v2200
      %v2205 = vadd.f32 %v2187, %v2201
      %v2206 = vadd.f32 %v2188, %v2202
      %v2207 = vadd.f32 %v2189, %v2203
      %v2208 = vlaneseq
      %v2209 = vshrl.u32 %v2208, 7
      %v2210 = vsub.s32 6, %v2209
      %v2211 = vrot.slane %v933, %v2210
      %v2212 = vmul.f32 %v2040, %v2211
      %v2213 = vmul.f32 %v2041, %v2211
      %v2214 = vmul.f32 %v2044, %v2211
      %v2215 = vmul.f32 %v2045, %v2211
      %v2216 = vadd.f32 %v2204, %v2212
      %v2217 = vadd.f32 %v2205, %v2213
      %v2218 = vadd.f32 %v2206, %v2214
      %v2219 = vadd.f32 %v2207, %v2215
      %v2220 = vld [vmem:[#allocation2 + $0xb] sm:$0xff]
      %v2221 = vld [vmem:[#allocation2 + $0x23] sm:$0xff]
      %v2222 = vld [vmem:[#allocation2 + $0x3b] sm:$0xff]
      %v2223 = vld [vmem:[#allocation2 + $0x53] sm:$0xff]
      %v2224 = vld [vmem:[#allocation2 + $0x6b] sm:$0xff]
      %v2225 = vld [vmem:[#allocation2 + $0x83] sm:$0xff]
      %v2226 = vld [vmem:[#allocation2 + $0x9b] sm:$0xff]
      %v2227 = vld [vmem:[#allocation2 + $0xb3] sm:$0xff]
      %v2228 = vlaneseq
      %v2229 = vshrl.u32 %v2228, 7
      %v2230 = vsub.s32 7, %v2229
      %v2231 = vrot.slane %v933, %v2230
      %v2232 = vmul.f32 %v2220, %v2231
      %v2233 = vmul.f32 %v2221, %v2231
      %v2234 = vmul.f32 %v2224, %v2231
      %v2235 = vmul.f32 %v2225, %v2231
      %v2236 = vadd.f32 %v1852, %v2232
      %v2237 = vadd.f32 %v1853, %v2233
      %v2238 = vadd.f32 %v1854, %v2234
      %v2239 = vadd.f32 %v1855, %v2235
      %2240 = vrot.lane.b32.xlu0 %v2220, 96
      %v2241 = vpop.permute.xlu0 %2240
      %2242 = vrot.lane.b32.xlu0 %v2221, 96
      %v2243 = vpop.permute.xlu0 %2242
      %2244 = vrot.lane.b32.xlu0 %v2224, 96
      %v2245 = vpop.permute.xlu0 %2244
      %2246 = vrot.lane.b32.xlu0 %v2225, 96
      %v2247 = vpop.permute.xlu0 %2246
      %2248 = vrot.lane.b32.xlu0 %v2222, 96
      %v2249 = vpop.permute.xlu0 %2248
      %2250 = vrot.lane.b32.xlu0 %v2226, 96
      %v2251 = vpop.permute.xlu0 %2250
      %v2252 = vsel %vm32, %v2241, %v2243
      %v2253 = vsel %vm32, %v2243, %v2249
      %v2254 = vsel %vm32, %v2245, %v2247
      %v2255 = vsel %vm32, %v2247, %v2251
      %v2256 = vlaneseq
      %v2257 = vshrl.u32 %v2256, 7
      %v2258 = vsub.s32 0, %v2257
      %v2259 = vrot.slane %v934, %v2258
      %v2260 = vmul.f32 %v2252, %v2259
      %v2261 = vmul.f32 %v2253, %v2259
      %v2262 = vmul.f32 %v2254, %v2259
      %v2263 = vmul.f32 %v2255, %v2259
      %v2264 = vadd.f32 %v2236, %v2260
      %v2265 = vadd.f32 %v2237, %v2261
      %v2266 = vadd.f32 %v2238, %v2262
      %v2267 = vadd.f32 %v2239, %v2263
      %2268 = vrot.lane.b32.xlu0 %v2220, 64
      %v2269 = vpop.permute.xlu0 %2268
      %2270 = vrot.lane.b32.xlu0 %v2221, 64
      %v2271 = vpop.permute.xlu0 %2270
      %2272 = vrot.lane.b32.xlu0 %v2224, 64
      %v2273 = vpop.permute.xlu0 %2272
      %2274 = vrot.lane.b32.xlu0 %v2225, 64
      %v2275 = vpop.permute.xlu0 %2274
      %2276 = vrot.lane.b32.xlu0 %v2222, 64
      %v2277 = vpop.permute.xlu0 %2276
      %2278 = vrot.lane.b32.xlu0 %v2226, 64
      %v2279 = vpop.permute.xlu0 %2278
      %v2280 = vsel %vm33, %v2269, %v2271
      %v2281 = vsel %vm33, %v2271, %v2277
      %v2282 = vsel %vm33, %v2273, %v2275
      %v2283 = vsel %vm33, %v2275, %v2279
      %v2284 = vlaneseq
      %v2285 = vshrl.u32 %v2284, 7
      %v2286 = vsub.s32 1, %v2285
      %v2287 = vrot.slane %v934, %v2286
      %v2288 = vmul.f32 %v2280, %v2287
      %v2289 = vmul.f32 %v2281, %v2287
      %v2290 = vmul.f32 %v2282, %v2287
      %v2291 = vmul.f32 %v2283, %v2287
      %v2292 = vadd.f32 %v2264, %v2288
      %v2293 = vadd.f32 %v2265, %v2289
      %v2294 = vadd.f32 %v2266, %v2290
      %v2295 = vadd.f32 %v2267, %v2291
      %2296 = vrot.lane.b32.xlu0 %v2220, 32
      %v2297 = vpop.permute.xlu0 %2296
      %2298 = vrot.lane.b32.xlu0 %v2221, 32
      %v2299 = vpop.permute.xlu0 %2298
      %2300 = vrot.lane.b32.xlu0 %v2224, 32
      %v2301 = vpop.permute.xlu0 %2300
      %2302 = vrot.lane.b32.xlu0 %v2225, 32
      %v2303 = vpop.permute.xlu0 %2302
      %2304 = vrot.lane.b32.xlu0 %v2222, 32
      %v2305 = vpop.permute.xlu0 %2304
      %2306 = vrot.lane.b32.xlu0 %v2226, 32
      %v2307 = vpop.permute.xlu0 %2306
      %v2308 = vsel %vm34, %v2297, %v2299
      %v2309 = vsel %vm34, %v2299, %v2305
      %v2310 = vsel %vm34, %v2301, %v2303
      %v2311 = vsel %vm34, %v2303, %v2307
      %v2312 = vlaneseq
      %v2313 = vshrl.u32 %v2312, 7
      %v2314 = vsub.s32 2, %v2313
      %v2315 = vrot.slane %v934, %v2314
      %v2316 = vmul.f32 %v2308, %v2315
      %v2317 = vmul.f32 %v2309, %v2315
      %v2318 = vmul.f32 %v2310, %v2315
      %v2319 = vmul.f32 %v2311, %v2315
      %v2320 = vadd.f32 %v2292, %v2316
      %v2321 = vadd.f32 %v2293, %v2317
      %v2322 = vadd.f32 %v2294, %v2318
      %v2323 = vadd.f32 %v2295, %v2319
      %v2324 = vlaneseq
      %v2325 = vshrl.u32 %v2324, 7
      %v2326 = vsub.s32 3, %v2325
      %v2327 = vrot.slane %v934, %v2326
      %v2328 = vmul.f32 %v2221, %v2327
      %v2329 = vmul.f32 %v2222, %v2327
      %v2330 = vmul.f32 %v2225, %v2327
      %v2331 = vmul.f32 %v2226, %v2327
      %v2332 = vadd.f32 %v2320, %v2328
      %v2333 = vadd.f32 %v2321, %v2329
      %v2334 = vadd.f32 %v2322, %v2330
      %v2335 = vadd.f32 %v2323, %v2331
      %2336 = vrot.lane.b32.xlu0 %v2223, 96
      %v2337 = vpop.permute.xlu0 %2336
      %2338 = vrot.lane.b32.xlu0 %v2227, 96
      %v2339 = vpop.permute.xlu0 %2338
      %v2340 = vsel %vm32, %v2249, %v2337
      %v2341 = vsel %vm32, %v2251, %v2339
      %v2342 = vlaneseq
      %v2343 = vshrl.u32 %v2342, 7
      %v2344 = vsub.s32 4, %v2343
      %v2345 = vrot.slane %v934, %v2344
      %v2346 = vmul.f32 %v2253, %v2345
      %v2347 = vmul.f32 %v2340, %v2345
      %v2348 = vmul.f32 %v2255, %v2345
      %v2349 = vmul.f32 %v2341, %v2345
      %v2350 = vadd.f32 %v2332, %v2346
      %v2351 = vadd.f32 %v2333, %v2347
      %v2352 = vadd.f32 %v2334, %v2348
      %v2353 = vadd.f32 %v2335, %v2349
      %2354 = vrot.lane.b32.xlu0 %v2223, 64
      %v2355 = vpop.permute.xlu0 %2354
      %2356 = vrot.lane.b32.xlu0 %v2227, 64
      %v2357 = vpop.permute.xlu0 %2356
      %v2358 = vsel %vm33, %v2277, %v2355
      %v2359 = vsel %vm33, %v2279, %v2357
      %v2360 = vlaneseq
      %v2361 = vshrl.u32 %v2360, 7
      %v2362 = vsub.s32 5, %v2361
      %v2363 = vrot.slane %v934, %v2362
      %v2364 = vmul.f32 %v2281, %v2363
      %v2365 = vmul.f32 %v2358, %v2363
      %v2366 = vmul.f32 %v2283, %v2363
      %v2367 = vmul.f32 %v2359, %v2363
      %v2368 = vadd.f32 %v2350, %v2364
      %v2369 = vadd.f32 %v2351, %v2365
      %v2370 = vadd.f32 %v2352, %v2366
      %v2371 = vadd.f32 %v2353, %v2367
      %2372 = vrot.lane.b32.xlu0 %v2223, 32
      %v2373 = vpop.permute.xlu0 %2372
      %2374 = vrot.lane.b32.xlu0 %v2227, 32
      %v2375 = vpop.permute.xlu0 %2374
      %v2376 = vsel %vm34, %v2305, %v2373
      %v2377 = vsel %vm34, %v2307, %v2375
      %v2378 = vlaneseq
      %v2379 = vshrl.u32 %v2378, 7
      %v2380 = vsub.s32 6, %v2379
      %v2381 = vrot.slane %v934, %v2380
      %v2382 = vmul.f32 %v2309, %v2381
      %v2383 = vmul.f32 %v2376, %v2381
      %v2384 = vmul.f32 %v2311, %v2381
      %v2385 = vmul.f32 %v2377, %v2381
      %v2386 = vadd.f32 %v2368, %v2382
      %v2387 = vadd.f32 %v2369, %v2383
      %v2388 = vadd.f32 %v2370, %v2384
      %v2389 = vadd.f32 %v2371, %v2385
      %v2390 = vlaneseq
      %v2391 = vshrl.u32 %v2390, 7
      %v2392 = vsub.s32 7, %v2391
      %v2393 = vrot.slane %v934, %v2392
      %v2394 = vmul.f32 %v2222, %v2393
      %v2395 = vmul.f32 %v2223, %v2393
      %v2396 = vmul.f32 %v2226, %v2393
      %v2397 = vmul.f32 %v2227, %v2393
      %v2398 = vadd.f32 %v2386, %v2394
      %v2399 = vadd.f32 %v2387, %v2395
      %v2400 = vadd.f32 %v2388, %v2396
      %v2401 = vadd.f32 %v2389, %v2397
      %v2402 = vld [vmem:[#allocation2 + $0xc] sm:$0xff]
      %v2403 = vld [vmem:[#allocation2 + $0x24] sm:$0xff]
      %v2404 = vld [vmem:[#allocation2 + $0x3c] sm:$0xff]
      %v2405 = vld [vmem:[#allocation2 + $0x54] sm:$0xff]
      %v2406 = vld [vmem:[#allocation2 + $0x6c] sm:$0xff]
      %v2407 = vld [vmem:[#allocation2 + $0x84] sm:$0xff]
      %v2408 = vld [vmem:[#allocation2 + $0x9c] sm:$0xff]
      %v2409 = vld [vmem:[#allocation2 + $0xb4] sm:$0xff]
      %v2410 = vlaneseq
      %v2411 = vshrl.u32 %v2410, 7
      %v2412 = vsub.s32 0, %v2411
      %v2413 = vrot.slane %v935, %v2412
      %v2414 = vmul.f32 %v2402, %v2413
      %v2415 = vmul.f32 %v2403, %v2413
      %v2416 = vmul.f32 %v2406, %v2413
      %v2417 = vmul.f32 %v2407, %v2413
      %v2418 = vadd.f32 %v2034, %v2414
      %v2419 = vadd.f32 %v2035, %v2415
      %v2420 = vadd.f32 %v2036, %v2416
      %v2421 = vadd.f32 %v2037, %v2417
      %2422 = vrot.lane.b32.xlu0 %v2402, 96
      %v2423 = vpop.permute.xlu0 %2422
      %2424 = vrot.lane.b32.xlu0 %v2403, 96
      %v2425 = vpop.permute.xlu0 %2424
      %2426 = vrot.lane.b32.xlu0 %v2406, 96
      %v2427 = vpop.permute.xlu0 %2426
      %2428 = vrot.lane.b32.xlu0 %v2407, 96
      %v2429 = vpop.permute.xlu0 %2428
      %2430 = vrot.lane.b32.xlu0 %v2404, 96
      %v2431 = vpop.permute.xlu0 %2430
      %2432 = vrot.lane.b32.xlu0 %v2408, 96
      %v2433 = vpop.permute.xlu0 %2432
      %v2434 = vsel %vm32, %v2423, %v2425
      %v2435 = vsel %vm32, %v2425, %v2431
      %v2436 = vsel %vm32, %v2427, %v2429
      %v2437 = vsel %vm32, %v2429, %v2433
      %v2438 = vlaneseq
      %v2439 = vshrl.u32 %v2438, 7
      %v2440 = vsub.s32 1, %v2439
      %v2441 = vrot.slane %v935, %v2440
      %v2442 = vmul.f32 %v2434, %v2441
      %v2443 = vmul.f32 %v2435, %v2441
      %v2444 = vmul.f32 %v2436, %v2441
      %v2445 = vmul.f32 %v2437, %v2441
      %v2446 = vadd.f32 %v2418, %v2442
      %v2447 = vadd.f32 %v2419, %v2443
      %v2448 = vadd.f32 %v2420, %v2444
      %v2449 = vadd.f32 %v2421, %v2445
      %2450 = vrot.lane.b32.xlu0 %v2402, 64
      %v2451 = vpop.permute.xlu0 %2450
      %2452 = vrot.lane.b32.xlu0 %v2403, 64
      %v2453 = vpop.permute.xlu0 %2452
      %2454 = vrot.lane.b32.xlu0 %v2406, 64
      %v2455 = vpop.permute.xlu0 %2454
      %2456 = vrot.lane.b32.xlu0 %v2407, 64
      %v2457 = vpop.permute.xlu0 %2456
      %2458 = vrot.lane.b32.xlu0 %v2404, 64
      %v2459 = vpop.permute.xlu0 %2458
      %2460 = vrot.lane.b32.xlu0 %v2408, 64
      %v2461 = vpop.permute.xlu0 %2460
      %v2462 = vsel %vm33, %v2451, %v2453
      %v2463 = vsel %vm33, %v2453, %v2459
      %v2464 = vsel %vm33, %v2455, %v2457
      %v2465 = vsel %vm33, %v2457, %v2461
      %v2466 = vlaneseq
      %v2467 = vshrl.u32 %v2466, 7
      %v2468 = vsub.s32 2, %v2467
      %v2469 = vrot.slane %v935, %v2468
      %v2470 = vmul.f32 %v2462, %v2469
      %v2471 = vmul.f32 %v2463, %v2469
      %v2472 = vmul.f32 %v2464, %v2469
      %v2473 = vmul.f32 %v2465, %v2469
      %v2474 = vadd.f32 %v2446, %v2470
      %v2475 = vadd.f32 %v2447, %v2471
      %v2476 = vadd.f32 %v2448, %v2472
      %v2477 = vadd.f32 %v2449, %v2473
      %2478 = vrot.lane.b32.xlu0 %v2402, 32
      %v2479 = vpop.permute.xlu0 %2478
      %2480 = vrot.lane.b32.xlu0 %v2403, 32
      %v2481 = vpop.permute.xlu0 %2480
      %2482 = vrot.lane.b32.xlu0 %v2406, 32
      %v2483 = vpop.permute.xlu0 %2482
      %2484 = vrot.lane.b32.xlu0 %v2407, 32
      %v2485 = vpop.permute.xlu0 %2484
      %2486 = vrot.lane.b32.xlu0 %v2404, 32
      %v2487 = vpop.permute.xlu0 %2486
      %2488 = vrot.lane.b32.xlu0 %v2408, 32
      %v2489 = vpop.permute.xlu0 %2488
      %v2490 = vsel %vm34, %v2479, %v2481
      %v2491 = vsel %vm34, %v2481, %v2487
      %v2492 = vsel %vm34, %v2483, %v2485
      %v2493 = vsel %vm34, %v2485, %v2489
      %v2494 = vlaneseq
      %v2495 = vshrl.u32 %v2494, 7
      %v2496 = vsub.s32 3, %v2495
      %v2497 = vrot.slane %v935, %v2496
      %v2498 = vmul.f32 %v2490, %v2497
      %v2499 = vmul.f32 %v2491, %v2497
      %v2500 = vmul.f32 %v2492, %v2497
      %v2501 = vmul.f32 %v2493, %v2497
      %v2502 = vadd.f32 %v2474, %v2498
      %v2503 = vadd.f32 %v2475, %v2499
      %v2504 = vadd.f32 %v2476, %v2500
      %v2505 = vadd.f32 %v2477, %v2501
      %v2506 = vlaneseq
      %v2507 = vshrl.u32 %v2506, 7
      %v2508 = vsub.s32 4, %v2507
      %v2509 = vrot.slane %v935, %v2508
      %v2510 = vmul.f32 %v2403, %v2509
      %v2511 = vmul.f32 %v2404, %v2509
      %v2512 = vmul.f32 %v2407, %v2509
      %v2513 = vmul.f32 %v2408, %v2509
      %v2514 = vadd.f32 %v2502, %v2510
      %v2515 = vadd.f32 %v2503, %v2511
      %v2516 = vadd.f32 %v2504, %v2512
      %v2517 = vadd.f32 %v2505, %v2513
      %2518 = vrot.lane.b32.xlu0 %v2405, 96
      %v2519 = vpop.permute.xlu0 %2518
      %2520 = vrot.lane.b32.xlu0 %v2409, 96
      %v2521 = vpop.permute.xlu0 %2520
      %v2522 = vsel %vm32, %v2431, %v2519
      %v2523 = vsel %vm32, %v2433, %v2521
      %v2524 = vlaneseq
      %v2525 = vshrl.u32 %v2524, 7
      %v2526 = vsub.s32 5, %v2525
      %v2527 = vrot.slane %v935, %v2526
      %v2528 = vmul.f32 %v2435, %v2527
      %v2529 = vmul.f32 %v2522, %v2527
      %v2530 = vmul.f32 %v2437, %v2527
      %v2531 = vmul.f32 %v2523, %v2527
      %v2532 = vadd.f32 %v2514, %v2528
      %v2533 = vadd.f32 %v2515, %v2529
      %v2534 = vadd.f32 %v2516, %v2530
      %v2535 = vadd.f32 %v2517, %v2531
      %2536 = vrot.lane.b32.xlu0 %v2405, 64
      %v2537 = vpop.permute.xlu0 %2536
      %2538 = vrot.lane.b32.xlu0 %v2409, 64
      %v2539 = vpop.permute.xlu0 %2538
      %v2540 = vsel %vm33, %v2459, %v2537
      %v2541 = vsel %vm33, %v2461, %v2539
      %v2542 = vlaneseq
      %v2543 = vshrl.u32 %v2542, 7
      %v2544 = vsub.s32 6, %v2543
      %v2545 = vrot.slane %v935, %v2544
      %v2546 = vmul.f32 %v2463, %v2545
      %v2547 = vmul.f32 %v2540, %v2545
      %v2548 = vmul.f32 %v2465, %v2545
      %v2549 = vmul.f32 %v2541, %v2545
      %v2550 = vadd.f32 %v2532, %v2546
      %v2551 = vadd.f32 %v2533, %v2547
      %v2552 = vadd.f32 %v2534, %v2548
      %v2553 = vadd.f32 %v2535, %v2549
      %2554 = vrot.lane.b32.xlu0 %v2405, 32
      %v2555 = vpop.permute.xlu0 %2554
      %2556 = vrot.lane.b32.xlu0 %v2409, 32
      %v2557 = vpop.permute.xlu0 %2556
      %v2558 = vsel %vm34, %v2487, %v2555
      %v2559 = vsel %vm34, %v2489, %v2557
      %v2560 = vlaneseq
      %v2561 = vshrl.u32 %v2560, 7
      %v2562 = vsub.s32 7, %v2561
      %v2563 = vrot.slane %v935, %v2562
      %v2564 = vmul.f32 %v2491, %v2563
      %v2565 = vmul.f32 %v2558, %v2563
      %v2566 = vmul.f32 %v2493, %v2563
      %v2567 = vmul.f32 %v2559, %v2563
      %v2568 = vadd.f32 %v2550, %v2564
      %v2569 = vadd.f32 %v2551, %v2565
      %v2570 = vadd.f32 %v2552, %v2566
      %v2571 = vadd.f32 %v2553, %v2567
      %v2572 = vlaneseq
      %v2573 = vshrl.u32 %v2572, 7
      %v2574 = vsub.s32 0, %v2573
      %v2575 = vrot.slane %v936, %v2574
      %v2576 = vmul.f32 %v2404, %v2575
      %v2577 = vmul.f32 %v2405, %v2575
      %v2578 = vmul.f32 %v2408, %v2575
      %v2579 = vmul.f32 %v2409, %v2575
      %v2580 = vadd.f32 %v2568, %v2576
      %v2581 = vadd.f32 %v2569, %v2577
      %v2582 = vadd.f32 %v2570, %v2578
      %v2583 = vadd.f32 %v2571, %v2579
      %v2584 = vadd.f32 %v2216, %v2398
      %v2585 = vadd.f32 %v2217, %v2399
      %v2586 = vadd.f32 %v2218, %v2400
      %v2587 = vadd.f32 %v2219, %v2401
      %v2588 = vadd.f32 %v2584, %v2580
      %v2589 = vadd.f32 %v2585, %v2581
      %v2590 = vadd.f32 %v2586, %v2582
      %v2591 = vadd.f32 %v2587, %v2583
      %v2592 = vlaneseq
      %v2593 = vshrl.u32 %v2592, 7
      %v2594 = vsub.s32 0, %v2593
      %v2595 = vrot.slane %v939, %v2594
      %v2596 = vadd.f32 %v2588, %v2595
      %v2597 = vadd.f32 %v2589, %v2595
      %v2598 = vadd.f32 %v2590, %v2595
      %v2599 = vadd.f32 %v2591, %v2595
      %v2600 = vmul.f32 %v2596, 0.5
      %v2601 = vmul.f32 %v2597, 0.5
      %v2602 = vmul.f32 %v2598, 0.5
      %v2603 = vmul.f32 %v2599, 0.5
      %v2604 = vmul.f32 %v2596, 0.70710677
      %v2605 = vmul.f32 %v2597, 0.70710677
      %v2606 = vmul.f32 %v2598, 0.70710677
      %v2607 = vmul.f32 %v2599, 0.70710677
      %v2608 = vand.u32 2147483647, %v2604
      %v2609 = vand.u32 2147483647, %v2605
      %v2610 = vand.u32 2147483647, %v2606
      %v2611 = vand.u32 2147483647, %v2607
      %v2612 = vmul.f32 %v2608, 0.3275911
      %v2613 = vmul.f32 %v2609, 0.3275911
      %v2614 = vmul.f32 %v2610, 0.3275911
      %v2615 = vmul.f32 %v2611, 0.3275911
      %v2616 = vadd.f32 %v2612, 1.0
      %v2617 = vadd.f32 %v2613, 1.0
      %v2618 = vadd.f32 %v2614, 1.0
      %v2619 = vadd.f32 %v2615, 1.0
      %v2620 = vrcp.pop %v2616
      %v2621 = vrcp.pop %v2617
      %v2622 = vrcp.pop %v2618
      %v2623 = vrcp.pop %v2619
      %v2624 = vmul.f32 %v2616, %v2620
      %v2625 = vmul.f32 %v2617, %v2621
      %v2626 = vmul.f32 %v2618, %v2622
      %v2627 = vmul.f32 %v2619, %v2623
      %v2628 = vsub.f32 2.0, %v2624
      %v2629 = vsub.f32 2.0, %v2625
      %v2630 = vsub.f32 2.0, %v2626
      %v2631 = vsub.f32 2.0, %v2627
      %v2632 = vmul.f32 %v2620, %v2628
      %v2633 = vmul.f32 %v2621, %v2629
      %v2634 = vmul.f32 %v2622, %v2630
      %v2635 = vmul.f32 %v2623, %v2631
      %v2636 = vmul.f32 %v2632, 1.0614054
      %v2637 = vmul.f32 %v2633, 1.0614054
      %v2638 = vmul.f32 %v2634, 1.0614054
      %v2639 = vmul.f32 %v2635, 1.0614054
      %v2640 = vadd.f32 %v2636, -1.4531521
      %v2641 = vadd.f32 %v2637, -1.4531521
      %v2642 = vadd.f32 %v2638, -1.4531521
      %v2643 = vadd.f32 %v2639, -1.4531521
      %v2644 = vmul.f32 %v2632, %v2640
      %v2645 = vmul.f32 %v2633, %v2641
      %v2646 = vmul.f32 %v2634, %v2642
      %v2647 = vmul.f32 %v2635, %v2643
      %v2648 = vadd.f32 %v2644, 1.4214138
      %v2649 = vadd.f32 %v2645, 1.4214138
      %v2650 = vadd.f32 %v2646, 1.4214138
      %v2651 = vadd.f32 %v2647, 1.4214138
      %v2652 = vmul.f32 %v2632, %v2648
      %v2653 = vmul.f32 %v2633, %v2649
      %v2654 = vmul.f32 %v2634, %v2650
      %v2655 = vmul.f32 %v2635, %v2651
      %v2656 = vadd.f32 %v2652, -0.28449672
      %v2657 = vadd.f32 %v2653, -0.28449672
      %v2658 = vadd.f32 %v2654, -0.28449672
      %v2659 = vadd.f32 %v2655, -0.28449672
      %v2660 = vmul.f32 %v2632, %v2656
      %v2661 = vmul.f32 %v2633, %v2657
      %v2662 = vmul.f32 %v2634, %v2658
      %v2663 = vmul.f32 %v2635, %v2659
      %v2664 = vadd.f32 %v2660, 0.2548296
      %v2665 = vadd.f32 %v2661, 0.2548296
      %v2666 = vadd.f32 %v2662, 0.2548296
      %v2667 = vadd.f32 %v2663, 0.2548296
      %v2668 = vmul.f32 %v2632, %v2664
      %v2669 = vmul.f32 %v2633, %v2665
      %v2670 = vmul.f32 %v2634, %v2666
      %v2671 = vmul.f32 %v2635, %v2667
      %v2672 = vsub.f32 0.0, %v2608
      %v2673 = vsub.f32 0.0, %v2609
      %v2674 = vsub.f32 0.0, %v2610
      %v2675 = vsub.f32 0.0, %v2611
      %v2676 = vmul.f32 %v2672, %v2608
      %v2677 = vmul.f32 %v2673, %v2609
      %v2678 = vmul.f32 %v2674, %v2610
      %v2679 = vmul.f32 %v2675, %v2611
      %v2680 = vmul.f32 %v2676, 1.442695
      %v2681 = vpow.pop %v2680
      %v2682 = vmul.f32 %v2677, 1.442695
      %v2683 = vpow.pop %v2682
      %v2684 = vmul.f32 %v2678, 1.442695
      %v2685 = vpow.pop %v2684
      %v2686 = vmul.f32 %v2679, 1.442695
      %v2687 = vpow.pop %v2686
      %v2688 = vmul.f32 %v2668, %v2681
      %v2689 = vmul.f32 %v2669, %v2683
      %v2690 = vmul.f32 %v2670, %v2685
      %v2691 = vmul.f32 %v2671, %v2687
      %v2692 = vsub.f32 1.0, %v2688
      %v2693 = vsub.f32 1.0, %v2689
      %v2694 = vsub.f32 1.0, %v2690
      %v2695 = vsub.f32 1.0, %v2691
      %vm2696 = vcmp.lt.f32.partialorder %v2604, 0.0
      %vm2697 = vcmp.lt.f32.partialorder %v2605, 0.0
      %vm2698 = vcmp.lt.f32.partialorder %v2606, 0.0
      %vm2699 = vcmp.lt.f32.partialorder %v2607, 0.0
      %v2700 = vsub.f32 0.0, %v2692
      %v2701 = vsub.f32 0.0, %v2693
      %v2702 = vsub.f32 0.0, %v2694
      %v2703 = vsub.f32 0.0, %v2695
      %v2704 = vsel %vm2696, %v2700, %v2692
      %v2705 = vsel %vm2697, %v2701, %v2693
      %v2706 = vsel %vm2698, %v2702, %v2694
      %v2707 = vsel %vm2699, %v2703, %v2695
      %v2708 = vadd.f32 %v2704, 1.0
      %v2709 = vadd.f32 %v2705, 1.0
      %v2710 = vadd.f32 %v2706, 1.0
      %v2711 = vadd.f32 %v2707, 1.0
      %v2712 = vmul.f32 %v2600, %v2708
      %v2713 = vmul.f32 %v2601, %v2709
      %v2714 = vmul.f32 %v2602, %v2710
      %v2715 = vmul.f32 %v2603, %v2711
      %v2716 = vadd.f32 %v2712, %v2713
      %v2717 = vadd.f32 %v2716, %v2714
      %v2718 = vadd.f32 %v2717, %v2715
      %v2719 = vrot.slane %v2718, 4
      %v2720 = vadd.f32 %v2718, %v2719
      %v2721 = vrot.slane %v2720, 2
      %v2722 = vadd.f32 %v2720, %v2721
      %v2723 = vrot.slane %v2722, 1
      %v2724 = vadd.f32 %v2722, %v2723
      %2725 = vrot.lane.b32.xlu0 %v2724, 64
      %v2726 = vpop.permute.xlu0 %2725
      %v2727 = vadd.f32 %v2724, %v2726
      %2728 = vrot.lane.b32.xlu0 %v2727, 32
      %v2729 = vpop.permute.xlu0 %2728
      %v2730 = vadd.f32 %v2727, %v2729
      %v2731 = vmul.f32 %v2730, 0.0078125
      %v2732 = vlaneseq
      %v2733 = vshrl.u32 %v2732, 7
      %v2734 = vsub.s32 0, %v2733
      %v2735 = vrot.slane %v2731, %v2734
      %v2736 = vsub.f32 %v2712, %v2735
      %v2737 = vsub.f32 %v2713, %v2735
      %v2738 = vsub.f32 %v2714, %v2735
      %v2739 = vsub.f32 %v2715, %v2735
      %v2740 = vmul.f32 %v2736, %v2736
      %v2741 = vmul.f32 %v2737, %v2737
      %v2742 = vmul.f32 %v2738, %v2738
      %v2743 = vmul.f32 %v2739, %v2739
      %v2744 = vadd.f32 %v2740, %v2741
      %v2745 = vadd.f32 %v2744, %v2742
      %v2746 = vadd.f32 %v2745, %v2743
      %v2747 = vrot.slane %v2746, 4
      %v2748 = vadd.f32 %v2746, %v2747
      %v2749 = vrot.slane %v2748, 2
      %v2750 = vadd.f32 %v2748, %v2749
      %v2751 = vrot.slane %v2750, 1
      %v2752 = vadd.f32 %v2750, %v2751
      %2753 = vrot.lane.b32.xlu0 %v2752, 64
      %v2754 = vpop.permute.xlu0 %2753
      %v2755 = vadd.f32 %v2752, %v2754
      %2756 = vrot.lane.b32.xlu0 %v2755, 32
      %v2757 = vpop.permute.xlu0 %2756
      %v2758 = vadd.f32 %v2755, %v2757
      %v2759 = vmul.f32 %v2758, 0.0078125
      %v2760 = vadd.f32 %v2759, 1e-05
      %v2761 = vrsqrt.pop %v2760
      %v2763 = vrot.slane %v939, 1
      %v2765 = vmul.f32 %v2761, %v2763
      %v2766 = vlaneseq
      %v2767 = vshrl.u32 %v2766, 7
      %v2768 = vsub.s32 0, %v2767
      %v2769 = vrot.slane %v2765, %v2768
      %v2770 = vmul.f32 %v2736, %v2769
      %v2771 = vmul.f32 %v2737, %v2769
      %v2772 = vmul.f32 %v2738, %v2769
      %v2773 = vmul.f32 %v2739, %v2769
      %v2774 = vlaneseq
      %v2775 = vshrl.u32 %v2774, 7
      %v2776 = vsub.s32 2, %v2775
      %v2777 = vrot.slane %v939, %v2776
      %v2778 = vadd.f32 %v2770, %v2777
      %v2779 = vadd.f32 %v2771, %v2777
      %v2780 = vadd.f32 %v2772, %v2777
      %v2781 = vadd.f32 %v2773, %v2777
      %v2782 = vadd.f32 %v915, %v2778
      %v2783 = vadd.f32 %v916, %v2779
      %v2784 = vadd.f32 %v917, %v2780
      %v2785 = vadd.f32 %v918, %v2781
      %v2786 = vlaneseq
      %v2787 = vshrl.u32 %v2786, 7
      %v2788 = vsub.s32 3, %v2787
      %v2789 = vrot.slane %v939, %v2788
      %2790 = vmatprep.subr.mxu0 0.0
      %v2791 = vand.u32 %v957, 4294901760
      %2792 = vmatpush1.msra.mxu0 %v2791
      %2793 = vmatprep.subr.mxu0 0.0
      %v2794 = vand.u32 %v956, 4294901760
      %2795 = vmatpush1.msra.mxu0 %v2794
      %2796 = vmatprep.subr.mxu0 0.0
      %v2797 = vand.u32 %v955, 4294901760
      %2798 = vmatpush1.msra.mxu0 %v2797
      %2799 = vmatprep.subr.mxu0 0.0
      %v2800 = vand.u32 %v954, 4294901760
      %2801 = vmatpush1.msra.mxu0 %v2800
      %2802 = vmatprep.subr.mxu0 0.0
      %v2803 = vand.u32 %v953, 4294901760
      %2804 = vmatpush1.msra.mxu0 %v2803
      %2805 = vmatprep.subr.mxu0 0.0
      %v2806 = vand.u32 %v952, 4294901760
      %2807 = vmatpush1.msra.mxu0 %v2806
      %2808 = vmatprep.subr.mxu0 0.0
      %v2809 = vand.u32 %v951, 4294901760
      %2810 = vmatpush1.msra.mxu0 %v2809
      %2811 = vmatprep.subr.mxu0 0.0
      %v2812 = vand.u32 %v950, 4294901760
      %2813 = vmatpush1.msra.mxu0 %v2812
      %2814 = vmatprep.subr.mxu0 0.0
      %v2815 = vand.u32 %v949, 4294901760
      %2816 = vmatpush1.msra.mxu0 %v2815
      %2817 = vmatprep.subr.mxu0 0.0
      %v2818 = vand.u32 %v948, 4294901760
      %2819 = vmatpush1.msra.mxu0 %v2818
      %2820 = vmatprep.subr.mxu0 0.0
      %v2821 = vand.u32 %v947, 4294901760
      %2822 = vmatpush1.msra.mxu0 %v2821
      %2823 = vmatprep.subr.mxu0 0.0
      %v2824 = vand.u32 %v946, 4294901760
      %2825 = vmatpush1.msra.mxu0 %v2824
      %2826 = vmatprep.subr.mxu0 0.0
      %v2827 = vand.u32 %v945, 4294901760
      %2828 = vmatpush1.msra.mxu0 %v2827
      %2829 = vmatprep.subr.mxu0 0.0
      %v2830 = vand.u32 %v944, 4294901760
      %2831 = vmatpush1.msra.mxu0 %v2830
      %2832 = vmatprep.subr.mxu0 0.0
      %v2833 = vand.u32 %v943, 4294901760
      %2834 = vmatpush1.msra.mxu0 %v2833
      %2835 = vmatprep.subr.mxu0 0.0
      %v2836 = vand.u32 %v942, 4294901760
      %2837 = vmatpush1.msra.mxu0 %v2836
      %2838 = vmatprep.subr.mxu0 0.0
      %2839 = vmatpush2.msra.mxu0 0.0
      %2840 = vmatprep.subr.mxu0 0.0
      %2841 = vmatpush2.msra.mxu0 0.0
      %2842 = vmatprep.subr.mxu0 0.0
      %2843 = vmatpush2.msra.mxu0 0.0
      %2844 = vmatprep.subr.mxu0 0.0
      %2845 = vmatpush2.msra.mxu0 0.0
      %2846 = vmatprep.subr.mxu0 0.0
      %2847 = vmatpush2.msra.mxu0 0.0
      %2848 = vmatprep.subr.mxu0 0.0
      %2849 = vmatpush2.msra.mxu0 0.0
      %2850 = vmatprep.subr.mxu0 0.0
      %2851 = vmatpush2.msra.mxu0 0.0
      %2852 = vmatprep.subr.mxu0 0.0
      %2853 = vmatpush2.msra.mxu0 0.0
      %2854 = vmatprep.subr.mxu0 0.0
      %2855 = vmatpush2.msra.mxu0 0.0
      %2856 = vmatprep.subr.mxu0 0.0
      %2857 = vmatpush2.msra.mxu0 0.0
      %2858 = vmatprep.subr.mxu0 0.0
      %2859 = vmatpush2.msra.mxu0 0.0
      %2860 = vmatprep.subr.mxu0 0.0
      %2861 = vmatpush2.msra.mxu0 0.0
      %2862 = vmatprep.subr.mxu0 0.0
      %2863 = vmatpush2.msra.mxu0 0.0
      %2864 = vmatprep.subr.mxu0 0.0
      %2865 = vmatpush2.msra.mxu0 0.0
      %2866 = vmatprep.subr.mxu0 0.0
      %2867 = vmatpush2.msra.mxu0 0.0
      %2868 = vmatprep.subr.mxu0 0.0
      %2869 = vmatpush2.msra.mxu0 0.0
      %2870 = vmatprep.mubr.f32.mxu0 0.0
      %v2871 = vand.u32 %v2782, 4294901760
      %v2872 = vsub.f32 %v2782, %v2871
      %v2873 = vand.u32 %v2872, 4294901760
      %v2874 = vsub.f32 %v2872, %v2873
      %v2875 = vand.u32 %v2874, 4294901760
      %2876 = vmatmul.mubr.f32.gmra.mxu0 %v2875
      %v2877 = vpop.f32.mrf.mxu0
      %v2878 = vadd.f32 %v2789, %v2877
      %v2879 = vpop.f32.mrf.mxu0
      %2880 = vmatprep.mubr.f32.mxu0 0.0
      %v2881 = vand.u32 %v2783, 4294901760
      %v2882 = vsub.f32 %v2783, %v2881
      %v2883 = vand.u32 %v2882, 4294901760
      %v2884 = vsub.f32 %v2882, %v2883
      %v2885 = vand.u32 %v2884, 4294901760
      %2886 = vmatmul.mubr.f32.gmra.mxu0 %v2885
      %v2887 = vpop.f32.mrf.mxu0
      %v2888 = vadd.f32 %v2789, %v2887
      %v2889 = vpop.f32.mrf.mxu0
      %2890 = vmatprep.mubr.f32.mxu0 0.0
      %v2891 = vand.u32 %v2784, 4294901760
      %v2892 = vsub.f32 %v2784, %v2891
      %v2893 = vand.u32 %v2892, 4294901760
      %v2894 = vsub.f32 %v2892, %v2893
      %v2895 = vand.u32 %v2894, 4294901760
      %2896 = vmatmul.mubr.f32.gmra.mxu0 %v2895
      %v2897 = vpop.f32.mrf.mxu0
      %v2898 = vadd.f32 %v2789, %v2897
      %v2899 = vpop.f32.mrf.mxu0
      %2900 = vmatprep.mubr.f32.mxu0 0.0
      %v2901 = vand.u32 %v2785, 4294901760
      %v2902 = vsub.f32 %v2785, %v2901
      %v2903 = vand.u32 %v2902, 4294901760
      %v2904 = vsub.f32 %v2902, %v2903
      %v2905 = vand.u32 %v2904, 4294901760
      %2906 = vmatmul.mubr.f32.gmra.mxu0 %v2905
      %v2907 = vpop.f32.mrf.mxu0
      %v2908 = vadd.f32 %v2789, %v2907
      %v2909 = vpop.f32.mrf.mxu0
      %2910 = vdwg.mxu0
      %2911 = vmatprep.subr.mxu0 0.0
      %v2912 = vand.u32 %v957, 4294901760
      %v2913 = vsub.f32 %v957, %v2912
      %v2914 = vand.u32 %v2913, 4294901760
      %v2915 = vsub.f32 %v2913, %v2914
      %v2916 = vand.u32 %v2915, 4294901760
      %2917 = vmatpush1.msra.mxu0 %v2916
      %2918 = vmatprep.subr.mxu0 0.0
      %v2919 = vand.u32 %v956, 4294901760
      %v2920 = vsub.f32 %v956, %v2919
      %v2921 = vand.u32 %v2920, 4294901760
      %v2922 = vsub.f32 %v2920, %v2921
      %v2923 = vand.u32 %v2922, 4294901760
      %2924 = vmatpush1.msra.mxu0 %v2923
      %2925 = vmatprep.subr.mxu0 0.0
      %v2926 = vand.u32 %v955, 4294901760
      %v2927 = vsub.f32 %v955, %v2926
      %v2928 = vand.u32 %v2927, 4294901760
      %v2929 = vsub.f32 %v2927, %v2928
      %v2930 = vand.u32 %v2929, 4294901760
      %2931 = vmatpush1.msra.mxu0 %v2930
      %2932 = vmatprep.subr.mxu0 0.0
      %v2933 = vand.u32 %v954, 4294901760
      %v2934 = vsub.f32 %v954, %v2933
      %v2935 = vand.u32 %v2934, 4294901760
      %v2936 = vsub.f32 %v2934, %v2935
      %v2937 = vand.u32 %v2936, 4294901760
      %2938 = vmatpush1.msra.mxu0 %v2937
      %2939 = vmatprep.subr.mxu0 0.0
      %v2940 = vand.u32 %v953, 4294901760
      %v2941 = vsub.f32 %v953, %v2940
      %v2942 = vand.u32 %v2941, 4294901760
      %v2943 = vsub.f32 %v2941, %v2942
      %v2944 = vand.u32 %v2943, 4294901760
      %2945 = vmatpush1.msra.mxu0 %v2944
      %2946 = vmatprep.subr.mxu0 0.0
      %v2947 = vand.u32 %v952, 4294901760
      %v2948 = vsub.f32 %v952, %v2947
      %v2949 = vand.u32 %v2948, 4294901760
      %v2950 = vsub.f32 %v2948, %v2949
      %v2951 = vand.u32 %v2950, 4294901760
      %2952 = vmatpush1.msra.mxu0 %v2951
      %2953 = vmatprep.subr.mxu0 0.0
      %v2954 = vand.u32 %v951, 4294901760
      %v2955 = vsub.f32 %v951, %v2954
      %v2956 = vand.u32 %v2955, 4294901760
      %v2957 = vsub.f32 %v2955, %v2956
      %v2958 = vand.u32 %v2957, 4294901760
      %2959 = vmatpush1.msra.mxu0 %v2958
      %2960 = vmatprep.subr.mxu0 0.0
      %v2961 = vand.u32 %v950, 4294901760
      %v2962 = vsub.f32 %v950, %v2961
      %v2963 = vand.u32 %v2962, 4294901760
      %v2964 = vsub.f32 %v2962, %v2963
      %v2965 = vand.u32 %v2964, 4294901760
      %2966 = vmatpush1.msra.mxu0 %v2965
      %2967 = vmatprep.subr.mxu0 0.0
      %v2968 = vand.u32 %v949, 4294901760
      %v2969 = vsub.f32 %v949, %v2968
      %v2970 = vand.u32 %v2969, 4294901760
      %v2971 = vsub.f32 %v2969, %v2970
      %v2972 = vand.u32 %v2971, 4294901760
      %2973 = vmatpush1.msra.mxu0 %v2972
      %2974 = vmatprep.subr.mxu0 0.0
      %v2975 = vand.u32 %v948, 4294901760
      %v2976 = vsub.f32 %v948, %v2975
      %v2977 = vand.u32 %v2976, 4294901760
      %v2978 = vsub.f32 %v2976, %v2977
      %v2979 = vand.u32 %v2978, 4294901760
      %2980 = vmatpush1.msra.mxu0 %v2979
      %2981 = vmatprep.subr.mxu0 0.0
      %v2982 = vand.u32 %v947, 4294901760
      %v2983 = vsub.f32 %v947, %v2982
      %v2984 = vand.u32 %v2983, 4294901760
      %v2985 = vsub.f32 %v2983, %v2984
      %v2986 = vand.u32 %v2985, 4294901760
      %2987 = vmatpush1.msra.mxu0 %v2986
      %2988 = vmatprep.subr.mxu0 0.0
      %v2989 = vand.u32 %v946, 4294901760
      %v2990 = vsub.f32 %v946, %v2989
      %v2991 = vand.u32 %v2990, 4294901760
      %v2992 = vsub.f32 %v2990, %v2991
      %v2993 = vand.u32 %v2992, 4294901760
      %2994 = vmatpush1.msra.mxu0 %v2993
      %2995 = vmatprep.subr.mxu0 0.0
      %v2996 = vand.u32 %v945, 4294901760
      %v2997 = vsub.f32 %v945, %v2996
      %v2998 = vand.u32 %v2997, 4294901760
      %v2999 = vsub.f32 %v2997, %v2998
      %v3000 = vand.u32 %v2999, 4294901760
      %3001 = vmatpush1.msra.mxu0 %v3000
      %3002 = vmatprep.subr.mxu0 0.0
      %v3003 = vand.u32 %v944, 4294901760
      %v3004 = vsub.f32 %v944, %v3003
      %v3005 = vand.u32 %v3004, 4294901760
      %v3006 = vsub.f32 %v3004, %v3005
      %v3007 = vand.u32 %v3006, 4294901760
      %3008 = vmatpush1.msra.mxu0 %v3007
      %3009 = vmatprep.subr.mxu0 0.0
      %v3010 = vand.u32 %v943, 4294901760
      %v3011 = vsub.f32 %v943, %v3010
      %v3012 = vand.u32 %v3011, 4294901760
      %v3013 = vsub.f32 %v3011, %v3012
      %v3014 = vand.u32 %v3013, 4294901760
      %3015 = vmatpush1.msra.mxu0 %v3014
      %3016 = vmatprep.subr.mxu0 0.0
      %v3017 = vand.u32 %v942, 4294901760
      %v3018 = vsub.f32 %v942, %v3017
      %v3019 = vand.u32 %v3018, 4294901760
      %v3020 = vsub.f32 %v3018, %v3019
      %v3021 = vand.u32 %v3020, 4294901760
      %3022 = vmatpush1.msra.mxu0 %v3021
      %3023 = vmatprep.subr.mxu0 0.0
      %3024 = vmatpush2.msra.mxu0 0.0
      %3025 = vmatprep.subr.mxu0 0.0
      %3026 = vmatpush2.msra.mxu0 0.0
      %3027 = vmatprep.subr.mxu0 0.0
      %3028 = vmatpush2.msra.mxu0 0.0
      %3029 = vmatprep.subr.mxu0 0.0
      %3030 = vmatpush2.msra.mxu0 0.0
      %3031 = vmatprep.subr.mxu0 0.0
      %3032 = vmatpush2.msra.mxu0 0.0
      %3033 = vmatprep.subr.mxu0 0.0
      %3034 = vmatpush2.msra.mxu0 0.0
      %3035 = vmatprep.subr.mxu0 0.0
      %3036 = vmatpush2.msra.mxu0 0.0
      %3037 = vmatprep.subr.mxu0 0.0
      %3038 = vmatpush2.msra.mxu0 0.0
      %3039 = vmatprep.subr.mxu0 0.0
      %3040 = vmatpush2.msra.mxu0 0.0
      %3041 = vmatprep.subr.mxu0 0.0
      %3042 = vmatpush2.msra.mxu0 0.0
      %3043 = vmatprep.subr.mxu0 0.0
      %3044 = vmatpush2.msra.mxu0 0.0
      %3045 = vmatprep.subr.mxu0 0.0
      %3046 = vmatpush2.msra.mxu0 0.0
      %3047 = vmatprep.subr.mxu0 0.0
      %3048 = vmatpush2.msra.mxu0 0.0
      %3049 = vmatprep.subr.mxu0 0.0
      %3050 = vmatpush2.msra.mxu0 0.0
      %3051 = vmatprep.subr.mxu0 0.0
      %3052 = vmatpush2.msra.mxu0 0.0
      %3053 = vmatprep.subr.mxu0 0.0
      %3054 = vmatpush2.msra.mxu0 0.0
      %3055 = vmatprep.mubr.f32.mxu0 0.0
      %v3056 = vand.u32 %v2782, 4294901760
      %3057 = vmatmul.mubr.f32.gmra.mxu0 %v3056
      %v3058 = vpop.f32.mrf.mxu0
      %v3059 = vadd.f32 %v2878, %v3058
      %v3060 = vpop.f32.mrf.mxu0
      %3061 = vmatprep.mubr.f32.mxu0 0.0
      %v3062 = vand.u32 %v2783, 4294901760
      %3063 = vmatmul.mubr.f32.gmra.mxu0 %v3062
      %v3064 = vpop.f32.mrf.mxu0
      %v3065 = vadd.f32 %v2888, %v3064
      %v3066 = vpop.f32.mrf.mxu0
      %3067 = vmatprep.mubr.f32.mxu0 0.0
      %v3068 = vand.u32 %v2784, 4294901760
      %3069 = vmatmul.mubr.f32.gmra.mxu0 %v3068
      %v3070 = vpop.f32.mrf.mxu0
      %v3071 = vadd.f32 %v2898, %v3070
      %v3072 = vpop.f32.mrf.mxu0
      %3073 = vmatprep.mubr.f32.mxu0 0.0
      %v3074 = vand.u32 %v2785, 4294901760
      %3075 = vmatmul.mubr.f32.gmra.mxu0 %v3074
      %v3076 = vpop.f32.mrf.mxu0
      %v3077 = vadd.f32 %v2908, %v3076
      %v3078 = vpop.f32.mrf.mxu0
      %3079 = vdwg.mxu0
      %3080 = vmatprep.subr.mxu0 0.0
      %v3081 = vand.u32 %v957, 4294901760
      %v3082 = vsub.f32 %v957, %v3081
      %3083 = vmatpush1.msra.mxu0 %v3082
      %3084 = vmatprep.subr.mxu0 0.0
      %v3085 = vand.u32 %v956, 4294901760
      %v3086 = vsub.f32 %v956, %v3085
      %3087 = vmatpush1.msra.mxu0 %v3086
      %3088 = vmatprep.subr.mxu0 0.0
      %v3089 = vand.u32 %v955, 4294901760
      %v3090 = vsub.f32 %v955, %v3089
      %3091 = vmatpush1.msra.mxu0 %v3090
      %3092 = vmatprep.subr.mxu0 0.0
      %v3093 = vand.u32 %v954, 4294901760
      %v3094 = vsub.f32 %v954, %v3093
      %3095 = vmatpush1.msra.mxu0 %v3094
      %3096 = vmatprep.subr.mxu0 0.0
      %v3097 = vand.u32 %v953, 4294901760
      %v3098 = vsub.f32 %v953, %v3097
      %3099 = vmatpush1.msra.mxu0 %v3098
      %3100 = vmatprep.subr.mxu0 0.0
      %v3101 = vand.u32 %v952, 4294901760
      %v3102 = vsub.f32 %v952, %v3101
      %3103 = vmatpush1.msra.mxu0 %v3102
      %3104 = vmatprep.subr.mxu0 0.0
      %v3105 = vand.u32 %v951, 4294901760
      %v3106 = vsub.f32 %v951, %v3105
      %3107 = vmatpush1.msra.mxu0 %v3106
      %3108 = vmatprep.subr.mxu0 0.0
      %v3109 = vand.u32 %v950, 4294901760
      %v3110 = vsub.f32 %v950, %v3109
      %3111 = vmatpush1.msra.mxu0 %v3110
      %3112 = vmatprep.subr.mxu0 0.0
      %v3113 = vand.u32 %v949, 4294901760
      %v3114 = vsub.f32 %v949, %v3113
      %3115 = vmatpush1.msra.mxu0 %v3114
      %3116 = vmatprep.subr.mxu0 0.0
      %v3117 = vand.u32 %v948, 4294901760
      %v3118 = vsub.f32 %v948, %v3117
      %3119 = vmatpush1.msra.mxu0 %v3118
      %3120 = vmatprep.subr.mxu0 0.0
      %v3121 = vand.u32 %v947, 4294901760
      %v3122 = vsub.f32 %v947, %v3121
      %3123 = vmatpush1.msra.mxu0 %v3122
      %3124 = vmatprep.subr.mxu0 0.0
      %v3125 = vand.u32 %v946, 4294901760
      %v3126 = vsub.f32 %v946, %v3125
      %3127 = vmatpush1.msra.mxu0 %v3126
      %3128 = vmatprep.subr.mxu0 0.0
      %v3129 = vand.u32 %v945, 4294901760
      %v3130 = vsub.f32 %v945, %v3129
      %3131 = vmatpush1.msra.mxu0 %v3130
      %3132 = vmatprep.subr.mxu0 0.0
      %v3133 = vand.u32 %v944, 4294901760
      %v3134 = vsub.f32 %v944, %v3133
      %3135 = vmatpush1.msra.mxu0 %v3134
      %3136 = vmatprep.subr.mxu0 0.0
      %v3137 = vand.u32 %v943, 4294901760
      %v3138 = vsub.f32 %v943, %v3137
      %3139 = vmatpush1.msra.mxu0 %v3138
      %3140 = vmatprep.subr.mxu0 0.0
      %v3141 = vand.u32 %v942, 4294901760
      %v3142 = vsub.f32 %v942, %v3141
      %3143 = vmatpush1.msra.mxu0 %v3142
      %3144 = vmatprep.subr.mxu0 0.0
      %3145 = vmatpush2.msra.mxu0 0.0
      %3146 = vmatprep.subr.mxu0 0.0
      %3147 = vmatpush2.msra.mxu0 0.0
      %3148 = vmatprep.subr.mxu0 0.0
      %3149 = vmatpush2.msra.mxu0 0.0
      %3150 = vmatprep.subr.mxu0 0.0
      %3151 = vmatpush2.msra.mxu0 0.0
      %3152 = vmatprep.subr.mxu0 0.0
      %3153 = vmatpush2.msra.mxu0 0.0
      %3154 = vmatprep.subr.mxu0 0.0
      %3155 = vmatpush2.msra.mxu0 0.0
      %3156 = vmatprep.subr.mxu0 0.0
      %3157 = vmatpush2.msra.mxu0 0.0
      %3158 = vmatprep.subr.mxu0 0.0
      %3159 = vmatpush2.msra.mxu0 0.0
      %3160 = vmatprep.subr.mxu0 0.0
      %3161 = vmatpush2.msra.mxu0 0.0
      %3162 = vmatprep.subr.mxu0 0.0
      %3163 = vmatpush2.msra.mxu0 0.0
      %3164 = vmatprep.subr.mxu0 0.0
      %3165 = vmatpush2.msra.mxu0 0.0
      %3166 = vmatprep.subr.mxu0 0.0
      %3167 = vmatpush2.msra.mxu0 0.0
      %3168 = vmatprep.subr.mxu0 0.0
      %3169 = vmatpush2.msra.mxu0 0.0
      %3170 = vmatprep.subr.mxu0 0.0
      %3171 = vmatpush2.msra.mxu0 0.0
      %3172 = vmatprep.subr.mxu0 0.0
      %3173 = vmatpush2.msra.mxu0 0.0
      %3174 = vmatprep.subr.mxu0 0.0
      %3175 = vmatpush2.msra.mxu0 0.0
      %3176 = vmatprep.mubr.f32.mxu0 0.0
      %v3177 = vand.u32 %v2782, 4294901760
      %v3178 = vsub.f32 %v2782, %v3177
      %3179 = vmatmul.mubr.f32.gmra.mxu0 %v3178
      %v3180 = vpop.f32.mrf.mxu0
      %v3181 = vadd.f32 %v3059, %v3180
      %v3182 = vpop.f32.mrf.mxu0
      %3183 = vmatprep.mubr.f32.mxu0 0.0
      %v3184 = vand.u32 %v2783, 4294901760
      %v3185 = vsub.f32 %v2783, %v3184
      %3186 = vmatmul.mubr.f32.gmra.mxu0 %v3185
      %v3187 = vpop.f32.mrf.mxu0
      %v3188 = vadd.f32 %v3065, %v3187
      %v3189 = vpop.f32.mrf.mxu0
      %3190 = vmatprep.mubr.f32.mxu0 0.0
      %v3191 = vand.u32 %v2784, 4294901760
      %v3192 = vsub.f32 %v2784, %v3191
      %3193 = vmatmul.mubr.f32.gmra.mxu0 %v3192
      %v3194 = vpop.f32.mrf.mxu0
      %v3195 = vadd.f32 %v3071, %v3194
      %v3196 = vpop.f32.mrf.mxu0
      %3197 = vmatprep.mubr.f32.mxu0 0.0
      %v3198 = vand.u32 %v2785, 4294901760
      %v3199 = vsub.f32 %v2785, %v3198
      %3200 = vmatmul.mubr.f32.gmra.mxu0 %v3199
      %v3201 = vpop.f32.mrf.mxu0
      %v3202 = vadd.f32 %v3077, %v3201
      %v3203 = vpop.f32.mrf.mxu0
      %3204 = vdwg.mxu0
      %3205 = vmatprep.subr.mxu0 0.0
      %v3206 = vand.u32 %v957, 4294901760
      %3207 = vmatpush1.msra.mxu0 %v3206
      %3208 = vmatprep.subr.mxu0 0.0
      %v3209 = vand.u32 %v956, 4294901760
      %3210 = vmatpush1.msra.mxu0 %v3209
      %3211 = vmatprep.subr.mxu0 0.0
      %v3212 = vand.u32 %v955, 4294901760
      %3213 = vmatpush1.msra.mxu0 %v3212
      %3214 = vmatprep.subr.mxu0 0.0
      %v3215 = vand.u32 %v954, 4294901760
      %3216 = vmatpush1.msra.mxu0 %v3215
      %3217 = vmatprep.subr.mxu0 0.0
      %v3218 = vand.u32 %v953, 4294901760
      %3219 = vmatpush1.msra.mxu0 %v3218
      %3220 = vmatprep.subr.mxu0 0.0
      %v3221 = vand.u32 %v952, 4294901760
      %3222 = vmatpush1.msra.mxu0 %v3221
      %3223 = vmatprep.subr.mxu0 0.0
      %v3224 = vand.u32 %v951, 4294901760
      %3225 = vmatpush1.msra.mxu0 %v3224
      %3226 = vmatprep.subr.mxu0 0.0
      %v3227 = vand.u32 %v950, 4294901760
      %3228 = vmatpush1.msra.mxu0 %v3227
      %3229 = vmatprep.subr.mxu0 0.0
      %v3230 = vand.u32 %v949, 4294901760
      %3231 = vmatpush1.msra.mxu0 %v3230
      %3232 = vmatprep.subr.mxu0 0.0
      %v3233 = vand.u32 %v948, 4294901760
      %3234 = vmatpush1.msra.mxu0 %v3233
      %3235 = vmatprep.subr.mxu0 0.0
      %v3236 = vand.u32 %v947, 4294901760
      %3237 = vmatpush1.msra.mxu0 %v3236
      %3238 = vmatprep.subr.mxu0 0.0
      %v3239 = vand.u32 %v946, 4294901760
      %3240 = vmatpush1.msra.mxu0 %v3239
      %3241 = vmatprep.subr.mxu0 0.0
      %v3242 = vand.u32 %v945, 4294901760
      %3243 = vmatpush1.msra.mxu0 %v3242
      %3244 = vmatprep.subr.mxu0 0.0
      %v3245 = vand.u32 %v944, 4294901760
      %3246 = vmatpush1.msra.mxu0 %v3245
      %3247 = vmatprep.subr.mxu0 0.0
      %v3248 = vand.u32 %v943, 4294901760
      %3249 = vmatpush1.msra.mxu0 %v3248
      %3250 = vmatprep.subr.mxu0 0.0
      %v3251 = vand.u32 %v942, 4294901760
      %3252 = vmatpush1.msra.mxu0 %v3251
      %3253 = vmatprep.subr.mxu0 0.0
      %3254 = vmatpush2.msra.mxu0 0.0
      %3255 = vmatprep.subr.mxu0 0.0
      %3256 = vmatpush2.msra.mxu0 0.0
      %3257 = vmatprep.subr.mxu0 0.0
      %3258 = vmatpush2.msra.mxu0 0.0
      %3259 = vmatprep.subr.mxu0 0.0
      %3260 = vmatpush2.msra.mxu0 0.0
      %3261 = vmatprep.subr.mxu0 0.0
      %3262 = vmatpush2.msra.mxu0 0.0
      %3263 = vmatprep.subr.mxu0 0.0
      %3264 = vmatpush2.msra.mxu0 0.0
      %3265 = vmatprep.subr.mxu0 0.0
      %3266 = vmatpush2.msra.mxu0 0.0
      %3267 = vmatprep.subr.mxu0 0.0
      %3268 = vmatpush2.msra.mxu0 0.0
      %3269 = vmatprep.subr.mxu0 0.0
      %3270 = vmatpush2.msra.mxu0 0.0
      %3271 = vmatprep.subr.mxu0 0.0
      %3272 = vmatpush2.msra.mxu0 0.0
      %3273 = vmatprep.subr.mxu0 0.0
      %3274 = vmatpush2.msra.mxu0 0.0
      %3275 = vmatprep.subr.mxu0 0.0
      %3276 = vmatpush2.msra.mxu0 0.0
      %3277 = vmatprep.subr.mxu0 0.0
      %3278 = vmatpush2.msra.mxu0 0.0
      %3279 = vmatprep.subr.mxu0 0.0
      %3280 = vmatpush2.msra.mxu0 0.0
      %3281 = vmatprep.subr.mxu0 0.0
      %3282 = vmatpush2.msra.mxu0 0.0
      %3283 = vmatprep.subr.mxu0 0.0
      %3284 = vmatpush2.msra.mxu0 0.0
      %3285 = vmatprep.mubr.f32.mxu0 0.0
      %v3286 = vand.u32 %v2782, 4294901760
      %v3287 = vsub.f32 %v2782, %v3286
      %v3288 = vand.u32 %v3287, 4294901760
      %3289 = vmatmul.mubr.f32.gmra.mxu0 %v3288
      %v3290 = vpop.f32.mrf.mxu0
      %v3291 = vadd.f32 %v3181, %v3290
      %v3292 = vpop.f32.mrf.mxu0
      %3293 = vmatprep.mubr.f32.mxu0 0.0
      %v3294 = vand.u32 %v2783, 4294901760
      %v3295 = vsub.f32 %v2783, %v3294
      %v3296 = vand.u32 %v3295, 4294901760
      %3297 = vmatmul.mubr.f32.gmra.mxu0 %v3296
      %v3298 = vpop.f32.mrf.mxu0
      %v3299 = vadd.f32 %v3188, %v3298
      %v3300 = vpop.f32.mrf.mxu0
      %3301 = vmatprep.mubr.f32.mxu0 0.0
      %v3302 = vand.u32 %v2784, 4294901760
      %v3303 = vsub.f32 %v2784, %v3302
      %v3304 = vand.u32 %v3303, 4294901760
      %3305 = vmatmul.mubr.f32.gmra.mxu0 %v3304
      %v3306 = vpop.f32.mrf.mxu0
      %v3307 = vadd.f32 %v3195, %v3306
      %v3308 = vpop.f32.mrf.mxu0
      %3309 = vmatprep.mubr.f32.mxu0 0.0
      %v3310 = vand.u32 %v2785, 4294901760
      %v3311 = vsub.f32 %v2785, %v3310
      %v3312 = vand.u32 %v3311, 4294901760
      %3313 = vmatmul.mubr.f32.gmra.mxu0 %v3312
      %v3314 = vpop.f32.mrf.mxu0
      %v3315 = vadd.f32 %v3202, %v3314
      %v3316 = vpop.f32.mrf.mxu0
      %3317 = vdwg.mxu0
      %3318 = vmatprep.subr.mxu0 0.0
      %v3319 = vand.u32 %v957, 4294901760
      %v3320 = vsub.f32 %v957, %v3319
      %v3321 = vand.u32 %v3320, 4294901760
      %3322 = vmatpush1.msra.mxu0 %v3321
      %3323 = vmatprep.subr.mxu0 0.0
      %v3324 = vand.u32 %v956, 4294901760
      %v3325 = vsub.f32 %v956, %v3324
      %v3326 = vand.u32 %v3325, 4294901760
      %3327 = vmatpush1.msra.mxu0 %v3326
      %3328 = vmatprep.subr.mxu0 0.0
      %v3329 = vand.u32 %v955, 4294901760
      %v3330 = vsub.f32 %v955, %v3329
      %v3331 = vand.u32 %v3330, 4294901760
      %3332 = vmatpush1.msra.mxu0 %v3331
      %3333 = vmatprep.subr.mxu0 0.0
      %v3334 = vand.u32 %v954, 4294901760
      %v3335 = vsub.f32 %v954, %v3334
      %v3336 = vand.u32 %v3335, 4294901760
      %3337 = vmatpush1.msra.mxu0 %v3336
      %3338 = vmatprep.subr.mxu0 0.0
      %v3339 = vand.u32 %v953, 4294901760
      %v3340 = vsub.f32 %v953, %v3339
      %v3341 = vand.u32 %v3340, 4294901760
      %3342 = vmatpush1.msra.mxu0 %v3341
      %3343 = vmatprep.subr.mxu0 0.0
      %v3344 = vand.u32 %v952, 4294901760
      %v3345 = vsub.f32 %v952, %v3344
      %v3346 = vand.u32 %v3345, 4294901760
      %3347 = vmatpush1.msra.mxu0 %v3346
      %3348 = vmatprep.subr.mxu0 0.0
      %v3349 = vand.u32 %v951, 4294901760
      %v3350 = vsub.f32 %v951, %v3349
      %v3351 = vand.u32 %v3350, 4294901760
      %3352 = vmatpush1.msra.mxu0 %v3351
      %3353 = vmatprep.subr.mxu0 0.0
      %v3354 = vand.u32 %v950, 4294901760
      %v3355 = vsub.f32 %v950, %v3354
      %v3356 = vand.u32 %v3355, 4294901760
      %3357 = vmatpush1.msra.mxu0 %v3356
      %3358 = vmatprep.subr.mxu0 0.0
      %v3359 = vand.u32 %v949, 4294901760
      %v3360 = vsub.f32 %v949, %v3359
      %v3361 = vand.u32 %v3360, 4294901760
      %3362 = vmatpush1.msra.mxu0 %v3361
      %3363 = vmatprep.subr.mxu0 0.0
      %v3364 = vand.u32 %v948, 4294901760
      %v3365 = vsub.f32 %v948, %v3364
      %v3366 = vand.u32 %v3365, 4294901760
      %3367 = vmatpush1.msra.mxu0 %v3366
      %3368 = vmatprep.subr.mxu0 0.0
      %v3369 = vand.u32 %v947, 4294901760
      %v3370 = vsub.f32 %v947, %v3369
      %v3371 = vand.u32 %v3370, 4294901760
      %3372 = vmatpush1.msra.mxu0 %v3371
      %3373 = vmatprep.subr.mxu0 0.0
      %v3374 = vand.u32 %v946, 4294901760
      %v3375 = vsub.f32 %v946, %v3374
      %v3376 = vand.u32 %v3375, 4294901760
      %3377 = vmatpush1.msra.mxu0 %v3376
      %3378 = vmatprep.subr.mxu0 0.0
      %v3379 = vand.u32 %v945, 4294901760
      %v3380 = vsub.f32 %v945, %v3379
      %v3381 = vand.u32 %v3380, 4294901760
      %3382 = vmatpush1.msra.mxu0 %v3381
      %3383 = vmatprep.subr.mxu0 0.0
      %v3384 = vand.u32 %v944, 4294901760
      %v3385 = vsub.f32 %v944, %v3384
      %v3386 = vand.u32 %v3385, 4294901760
      %3387 = vmatpush1.msra.mxu0 %v3386
      %3388 = vmatprep.subr.mxu0 0.0
      %v3389 = vand.u32 %v943, 4294901760
      %v3390 = vsub.f32 %v943, %v3389
      %v3391 = vand.u32 %v3390, 4294901760
      %3392 = vmatpush1.msra.mxu0 %v3391
      %3393 = vmatprep.subr.mxu0 0.0
      %v3394 = vand.u32 %v942, 4294901760
      %v3395 = vsub.f32 %v942, %v3394
      %v3396 = vand.u32 %v3395, 4294901760
      %3397 = vmatpush1.msra.mxu0 %v3396
      %3398 = vmatprep.subr.mxu0 0.0
      %3399 = vmatpush2.msra.mxu0 0.0
      %3400 = vmatprep.subr.mxu0 0.0
      %3401 = vmatpush2.msra.mxu0 0.0
      %3402 = vmatprep.subr.mxu0 0.0
      %3403 = vmatpush2.msra.mxu0 0.0
      %3404 = vmatprep.subr.mxu0 0.0
      %3405 = vmatpush2.msra.mxu0 0.0
      %3406 = vmatprep.subr.mxu0 0.0
      %3407 = vmatpush2.msra.mxu0 0.0
      %3408 = vmatprep.subr.mxu0 0.0
      %3409 = vmatpush2.msra.mxu0 0.0
      %3410 = vmatprep.subr.mxu0 0.0
      %3411 = vmatpush2.msra.mxu0 0.0
      %3412 = vmatprep.subr.mxu0 0.0
      %3413 = vmatpush2.msra.mxu0 0.0
      %3414 = vmatprep.subr.mxu0 0.0
      %3415 = vmatpush2.msra.mxu0 0.0
      %3416 = vmatprep.subr.mxu0 0.0
      %3417 = vmatpush2.msra.mxu0 0.0
      %3418 = vmatprep.subr.mxu0 0.0
      %3419 = vmatpush2.msra.mxu0 0.0
      %3420 = vmatprep.subr.mxu0 0.0
      %3421 = vmatpush2.msra.mxu0 0.0
      %3422 = vmatprep.subr.mxu0 0.0
      %3423 = vmatpush2.msra.mxu0 0.0
      %3424 = vmatprep.subr.mxu0 0.0
      %3425 = vmatpush2.msra.mxu0 0.0
      %3426 = vmatprep.subr.mxu0 0.0
      %3427 = vmatpush2.msra.mxu0 0.0
      %3428 = vmatprep.subr.mxu0 0.0
      %3429 = vmatpush2.msra.mxu0 0.0
      %3430 = vmatprep.mubr.f32.mxu0 0.0
      %v3431 = vand.u32 %v2782, 4294901760
      %3432 = vmatmul.mubr.f32.gmra.mxu0 %v3431
      %v3433 = vpop.f32.mrf.mxu0
      %v3434 = vadd.f32 %v3291, %v3433
      %v3435 = vpop.f32.mrf.mxu0
      %3436 = vmatprep.mubr.f32.mxu0 0.0
      %v3437 = vand.u32 %v2783, 4294901760
      %3438 = vmatmul.mubr.f32.gmra.mxu0 %v3437
      %v3439 = vpop.f32.mrf.mxu0
      %v3440 = vadd.f32 %v3299, %v3439
      %v3441 = vpop.f32.mrf.mxu0
      %3442 = vmatprep.mubr.f32.mxu0 0.0
      %v3443 = vand.u32 %v2784, 4294901760
      %3444 = vmatmul.mubr.f32.gmra.mxu0 %v3443
      %v3445 = vpop.f32.mrf.mxu0
      %v3446 = vadd.f32 %v3307, %v3445
      %v3447 = vpop.f32.mrf.mxu0
      %3448 = vmatprep.mubr.f32.mxu0 0.0
      %v3449 = vand.u32 %v2785, 4294901760
      %3450 = vmatmul.mubr.f32.gmra.mxu0 %v3449
      %v3451 = vpop.f32.mrf.mxu0
      %v3452 = vadd.f32 %v3315, %v3451
      %v3453 = vpop.f32.mrf.mxu0
      %3454 = vdwg.mxu0
      %3455 = vmatprep.subr.mxu0 0.0
      %v3456 = vand.u32 %v957, 4294901760
      %3457 = vmatpush1.msra.mxu0 %v3456
      %3458 = vmatprep.subr.mxu0 0.0
      %v3459 = vand.u32 %v956, 4294901760
      %3460 = vmatpush1.msra.mxu0 %v3459
      %3461 = vmatprep.subr.mxu0 0.0
      %v3462 = vand.u32 %v955, 4294901760
      %3463 = vmatpush1.msra.mxu0 %v3462
      %3464 = vmatprep.subr.mxu0 0.0
      %v3465 = vand.u32 %v954, 4294901760
      %3466 = vmatpush1.msra.mxu0 %v3465
      %3467 = vmatprep.subr.mxu0 0.0
      %v3468 = vand.u32 %v953, 4294901760
      %3469 = vmatpush1.msra.mxu0 %v3468
      %3470 = vmatprep.subr.mxu0 0.0
      %v3471 = vand.u32 %v952, 4294901760
      %3472 = vmatpush1.msra.mxu0 %v3471
      %3473 = vmatprep.subr.mxu0 0.0
      %v3474 = vand.u32 %v951, 4294901760
      %3475 = vmatpush1.msra.mxu0 %v3474
      %3476 = vmatprep.subr.mxu0 0.0
      %v3477 = vand.u32 %v950, 4294901760
      %3478 = vmatpush1.msra.mxu0 %v3477
      %3479 = vmatprep.subr.mxu0 0.0
      %v3480 = vand.u32 %v949, 4294901760
      %3481 = vmatpush1.msra.mxu0 %v3480
      %3482 = vmatprep.subr.mxu0 0.0
      %v3483 = vand.u32 %v948, 4294901760
      %3484 = vmatpush1.msra.mxu0 %v3483
      %3485 = vmatprep.subr.mxu0 0.0
      %v3486 = vand.u32 %v947, 4294901760
      %3487 = vmatpush1.msra.mxu0 %v3486
      %3488 = vmatprep.subr.mxu0 0.0
      %v3489 = vand.u32 %v946, 4294901760
      %3490 = vmatpush1.msra.mxu0 %v3489
      %3491 = vmatprep.subr.mxu0 0.0
      %v3492 = vand.u32 %v945, 4294901760
      %3493 = vmatpush1.msra.mxu0 %v3492
      %3494 = vmatprep.subr.mxu0 0.0
      %v3495 = vand.u32 %v944, 4294901760
      %3496 = vmatpush1.msra.mxu0 %v3495
      %3497 = vmatprep.subr.mxu0 0.0
      %v3498 = vand.u32 %v943, 4294901760
      %3499 = vmatpush1.msra.mxu0 %v3498
      %3500 = vmatprep.subr.mxu0 0.0
      %v3501 = vand.u32 %v942, 4294901760
      %3502 = vmatpush1.msra.mxu0 %v3501
      %3503 = vmatprep.subr.mxu0 0.0
      %3504 = vmatpush2.msra.mxu0 0.0
      %3505 = vmatprep.subr.mxu0 0.0
      %3506 = vmatpush2.msra.mxu0 0.0
      %3507 = vmatprep.subr.mxu0 0.0
      %3508 = vmatpush2.msra.mxu0 0.0
      %3509 = vmatprep.subr.mxu0 0.0
      %3510 = vmatpush2.msra.mxu0 0.0
      %3511 = vmatprep.subr.mxu0 0.0
      %3512 = vmatpush2.msra.mxu0 0.0
      %3513 = vmatprep.subr.mxu0 0.0
      %3514 = vmatpush2.msra.mxu0 0.0
      %3515 = vmatprep.subr.mxu0 0.0
      %3516 = vmatpush2.msra.mxu0 0.0
      %3517 = vmatprep.subr.mxu0 0.0
      %3518 = vmatpush2.msra.mxu0 0.0
      %3519 = vmatprep.subr.mxu0 0.0
      %3520 = vmatpush2.msra.mxu0 0.0
      %3521 = vmatprep.subr.mxu0 0.0
      %3522 = vmatpush2.msra.mxu0 0.0
      %3523 = vmatprep.subr.mxu0 0.0
      %3524 = vmatpush2.msra.mxu0 0.0
      %3525 = vmatprep.subr.mxu0 0.0
      %3526 = vmatpush2.msra.mxu0 0.0
      %3527 = vmatprep.subr.mxu0 0.0
      %3528 = vmatpush2.msra.mxu0 0.0
      %3529 = vmatprep.subr.mxu0 0.0
      %3530 = vmatpush2.msra.mxu0 0.0
      %3531 = vmatprep.subr.mxu0 0.0
      %3532 = vmatpush2.msra.mxu0 0.0
      %3533 = vmatprep.subr.mxu0 0.0
      %3534 = vmatpush2.msra.mxu0 0.0
      %3535 = vmatprep.mubr.f32.mxu0 0.0
      %v3536 = vand.u32 %v2782, 4294901760
      %3537 = vmatmul.mubr.f32.gmra.mxu0 %v3536
      %v3538 = vpop.f32.mrf.mxu0
      %v3539 = vadd.f32 %v3434, %v3538
      %v3540 = vpop.f32.mrf.mxu0
      %3541 = vmatprep.mubr.f32.mxu0 0.0
      %v3542 = vand.u32 %v2783, 4294901760
      %3543 = vmatmul.mubr.f32.gmra.mxu0 %v3542
      %v3544 = vpop.f32.mrf.mxu0
      %v3545 = vadd.f32 %v3440, %v3544
      %v3546 = vpop.f32.mrf.mxu0
      %3547 = vmatprep.mubr.f32.mxu0 0.0
      %v3548 = vand.u32 %v2784, 4294901760
      %3549 = vmatmul.mubr.f32.gmra.mxu0 %v3548
      %v3550 = vpop.f32.mrf.mxu0
      %v3551 = vadd.f32 %v3446, %v3550
      %v3552 = vpop.f32.mrf.mxu0
      %3553 = vmatprep.mubr.f32.mxu0 0.0
      %v3554 = vand.u32 %v2785, 4294901760
      %3555 = vmatmul.mubr.f32.gmra.mxu0 %v3554
      %v3556 = vpop.f32.mrf.mxu0
      %v3557 = vadd.f32 %v3452, %v3556
      %v3558 = vpop.f32.mrf.mxu0
      %3559 = vdwg.mxu0
      %v3560 = vmul.f32 %v3539, 0.5
      %v3561 = vmul.f32 %v3545, 0.5
      %v3562 = vmul.f32 %v3551, 0.5
      %v3563 = vmul.f32 %v3557, 0.5
      %v3564 = vmul.f32 %v3539, 0.70710677
      %v3565 = vmul.f32 %v3545, 0.70710677
      %v3566 = vmul.f32 %v3551, 0.70710677
      %v3567 = vmul.f32 %v3557, 0.70710677
      %v3568 = vand.u32 2147483647, %v3564
      %v3569 = vand.u32 2147483647, %v3565
      %v3570 = vand.u32 2147483647, %v3566
      %v3571 = vand.u32 2147483647, %v3567
      %v3572 = vmul.f32 %v3568, 0.3275911
      %v3573 = vmul.f32 %v3569, 0.3275911
      %v3574 = vmul.f32 %v3570, 0.3275911
      %v3575 = vmul.f32 %v3571, 0.3275911
      %v3576 = vadd.f32 %v3572, 1.0
      %v3577 = vadd.f32 %v3573, 1.0
      %v3578 = vadd.f32 %v3574, 1.0
      %v3579 = vadd.f32 %v3575, 1.0
      %v3580 = vrcp.pop %v3576
      %v3581 = vrcp.pop %v3577
      %v3582 = vrcp.pop %v3578
      %v3583 = vrcp.pop %v3579
      %v3584 = vmul.f32 %v3576, %v3580
      %v3585 = vmul.f32 %v3577, %v3581
      %v3586 = vmul.f32 %v3578, %v3582
      %v3587 = vmul.f32 %v3579, %v3583
      %v3588 = vsub.f32 2.0, %v3584
      %v3589 = vsub.f32 2.0, %v3585
      %v3590 = vsub.f32 2.0, %v3586
      %v3591 = vsub.f32 2.0, %v3587
      %v3592 = vmul.f32 %v3580, %v3588
      %v3593 = vmul.f32 %v3581, %v3589
      %v3594 = vmul.f32 %v3582, %v3590
      %v3595 = vmul.f32 %v3583, %v3591
      %v3596 = vmul.f32 %v3592, 1.0614054
      %v3597 = vmul.f32 %v3593, 1.0614054
      %v3598 = vmul.f32 %v3594, 1.0614054
      %v3599 = vmul.f32 %v3595, 1.0614054
      %v3600 = vadd.f32 %v3596, -1.4531521
      %v3601 = vadd.f32 %v3597, -1.4531521
      %v3602 = vadd.f32 %v3598, -1.4531521
      %v3603 = vadd.f32 %v3599, -1.4531521
      %v3604 = vmul.f32 %v3592, %v3600
      %v3605 = vmul.f32 %v3593, %v3601
      %v3606 = vmul.f32 %v3594, %v3602
      %v3607 = vmul.f32 %v3595, %v3603
      %v3608 = vadd.f32 %v3604, 1.4214138
      %v3609 = vadd.f32 %v3605, 1.4214138
      %v3610 = vadd.f32 %v3606, 1.4214138
      %v3611 = vadd.f32 %v3607, 1.4214138
      %v3612 = vmul.f32 %v3592, %v3608
      %v3613 = vmul.f32 %v3593, %v3609
      %v3614 = vmul.f32 %v3594, %v3610
      %v3615 = vmul.f32 %v3595, %v3611
      %v3616 = vadd.f32 %v3612, -0.28449672
      %v3617 = vadd.f32 %v3613, -0.28449672
      %v3618 = vadd.f32 %v3614, -0.28449672
      %v3619 = vadd.f32 %v3615, -0.28449672
      %v3620 = vmul.f32 %v3592, %v3616
      %v3621 = vmul.f32 %v3593, %v3617
      %v3622 = vmul.f32 %v3594, %v3618
      %v3623 = vmul.f32 %v3595, %v3619
      %v3624 = vadd.f32 %v3620, 0.2548296
      %v3625 = vadd.f32 %v3621, 0.2548296
      %v3626 = vadd.f32 %v3622, 0.2548296
      %v3627 = vadd.f32 %v3623, 0.2548296
      %v3628 = vmul.f32 %v3592, %v3624
      %v3629 = vmul.f32 %v3593, %v3625
      %v3630 = vmul.f32 %v3594, %v3626
      %v3631 = vmul.f32 %v3595, %v3627
      %v3632 = vsub.f32 0.0, %v3568
      %v3633 = vsub.f32 0.0, %v3569
      %v3634 = vsub.f32 0.0, %v3570
      %v3635 = vsub.f32 0.0, %v3571
      %v3636 = vmul.f32 %v3632, %v3568
      %v3637 = vmul.f32 %v3633, %v3569
      %v3638 = vmul.f32 %v3634, %v3570
      %v3639 = vmul.f32 %v3635, %v3571
      %v3640 = vmul.f32 %v3636, 1.442695
      %v3641 = vpow.pop %v3640
      %v3642 = vmul.f32 %v3637, 1.442695
      %v3643 = vpow.pop %v3642
      %v3644 = vmul.f32 %v3638, 1.442695
      %v3645 = vpow.pop %v3644
      %v3646 = vmul.f32 %v3639, 1.442695
      %v3647 = vpow.pop %v3646
      %v3648 = vmul.f32 %v3628, %v3641
      %v3649 = vmul.f32 %v3629, %v3643
      %v3650 = vmul.f32 %v3630, %v3645
      %v3651 = vmul.f32 %v3631, %v3647
      %v3652 = vsub.f32 1.0, %v3648
      %v3653 = vsub.f32 1.0, %v3649
      %v3654 = vsub.f32 1.0, %v3650
      %v3655 = vsub.f32 1.0, %v3651
      %vm3656 = vcmp.lt.f32.partialorder %v3564, 0.0
      %vm3657 = vcmp.lt.f32.partialorder %v3565, 0.0
      %vm3658 = vcmp.lt.f32.partialorder %v3566, 0.0
      %vm3659 = vcmp.lt.f32.partialorder %v3567, 0.0
      %v3660 = vsub.f32 0.0, %v3652
      %v3661 = vsub.f32 0.0, %v3653
      %v3662 = vsub.f32 0.0, %v3654
      %v3663 = vsub.f32 0.0, %v3655
      %v3664 = vsel %vm3656, %v3660, %v3652
      %v3665 = vsel %vm3657, %v3661, %v3653
      %v3666 = vsel %vm3658, %v3662, %v3654
      %v3667 = vsel %vm3659, %v3663, %v3655
      %v3668 = vadd.f32 %v3664, 1.0
      %v3669 = vadd.f32 %v3665, 1.0
      %v3670 = vadd.f32 %v3666, 1.0
      %v3671 = vadd.f32 %v3667, 1.0
      %v3672 = vmul.f32 %v3560, %v3668
      %v3673 = vmul.f32 %v3561, %v3669
      %v3674 = vmul.f32 %v3562, %v3670
      %v3675 = vmul.f32 %v3563, %v3671
      %v3676 = vadd.f32 %v3672, %v3673
      %v3677 = vadd.f32 %v3676, %v3674
      %v3678 = vadd.f32 %v3677, %v3675
      %v3679 = vrot.slane %v3678, 4
      %v3680 = vadd.f32 %v3678, %v3679
      %v3681 = vrot.slane %v3680, 2
      %v3682 = vadd.f32 %v3680, %v3681
      %v3683 = vrot.slane %v3682, 1
      %v3684 = vadd.f32 %v3682, %v3683
      %3685 = vrot.lane.b32.xlu0 %v3684, 64
      %v3686 = vpop.permute.xlu0 %3685
      %v3687 = vadd.f32 %v3684, %v3686
      %3688 = vrot.lane.b32.xlu0 %v3687, 32
      %v3689 = vpop.permute.xlu0 %3688
      %v3690 = vadd.f32 %v3687, %v3689
      %v3691 = vmul.f32 %v3690, 0.0078125
      %v3692 = vlaneseq
      %v3693 = vshrl.u32 %v3692, 7
      %v3694 = vsub.s32 0, %v3693
      %v3695 = vrot.slane %v3691, %v3694
      %v3696 = vsub.f32 %v3672, %v3695
      %v3697 = vsub.f32 %v3673, %v3695
      %v3698 = vsub.f32 %v3674, %v3695
      %v3699 = vsub.f32 %v3675, %v3695
      %v3700 = vmul.f32 %v3696, %v3696
      %v3701 = vmul.f32 %v3697, %v3697
      %v3702 = vmul.f32 %v3698, %v3698
      %v3703 = vmul.f32 %v3699, %v3699
      %v3704 = vadd.f32 %v3700, %v3701
      %v3705 = vadd.f32 %v3704, %v3702
      %v3706 = vadd.f32 %v3705, %v3703
      %v3707 = vrot.slane %v3706, 4
      %v3708 = vadd.f32 %v3706, %v3707
      %v3709 = vrot.slane %v3708, 2
      %v3710 = vadd.f32 %v3708, %v3709
      %v3711 = vrot.slane %v3710, 1
      %v3712 = vadd.f32 %v3710, %v3711
      %3713 = vrot.lane.b32.xlu0 %v3712, 64
      %v3714 = vpop.permute.xlu0 %3713
      %v3715 = vadd.f32 %v3712, %v3714
      %3716 = vrot.lane.b32.xlu0 %v3715, 32
      %v3717 = vpop.permute.xlu0 %3716
      %v3718 = vadd.f32 %v3715, %v3717
      %v3719 = vmul.f32 %v3718, 0.0078125
      %v3720 = vadd.f32 %v3719, 1e-05
      %v3721 = vrsqrt.pop %v3720
      %v3722 = vrot.slane %v939, 4
      %v3724 = vmul.f32 %v3721, %v3722
      %v3725 = vlaneseq
      %v3726 = vshrl.u32 %v3725, 7
      %v3727 = vsub.s32 0, %v3726
      %v3728 = vrot.slane %v3724, %v3727
      %v3729 = vmul.f32 %v3696, %v3728
      %v3730 = vmul.f32 %v3697, %v3728
      %v3731 = vmul.f32 %v3698, %v3728
      %v3732 = vmul.f32 %v3699, %v3728
      %v3733 = vlaneseq
      %v3734 = vshrl.u32 %v3733, 7
      %v3735 = vsub.s32 5, %v3734
      %v3736 = vrot.slane %v939, %v3735
      %v3737 = vadd.f32 %v3729, %v3736
      %v3738 = vadd.f32 %v3730, %v3736
      %v3739 = vadd.f32 %v3731, %v3736
      %v3740 = vadd.f32 %v3732, %v3736
    $region38: #{convmixer_forward.1} parent=1 // loop_footer
      %s914 = sadd.s32 1, %s910
    $region39: #{convmixer_forward.1} parent=1 // loop_footer_branch
      %909 = sbr.rel target = $region35
    $region40: #{convmixer_forward.1} parent=1 // loop_exit
      _
    %v3741 = vadd.f32 %v915, %v916
    %v3742 = vrot.slane %v3741, 4
    %v3743 = vadd.f32 %v3741, %v3742
    %v3744 = vrot.slane %v3743, 2
    %v3745 = vadd.f32 %v3743, %v3744
    %v3746 = vrot.slane %v3745, 1
    %v3747 = vadd.f32 %v3745, %v3746
    %v3748 = vadd.f32 %v917, %v918
    %v3749 = vrot.slane %v3748, 4
    %v3750 = vadd.f32 %v3748, %v3749
    %v3751 = vrot.slane %v3750, 2
    %v3752 = vadd.f32 %v3750, %v3751
    %v3753 = vrot.slane %v3752, 1
    %v3754 = vadd.f32 %v3752, %v3753
    %v3755 = vmul.f32 %v3747, 0.0625
    %v3756 = vmul.f32 %v3754, 0.0625
    %v3757 = vld [vmem:[%s6] sm:$0xff]
    %v3758 = vld [vmem:[%s6 + $0x8] sm:$0xff]
    %v3759 = vld [vmem:[%s6 + $0x10] sm:$0xff]
    %v3760 = vld [vmem:[%s6 + $0x18] sm:$0xff]
    %v3761 = vld [vmem:[%s6 + $0x20] sm:$0xff]
    %v3762 = vld [vmem:[%s6 + $0x28] sm:$0xff]
    %v3763 = vld [vmem:[%s6 + $0x30] sm:$0xff]
    %v3764 = vld [vmem:[%s6 + $0x38] sm:$0xff]
    %v3765 = vld [vmem:[%s6 + $0x40] sm:$0xff]
    %v3766 = vld [vmem:[%s6 + $0x48] sm:$0xff]
    %v3767 = vld [vmem:[%s6 + $0x50] sm:$0xff]
    %v3768 = vld [vmem:[%s6 + $0x58] sm:$0xff]
    %v3769 = vld [vmem:[%s6 + $0x60] sm:$0xff]
    %v3770 = vld [vmem:[%s6 + $0x68] sm:$0xff]
    %v3771 = vld [vmem:[%s6 + $0x70] sm:$0xff]
    %v3772 = vld [vmem:[%s6 + $0x78] sm:$0xff]
    %v3773 = vld [vmem:[%s7] sm:$0x1]
    %v3775 = vlaneseq
    %v3776 = vshrl.u32 %v3775, 7
    %v3777 = vsub.s32 0, %v3776
    %v3778 = vrot.slane %v3773, %v3777
    %vm3782 = vcmask 1041409
    %v3783 = vsel %vm3782, %v3756, %v3755
    %3785 = vmatprep.subr.mxu0 0.0
    %3786 = vmatpush1.msra.mxu0 %v3772
    %3787 = vmatprep.subr.mxu0 0.0
    %3788 = vmatpush1.msra.mxu0 %v3771
    %3789 = vmatprep.subr.mxu0 0.0
    %3790 = vmatpush1.msra.mxu0 %v3770
    %3791 = vmatprep.subr.mxu0 0.0
    %3792 = vmatpush1.msra.mxu0 %v3769
    %3793 = vmatprep.subr.mxu0 0.0
    %3794 = vmatpush1.msra.mxu0 %v3768
    %3795 = vmatprep.subr.mxu0 0.0
    %3796 = vmatpush1.msra.mxu0 %v3767
    %3797 = vmatprep.subr.mxu0 0.0
    %3798 = vmatpush1.msra.mxu0 %v3766
    %3799 = vmatprep.subr.mxu0 0.0
    %3800 = vmatpush1.msra.mxu0 %v3765
    %3801 = vmatprep.subr.mxu0 0.0
    %3802 = vmatpush1.msra.mxu0 %v3764
    %3803 = vmatprep.subr.mxu0 0.0
    %3804 = vmatpush1.msra.mxu0 %v3763
    %3805 = vmatprep.subr.mxu0 0.0
    %3806 = vmatpush1.msra.mxu0 %v3762
    %3807 = vmatprep.subr.mxu0 0.0
    %3808 = vmatpush1.msra.mxu0 %v3761
    %3809 = vmatprep.subr.mxu0 0.0
    %3810 = vmatpush1.msra.mxu0 %v3760
    %3811 = vmatprep.subr.mxu0 0.0
    %3812 = vmatpush1.msra.mxu0 %v3759
    %3813 = vmatprep.subr.mxu0 0.0
    %3814 = vmatpush1.msra.mxu0 %v3758
    %3815 = vmatprep.subr.mxu0 0.0
    %3816 = vmatpush1.msra.mxu0 %v3757
    %3817 = vmatprep.subr.mxu0 0.0
    %3818 = vmatpush2.msra.mxu0 0.0
    %3819 = vmatprep.subr.mxu0 0.0
    %3820 = vmatpush2.msra.mxu0 0.0
    %3821 = vmatprep.subr.mxu0 0.0
    %3822 = vmatpush2.msra.mxu0 0.0
    %3823 = vmatprep.subr.mxu0 0.0
    %3824 = vmatpush2.msra.mxu0 0.0
    %3825 = vmatprep.subr.mxu0 0.0
    %3826 = vmatpush2.msra.mxu0 0.0
    %3827 = vmatprep.subr.mxu0 0.0
    %3828 = vmatpush2.msra.mxu0 0.0
    %3829 = vmatprep.subr.mxu0 0.0
    %3830 = vmatpush2.msra.mxu0 0.0
    %3831 = vmatprep.subr.mxu0 0.0
    %3832 = vmatpush2.msra.mxu0 0.0
    %3833 = vmatprep.subr.mxu0 0.0
    %3834 = vmatpush2.msra.mxu0 0.0
    %3835 = vmatprep.subr.mxu0 0.0
    %3836 = vmatpush2.msra.mxu0 0.0
    %3837 = vmatprep.subr.mxu0 0.0
    %3838 = vmatpush2.msra.mxu0 0.0
    %3839 = vmatprep.subr.mxu0 0.0
    %3840 = vmatpush2.msra.mxu0 0.0
    %3841 = vmatprep.subr.mxu0 0.0
    %3842 = vmatpush2.msra.mxu0 0.0
    %3843 = vmatprep.subr.mxu0 0.0
    %3844 = vmatpush2.msra.mxu0 0.0
    %3845 = vmatprep.subr.mxu0 0.0
    %3846 = vmatpush2.msra.mxu0 0.0
    %3847 = vmatprep.subr.mxu0 0.0
    %3848 = vmatpush2.msra.mxu0 0.0
    %3849 = vmatprep.mubr.f32.mxu0 0.0
    %3850 = vmatmul.mubr.f32.gmra.mxu0 %v3783
    %v3851 = vpop.f32.mrf.mxu0
    %v3852 = vadd.f32 %v3778, %v3851
    %v3853 = vpop.f32.mrf.mxu0
    %3854 = vdwg.mxu0
    %vm3855 = vcmask 812032
    %3856 = vst.msk [vmem:[#allocation3] sm:$0x3] %vm3855, %v3852
    // Predicated region
    $region41: #{convmixer_forward.1} parent=1 // pred_check
      _
    $region42: #{convmixer_forward.1} parent=1 // pred_check_branch
      %3858 = sbr.rel (0) target = $region44
    $region43: #{convmixer_forward.1} parent=1 // pred_region
      %s3860 = ssub.s32 32, 32
      %3861 = vsyncadd [#allocation4], %s3860
      %s3863 = sshll.u32 [#allocation3], 4
      %s3864 = int_to_ptr.vmem [resolvable:$true] %s3863
      %3866 = dma.vmem_to_hbm [thread:$0]  %s3864, 32, %s8, [#allocation4]
    $region44: #{convmixer_forward.1} parent=1 // pred_fallthru
      _
    // Predicated region
    $region45: #{convmixer_forward.1} parent=1 // pred_check
      _
    $region46: #{convmixer_forward.1} parent=1 // pred_check_branch
      %3868 = sbr.rel (0) target = $region48
    $region47: #{convmixer_forward.1} parent=1 // pred_region
      %3869 = dma.done [#allocation4], 32
    $region48: #{convmixer_forward.1} parent=1 // pred_fallthru
      _
    %3870 = vsyncpa [#allocation4], 1

</llo_original>
